<compile_context>
chip_gen: v7x
topology: tpu7x:2x2x1
jax: 0.10.0
libtpu: 0.0.40
codegen_flags: <defaults>
</compile_context>

<pallas_src>
import functools

import jax
import jax.numpy as jnp
from jax.experimental import pallas as pl
from jax.experimental.pallas import tpu as pltpu


BT = 8  # samples per grid step: 8-aligned row shifts + >=256 conv1 MXU rows


# ----------------------------------------------------------------------------
# Fused kernel: conv1 (one batched matmul) + ReLU
#             -> conv2 as 9 accumulated shifted matmuls + ReLU
#             -> fc as 16 accumulated tiny matmuls (flatten folded into weights)
# ----------------------------------------------------------------------------
def _agent_kernel(p1_ref, w1_ref, b1_ref, w2_ref, b2_ref, wf_ref, bf_ref,
                  o_ref, *, bt, W1, H2, W2, C1, C2, A):
    # conv1: rows are (m1, b_local) with m1 = oh1*W1 + ow1, so all bt samples
    # share one (M1*bt, Kpad) @ (Kpad, C1) matmul.  bf16 in / f32 accumulate.
    h1 = jnp.dot(p1_ref[...], w1_ref[...], preferred_element_type=jnp.float32)
    h1 = jnp.maximum(h1 + b1_ref[...], 0.0)                 # (M1*bt, C1) f32

    # conv2 (3x3, stride 1) as 9 accumulated shifted matmuls.  Output rows use
    # the same (m, b_local) layout over the full H1 x W1 grid; only rows whose
    # m = oh2*W1 + ow2 has oh2 < H2, ow2 < W2 are valid (the rest are cheap,
    # finite garbage that is never read).  With bt a multiple of 8 every shift
    # d*bt is sublane-tile aligned -> slices are free views (no relayout).
    w2 = w2_ref[...]                                        # (9*C1, C2) f32
    Mv = (H2 - 1) * W1 + W2                                 # last valid m + 1
    R = Mv * bt
    acc2 = None
    for ki in range(3):
        for kj in range(3):
            d = ki * W1 + kj
            widx = ki * 3 + kj
            win = h1[d * bt:d * bt + R, :]                  # (R, C1)
            wsl = w2[widx * C1:(widx + 1) * C1, :]          # (C1, C2)
            t = jnp.dot(win, wsl, preferred_element_type=jnp.float32)
            acc2 = t if acc2 is None else acc2 + t
    h2 = jnp.maximum(acc2 + b2_ref[...], 0.0)               # (R, C2) f32

    # fc: accumulate over the H2*W2 valid spatial positions on the MXU.  The
    # NCHW .view(B,-1) flatten permutation is already folded into wf_ref rows.
    wf = wf_ref[...]                                        # (M2*C2, A) f32
    acc = None
    for oh in range(H2):
        for ow in range(W2):
            m = oh * W1 + ow                                # position in h2 rows
            p = oh * W2 + ow                                # position in wf rows
            blk = h2[m * bt:(m + 1) * bt, :]                # (bt, C2)
            wsl = wf[p * C2:(p + 1) * C2, :]                # (C2, A)
            t = jnp.dot(blk, wsl, preferred_element_type=jnp.float32)
            acc = t if acc is None else acc + t
    o_ref[...] = (acc + bf_ref[...]).astype(o_ref.dtype)    # (bt, A)


# ----------------------------------------------------------------------------
# Agent forward pass (single fused, batched pallas_call)
# ----------------------------------------------------------------------------
@jax.jit
def agent_forward(x_nchw, params):
    B = x_nchw.shape[0]
    H, W = x_nchw.shape[2], x_nchw.shape[3]
    C1 = params["b1"].shape[-1]
    C2 = params["b2"].shape[-1]
    A = params["bf"].shape[-1]
    Kpad = params["w1_mat"].shape[0]

    H1 = (H - 5) // 2 + 1
    W1 = (W - 5) // 2 + 1
    H2, W2 = H1 - 2, W1 - 2
    M1, M2 = H1 * W1, H2 * W2
    Mv = (H2 - 1) * W1 + W2

    # Pad the batch to a multiple of BT and group BT samples per grid step.
    Bp = ((B + BT - 1) // BT) * BT
    G = Bp // BT

    x = x_nchw[:, 0, :, :].astype(jnp.bfloat16)             # (B, H, W) bf16
    if Bp != B:
        x = jnp.pad(x, ((0, Bp - B), (0, 0), (0, 0)))

    # conv1 im2col fused with the K zero-pad (25->Kpad) and the bf16 cast.
    cols = [x[:, ki:ki + 2 * (H1 - 1) + 1:2, kj:kj + 2 * (W1 - 1) + 1:2]
            for ki in range(5) for kj in range(5)]
    cols += [jnp.zeros_like(cols[0])] * (Kpad - len(cols))
    p1 = jnp.stack(cols, axis=-1)                           # (Bp, H1, W1, Kpad)
    p1 = p1.reshape(G, BT, H1, W1, Kpad)
    p1 = jnp.transpose(p1, (0, 2, 3, 1, 4))                 # (G, H1, W1, BT, K)
    p1 = p1.reshape(G * M1 * BT, Kpad)                      # rows: ((g,m1), b)

    flops = (2 * Bp * M1 * Kpad * C1
             + 2 * G * Mv * BT * 9 * C1 * C2
             + 2 * Bp * M2 * C2 * A)
    bytes_accessed = int(
        p1.size * p1.dtype.itemsize
        + sum(params[k].size * params[k].dtype.itemsize
              for k in ("w1_mat", "b1", "w2_mat", "b2", "wf2", "bf"))
        + Bp * A * 4)

    kernel = functools.partial(_agent_kernel, bt=BT, W1=W1, H2=H2, W2=W2,
                               C1=C1, C2=C2, A=A)

    out = pl.pallas_call(
        kernel,
        out_shape=jax.ShapeDtypeStruct((Bp, A), jnp.float32),
        grid=(G,),
        in_specs=[
            pl.BlockSpec((M1 * BT, Kpad), lambda g: (g, 0)),   # p1 (per-step)
            pl.BlockSpec((Kpad, C1), lambda g: (0, 0)),        # w1 (resident)
            pl.BlockSpec((1, C1), lambda g: (0, 0)),           # b1
            pl.BlockSpec((9 * C1, C2), lambda g: (0, 0)),      # w2
            pl.BlockSpec((1, C2), lambda g: (0, 0)),           # b2
            pl.BlockSpec((M2 * C2, A), lambda g: (0, 0)),      # fc (permuted)
            pl.BlockSpec((1, A), lambda g: (0, 0)),            # bf
        ],
        out_specs=pl.BlockSpec((BT, A), lambda g: (g, 0)),
        compiler_params=pltpu.CompilerParams(
            dimension_semantics=("parallel",)),                # v7x: 2 TCs
        cost_estimate=pl.CostEstimate(flops=flops, transcendentals=0,
                                      bytes_accessed=bytes_accessed),
    )(p1, params["w1_mat"], params["b1"], params["w2_mat"], params["b2"],
      params["wf2"], params["bf"])

    return out[:B]


# ----------------------------------------------------------------------------
# Deterministic parameter init (PyTorch-style uniform(+-1/sqrt(fan_in))).
# All layout work (conv->matmul weights, K padding, bf16 cast, folding the
# NCHW flatten permutation into the fc weight) happens ONCE here.
# ----------------------------------------------------------------------------
def init_params(key, input_size):
    size = (input_size[0] - 5) // 2 + 1 - 2                 # conv2 output spatial
    fc_in = size * size * 32
    ks = jax.random.split(key, 6)

    def u(k, shape, fan_in):
        bound = 1.0 / jnp.sqrt(fan_in)
        return jax.random.uniform(k, shape, jnp.float32, -bound, bound)

    w1 = u(ks[0], (16, 1, 5, 5), 25.0)                      # OIHW, like nn.Conv2d
    b1 = u(ks[1], (16,), 25.0)
    w2 = u(ks[2], (32, 16, 3, 3), 144.0)
    b2 = u(ks[3], (32,), 144.0)
    wf = u(ks[4], (4, fc_in), float(fc_in))                 # (out, in), nn.Linear
    bf = u(ks[5], (4,), float(fc_in))

    # conv weights as matmul matrices, patch order (kh, kw, cin).
    w1_mat = jnp.transpose(w1, (2, 3, 1, 0)).reshape(25, 16)
    w1_mat = jnp.pad(w1_mat, ((0, 7), (0, 0))).astype(jnp.bfloat16)  # K 25->32
    w2_mat = jnp.transpose(w2, (2, 3, 1, 0)).reshape(9 * 16, 32)     # f32
    # fc weight with PyTorch's NCHW .view(B,-1) permutation folded in:
    # wf2[(oh*W2+ow)*32 + c, a] == wf[a, c*size*size + oh*size + ow]
    wf2 = jnp.transpose(wf.reshape(4, 32, size, size), (2, 3, 1, 0))
    wf2 = wf2.reshape(size * size * 32, 4)

    return {
        "w1_mat": w1_mat, "b1": b1.reshape(1, 16),
        "w2_mat": w2_mat, "b2": b2.reshape(1, 32),
        "wf2": wf2, "bf": bf.reshape(1, 4),
        # raw tensors kept only for the pure-JAX reference check
        "_w1": w1, "_w2": w2, "_wf": wf,
    }


# ----------------------------------------------------------------------------
# Pure-JAX f32 reference (lax.conv) used only for a correctness assertion
# ----------------------------------------------------------------------------
def ref_forward(x_nchw, params):
    dn = ("NCHW", "OIHW", "NCHW")
    y = jax.lax.conv_general_dilated(x_nchw, params["_w1"], (2, 2), "VALID",
                                     dimension_numbers=dn)
    y = jnp.maximum(y + params["b1"].reshape(1, -1, 1, 1), 0.0)
    y = jax.lax.conv_general_dilated(y, params["_w2"], (1, 1), "VALID",
                                     dimension_numbers=dn)
    y = jnp.maximum(y + params["b2"].reshape(1, -1, 1, 1), 0.0)
    y = y.reshape(y.shape[0], -1)
    return y @ params["_wf"].T + params["bf"]


if __name__ == "__main__":
    key = jax.random.PRNGKey(0)
    k_x, k_p = jax.random.split(key)

    input_size = (16, 16)                                   # Agent(input_size=(16, 16))
    B = 2
    x = jax.random.normal(k_x, (B, 1, input_size[0], input_size[1]), jnp.float32)

    params = init_params(k_p, input_size)

    out = jax.block_until_ready(agent_forward(x, params))
    assert out.shape == (B, 4), out.shape

    ref = jax.block_until_ready(ref_forward(x, params))
    # conv1 operands are bf16 (f32 accumulation) => tolerance consistent with
    # bf16's ~2^-8 relative precision; conv2/fc run in f32.
    assert jnp.allclose(out, ref, atol=2e-2, rtol=2e-2), (
        jnp.max(jnp.abs(out - ref)))

    print("KERNEL_OK")
</pallas_src>

<mosaic_0001>
module attributes {stable_mosaic.version = 11 : i64} {
  func.func @_agent_kernel(%arg0: i32, %arg1: memref<288x32xbf16, #tpu.memory_space<vmem>>, %arg2: memref<32x16xbf16, #tpu.memory_space<vmem>>, %arg3: memref<1x16xf32, #tpu.memory_space<vmem>>, %arg4: memref<144x32xf32, #tpu.memory_space<vmem>>, %arg5: memref<1x32xf32, #tpu.memory_space<vmem>>, %arg6: memref<512x4xf32, #tpu.memory_space<vmem>>, %arg7: memref<1x4xf32, #tpu.memory_space<vmem>>, %arg8: memref<8x4xf32, #tpu.memory_space<vmem>>) attributes {dimension_semantics = [#tpu.dimension_semantics<parallel>], iteration_bounds = array<i64: 1>, scalar_prefetch = 0 : i64, scratch_operands = 0 : i64, tpu.core_type = #tpu.core_type<tc>, window_params = [{transform_indices = @transform_0, window_bounds = array<i64: 288, 32>}, {pipeline_mode = #tpu.pipeline_mode<synchronous>, transform_indices = @transform_1, window_bounds = array<i64: 32, 16>}, {pipeline_mode = #tpu.pipeline_mode<synchronous>, transform_indices = @transform_2, window_bounds = array<i64: 1, 16>}, {pipeline_mode = #tpu.pipeline_mode<synchronous>, transform_indices = @transform_3, window_bounds = array<i64: 144, 32>}, {pipeline_mode = #tpu.pipeline_mode<synchronous>, transform_indices = @transform_4, window_bounds = array<i64: 1, 32>}, {pipeline_mode = #tpu.pipeline_mode<synchronous>, transform_indices = @transform_5, window_bounds = array<i64: 512, 4>}, {pipeline_mode = #tpu.pipeline_mode<synchronous>, transform_indices = @transform_6, window_bounds = array<i64: 1, 4>}, {transform_indices = @transform_7, window_bounds = array<i64: 8, 4>}]} {
    %c0 = arith.constant 0 : index
    %c0_0 = arith.constant 0 : index
    %0 = vector.load %arg1[%c0, %c0_0] : memref<288x32xbf16, #tpu.memory_space<vmem>>, vector<288x32xbf16>
    %c0_1 = arith.constant 0 : index
    %c0_2 = arith.constant 0 : index
    %1 = vector.load %arg2[%c0_1, %c0_2] : memref<32x16xbf16, #tpu.memory_space<vmem>>, vector<32x16xbf16>
    %cst = arith.constant dense<0.000000e+00> : vector<288x16xf32>
    %2 = tpu.matmul %0, %1, %cst {dimension_numbers = #tpu.dot_dimension_numbers<[1], [0], [0], [1], [0, 0, 1, 1], [], []>} : vector<288x32xbf16>, vector<32x16xbf16>, vector<288x16xf32> -> vector<288x16xf32>
    %c0_3 = arith.constant 0 : index
    %c0_4 = arith.constant 0 : index
    %3 = vector.load %arg3[%c0_3, %c0_4] : memref<1x16xf32, #tpu.memory_space<vmem>>, vector<1x16xf32>
    %4 = vector.broadcast %3 : vector<1x16xf32> to vector<288x16xf32>
    %5 = arith.addf %2, %4 : vector<288x16xf32>
    %cst_5 = arith.constant 0.000000e+00 : f32
    %6 = vector.broadcast %cst_5 : f32 to vector<288x16xf32>
    %7 = arith.maximumf %5, %6 : vector<288x16xf32>
    %c0_6 = arith.constant 0 : index
    %c0_7 = arith.constant 0 : index
    %8 = vector.load %arg4[%c0_6, %c0_7] : memref<144x32xf32, #tpu.memory_space<vmem>>, vector<144x32xf32>
    %9 = vector.extract_strided_slice %7 {offsets = [0, 0], sizes = [176, 16], strides = [1, 1]} : vector<288x16xf32> to vector<176x16xf32>
    %10 = vector.extract_strided_slice %8 {offsets = [0, 0], sizes = [16, 32], strides = [1, 1]} : vector<144x32xf32> to vector<16x32xf32>
    %cst_8 = arith.constant dense<0.000000e+00> : vector<176x32xf32>
    %11 = tpu.matmul %9, %10, %cst_8 {dimension_numbers = #tpu.dot_dimension_numbers<[1], [0], [0], [1], [0, 0, 1, 1], [], []>} : vector<176x16xf32>, vector<16x32xf32>, vector<176x32xf32> -> vector<176x32xf32>
    %12 = vector.extract_strided_slice %7 {offsets = [8, 0], sizes = [176, 16], strides = [1, 1]} : vector<288x16xf32> to vector<176x16xf32>
    %13 = vector.extract_strided_slice %8 {offsets = [16, 0], sizes = [16, 32], strides = [1, 1]} : vector<144x32xf32> to vector<16x32xf32>
    %cst_9 = arith.constant dense<0.000000e+00> : vector<176x32xf32>
    %14 = tpu.matmul %12, %13, %cst_9 {dimension_numbers = #tpu.dot_dimension_numbers<[1], [0], [0], [1], [0, 0, 1, 1], [], []>} : vector<176x16xf32>, vector<16x32xf32>, vector<176x32xf32> -> vector<176x32xf32>
    %15 = arith.addf %11, %14 : vector<176x32xf32>
    %16 = vector.extract_strided_slice %7 {offsets = [16, 0], sizes = [176, 16], strides = [1, 1]} : vector<288x16xf32> to vector<176x16xf32>
    %17 = vector.extract_strided_slice %8 {offsets = [32, 0], sizes = [16, 32], strides = [1, 1]} : vector<144x32xf32> to vector<16x32xf32>
    %cst_10 = arith.constant dense<0.000000e+00> : vector<176x32xf32>
    %18 = tpu.matmul %16, %17, %cst_10 {dimension_numbers = #tpu.dot_dimension_numbers<[1], [0], [0], [1], [0, 0, 1, 1], [], []>} : vector<176x16xf32>, vector<16x32xf32>, vector<176x32xf32> -> vector<176x32xf32>
    %19 = arith.addf %15, %18 : vector<176x32xf32>
    %20 = vector.extract_strided_slice %7 {offsets = [48, 0], sizes = [176, 16], strides = [1, 1]} : vector<288x16xf32> to vector<176x16xf32>
    %21 = vector.extract_strided_slice %8 {offsets = [48, 0], sizes = [16, 32], strides = [1, 1]} : vector<144x32xf32> to vector<16x32xf32>
    %cst_11 = arith.constant dense<0.000000e+00> : vector<176x32xf32>
    %22 = tpu.matmul %20, %21, %cst_11 {dimension_numbers = #tpu.dot_dimension_numbers<[1], [0], [0], [1], [0, 0, 1, 1], [], []>} : vector<176x16xf32>, vector<16x32xf32>, vector<176x32xf32> -> vector<176x32xf32>
    %23 = arith.addf %19, %22 : vector<176x32xf32>
    %24 = vector.extract_strided_slice %7 {offsets = [56, 0], sizes = [176, 16], strides = [1, 1]} : vector<288x16xf32> to vector<176x16xf32>
    %25 = vector.extract_strided_slice %8 {offsets = [64, 0], sizes = [16, 32], strides = [1, 1]} : vector<144x32xf32> to vector<16x32xf32>
    %cst_12 = arith.constant dense<0.000000e+00> : vector<176x32xf32>
    %26 = tpu.matmul %24, %25, %cst_12 {dimension_numbers = #tpu.dot_dimension_numbers<[1], [0], [0], [1], [0, 0, 1, 1], [], []>} : vector<176x16xf32>, vector<16x32xf32>, vector<176x32xf32> -> vector<176x32xf32>
    %27 = arith.addf %23, %26 : vector<176x32xf32>
    %28 = vector.extract_strided_slice %7 {offsets = [64, 0], sizes = [176, 16], strides = [1, 1]} : vector<288x16xf32> to vector<176x16xf32>
    %29 = vector.extract_strided_slice %8 {offsets = [80, 0], sizes = [16, 32], strides = [1, 1]} : vector<144x32xf32> to vector<16x32xf32>
    %cst_13 = arith.constant dense<0.000000e+00> : vector<176x32xf32>
    %30 = tpu.matmul %28, %29, %cst_13 {dimension_numbers = #tpu.dot_dimension_numbers<[1], [0], [0], [1], [0, 0, 1, 1], [], []>} : vector<176x16xf32>, vector<16x32xf32>, vector<176x32xf32> -> vector<176x32xf32>
    %31 = arith.addf %27, %30 : vector<176x32xf32>
    %32 = vector.extract_strided_slice %7 {offsets = [96, 0], sizes = [176, 16], strides = [1, 1]} : vector<288x16xf32> to vector<176x16xf32>
    %33 = vector.extract_strided_slice %8 {offsets = [96, 0], sizes = [16, 32], strides = [1, 1]} : vector<144x32xf32> to vector<16x32xf32>
    %cst_14 = arith.constant dense<0.000000e+00> : vector<176x32xf32>
    %34 = tpu.matmul %32, %33, %cst_14 {dimension_numbers = #tpu.dot_dimension_numbers<[1], [0], [0], [1], [0, 0, 1, 1], [], []>} : vector<176x16xf32>, vector<16x32xf32>, vector<176x32xf32> -> vector<176x32xf32>
    %35 = arith.addf %31, %34 : vector<176x32xf32>
    %36 = vector.extract_strided_slice %7 {offsets = [104, 0], sizes = [176, 16], strides = [1, 1]} : vector<288x16xf32> to vector<176x16xf32>
    %37 = vector.extract_strided_slice %8 {offsets = [112, 0], sizes = [16, 32], strides = [1, 1]} : vector<144x32xf32> to vector<16x32xf32>
    %cst_15 = arith.constant dense<0.000000e+00> : vector<176x32xf32>
    %38 = tpu.matmul %36, %37, %cst_15 {dimension_numbers = #tpu.dot_dimension_numbers<[1], [0], [0], [1], [0, 0, 1, 1], [], []>} : vector<176x16xf32>, vector<16x32xf32>, vector<176x32xf32> -> vector<176x32xf32>
    %39 = arith.addf %35, %38 : vector<176x32xf32>
    %40 = vector.extract_strided_slice %7 {offsets = [112, 0], sizes = [176, 16], strides = [1, 1]} : vector<288x16xf32> to vector<176x16xf32>
    %41 = vector.extract_strided_slice %8 {offsets = [128, 0], sizes = [16, 32], strides = [1, 1]} : vector<144x32xf32> to vector<16x32xf32>
    %cst_16 = arith.constant dense<0.000000e+00> : vector<176x32xf32>
    %42 = tpu.matmul %40, %41, %cst_16 {dimension_numbers = #tpu.dot_dimension_numbers<[1], [0], [0], [1], [0, 0, 1, 1], [], []>} : vector<176x16xf32>, vector<16x32xf32>, vector<176x32xf32> -> vector<176x32xf32>
    %43 = arith.addf %39, %42 : vector<176x32xf32>
    %c0_17 = arith.constant 0 : index
    %c0_18 = arith.constant 0 : index
    %44 = vector.load %arg5[%c0_17, %c0_18] : memref<1x32xf32, #tpu.memory_space<vmem>>, vector<1x32xf32>
    %45 = vector.broadcast %44 : vector<1x32xf32> to vector<176x32xf32>
    %46 = arith.addf %43, %45 : vector<176x32xf32>
    %cst_19 = arith.constant 0.000000e+00 : f32
    %47 = vector.broadcast %cst_19 : f32 to vector<176x32xf32>
    %48 = arith.maximumf %46, %47 : vector<176x32xf32>
    %c0_20 = arith.constant 0 : index
    %c0_21 = arith.constant 0 : index
    %49 = vector.load %arg6[%c0_20, %c0_21] : memref<512x4xf32, #tpu.memory_space<vmem>>, vector<512x4xf32>
    %50 = vector.extract_strided_slice %48 {offsets = [0, 0], sizes = [8, 32], strides = [1, 1]} : vector<176x32xf32> to vector<8x32xf32>
    %51 = vector.extract_strided_slice %49 {offsets = [0, 0], sizes = [32, 4], strides = [1, 1]} : vector<512x4xf32> to vector<32x4xf32>
    %cst_22 = arith.constant dense<0.000000e+00> : vector<8x4xf32>
    %52 = tpu.matmul %50, %51, %cst_22 {dimension_numbers = #tpu.dot_dimension_numbers<[1], [0], [0], [1], [0, 0, 1, 1], [], []>} : vector<8x32xf32>, vector<32x4xf32>, vector<8x4xf32> -> vector<8x4xf32>
    %53 = vector.extract_strided_slice %48 {offsets = [8, 0], sizes = [8, 32], strides = [1, 1]} : vector<176x32xf32> to vector<8x32xf32>
    %54 = vector.extract_strided_slice %49 {offsets = [32, 0], sizes = [32, 4], strides = [1, 1]} : vector<512x4xf32> to vector<32x4xf32>
    %cst_23 = arith.constant dense<0.000000e+00> : vector<8x4xf32>
    %55 = tpu.matmul %53, %54, %cst_23 {dimension_numbers = #tpu.dot_dimension_numbers<[1], [0], [0], [1], [0, 0, 1, 1], [], []>} : vector<8x32xf32>, vector<32x4xf32>, vector<8x4xf32> -> vector<8x4xf32>
    %56 = arith.addf %52, %55 : vector<8x4xf32>
    %57 = vector.extract_strided_slice %48 {offsets = [16, 0], sizes = [8, 32], strides = [1, 1]} : vector<176x32xf32> to vector<8x32xf32>
    %58 = vector.extract_strided_slice %49 {offsets = [64, 0], sizes = [32, 4], strides = [1, 1]} : vector<512x4xf32> to vector<32x4xf32>
    %cst_24 = arith.constant dense<0.000000e+00> : vector<8x4xf32>
    %59 = tpu.matmul %57, %58, %cst_24 {dimension_numbers = #tpu.dot_dimension_numbers<[1], [0], [0], [1], [0, 0, 1, 1], [], []>} : vector<8x32xf32>, vector<32x4xf32>, vector<8x4xf32> -> vector<8x4xf32>
    %60 = arith.addf %56, %59 : vector<8x4xf32>
    %61 = vector.extract_strided_slice %48 {offsets = [24, 0], sizes = [8, 32], strides = [1, 1]} : vector<176x32xf32> to vector<8x32xf32>
    %62 = vector.extract_strided_slice %49 {offsets = [96, 0], sizes = [32, 4], strides = [1, 1]} : vector<512x4xf32> to vector<32x4xf32>
    %cst_25 = arith.constant dense<0.000000e+00> : vector<8x4xf32>
    %63 = tpu.matmul %61, %62, %cst_25 {dimension_numbers = #tpu.dot_dimension_numbers<[1], [0], [0], [1], [0, 0, 1, 1], [], []>} : vector<8x32xf32>, vector<32x4xf32>, vector<8x4xf32> -> vector<8x4xf32>
    %64 = arith.addf %60, %63 : vector<8x4xf32>
    %65 = vector.extract_strided_slice %48 {offsets = [48, 0], sizes = [8, 32], strides = [1, 1]} : vector<176x32xf32> to vector<8x32xf32>
    %66 = vector.extract_strided_slice %49 {offsets = [128, 0], sizes = [32, 4], strides = [1, 1]} : vector<512x4xf32> to vector<32x4xf32>
    %cst_26 = arith.constant dense<0.000000e+00> : vector<8x4xf32>
    %67 = tpu.matmul %65, %66, %cst_26 {dimension_numbers = #tpu.dot_dimension_numbers<[1], [0], [0], [1], [0, 0, 1, 1], [], []>} : vector<8x32xf32>, vector<32x4xf32>, vector<8x4xf32> -> vector<8x4xf32>
    %68 = arith.addf %64, %67 : vector<8x4xf32>
    %69 = vector.extract_strided_slice %48 {offsets = [56, 0], sizes = [8, 32], strides = [1, 1]} : vector<176x32xf32> to vector<8x32xf32>
    %70 = vector.extract_strided_slice %49 {offsets = [160, 0], sizes = [32, 4], strides = [1, 1]} : vector<512x4xf32> to vector<32x4xf32>
    %cst_27 = arith.constant dense<0.000000e+00> : vector<8x4xf32>
    %71 = tpu.matmul %69, %70, %cst_27 {dimension_numbers = #tpu.dot_dimension_numbers<[1], [0], [0], [1], [0, 0, 1, 1], [], []>} : vector<8x32xf32>, vector<32x4xf32>, vector<8x4xf32> -> vector<8x4xf32>
    %72 = arith.addf %68, %71 : vector<8x4xf32>
    %73 = vector.extract_strided_slice %48 {offsets = [64, 0], sizes = [8, 32], strides = [1, 1]} : vector<176x32xf32> to vector<8x32xf32>
    %74 = vector.extract_strided_slice %49 {offsets = [192, 0], sizes = [32, 4], strides = [1, 1]} : vector<512x4xf32> to vector<32x4xf32>
    %cst_28 = arith.constant dense<0.000000e+00> : vector<8x4xf32>
    %75 = tpu.matmul %73, %74, %cst_28 {dimension_numbers = #tpu.dot_dimension_numbers<[1], [0], [0], [1], [0, 0, 1, 1], [], []>} : vector<8x32xf32>, vector<32x4xf32>, vector<8x4xf32> -> vector<8x4xf32>
    %76 = arith.addf %72, %75 : vector<8x4xf32>
    %77 = vector.extract_strided_slice %48 {offsets = [72, 0], sizes = [8, 32], strides = [1, 1]} : vector<176x32xf32> to vector<8x32xf32>
    %78 = vector.extract_strided_slice %49 {offsets = [224, 0], sizes = [32, 4], strides = [1, 1]} : vector<512x4xf32> to vector<32x4xf32>
    %cst_29 = arith.constant dense<0.000000e+00> : vector<8x4xf32>
    %79 = tpu.matmul %77, %78, %cst_29 {dimension_numbers = #tpu.dot_dimension_numbers<[1], [0], [0], [1], [0, 0, 1, 1], [], []>} : vector<8x32xf32>, vector<32x4xf32>, vector<8x4xf32> -> vector<8x4xf32>
    %80 = arith.addf %76, %79 : vector<8x4xf32>
    %81 = vector.extract_strided_slice %48 {offsets = [96, 0], sizes = [8, 32], strides = [1, 1]} : vector<176x32xf32> to vector<8x32xf32>
    %82 = vector.extract_strided_slice %49 {offsets = [256, 0], sizes = [32, 4], strides = [1, 1]} : vector<512x4xf32> to vector<32x4xf32>
    %cst_30 = arith.constant dense<0.000000e+00> : vector<8x4xf32>
    %83 = tpu.matmul %81, %82, %cst_30 {dimension_numbers = #tpu.dot_dimension_numbers<[1], [0], [0], [1], [0, 0, 1, 1], [], []>} : vector<8x32xf32>, vector<32x4xf32>, vector<8x4xf32> -> vector<8x4xf32>
    %84 = arith.addf %80, %83 : vector<8x4xf32>
    %85 = vector.extract_strided_slice %48 {offsets = [104, 0], sizes = [8, 32], strides = [1, 1]} : vector<176x32xf32> to vector<8x32xf32>
    %86 = vector.extract_strided_slice %49 {offsets = [288, 0], sizes = [32, 4], strides = [1, 1]} : vector<512x4xf32> to vector<32x4xf32>
    %cst_31 = arith.constant dense<0.000000e+00> : vector<8x4xf32>
    %87 = tpu.matmul %85, %86, %cst_31 {dimension_numbers = #tpu.dot_dimension_numbers<[1], [0], [0], [1], [0, 0, 1, 1], [], []>} : vector<8x32xf32>, vector<32x4xf32>, vector<8x4xf32> -> vector<8x4xf32>
    %88 = arith.addf %84, %87 : vector<8x4xf32>
    %89 = vector.extract_strided_slice %48 {offsets = [112, 0], sizes = [8, 32], strides = [1, 1]} : vector<176x32xf32> to vector<8x32xf32>
    %90 = vector.extract_strided_slice %49 {offsets = [320, 0], sizes = [32, 4], strides = [1, 1]} : vector<512x4xf32> to vector<32x4xf32>
    %cst_32 = arith.constant dense<0.000000e+00> : vector<8x4xf32>
    %91 = tpu.matmul %89, %90, %cst_32 {dimension_numbers = #tpu.dot_dimension_numbers<[1], [0], [0], [1], [0, 0, 1, 1], [], []>} : vector<8x32xf32>, vector<32x4xf32>, vector<8x4xf32> -> vector<8x4xf32>
    %92 = arith.addf %88, %91 : vector<8x4xf32>
    %93 = vector.extract_strided_slice %48 {offsets = [120, 0], sizes = [8, 32], strides = [1, 1]} : vector<176x32xf32> to vector<8x32xf32>
    %94 = vector.extract_strided_slice %49 {offsets = [352, 0], sizes = [32, 4], strides = [1, 1]} : vector<512x4xf32> to vector<32x4xf32>
    %cst_33 = arith.constant dense<0.000000e+00> : vector<8x4xf32>
    %95 = tpu.matmul %93, %94, %cst_33 {dimension_numbers = #tpu.dot_dimension_numbers<[1], [0], [0], [1], [0, 0, 1, 1], [], []>} : vector<8x32xf32>, vector<32x4xf32>, vector<8x4xf32> -> vector<8x4xf32>
    %96 = arith.addf %92, %95 : vector<8x4xf32>
    %97 = vector.extract_strided_slice %48 {offsets = [144, 0], sizes = [8, 32], strides = [1, 1]} : vector<176x32xf32> to vector<8x32xf32>
    %98 = vector.extract_strided_slice %49 {offsets = [384, 0], sizes = [32, 4], strides = [1, 1]} : vector<512x4xf32> to vector<32x4xf32>
    %cst_34 = arith.constant dense<0.000000e+00> : vector<8x4xf32>
    %99 = tpu.matmul %97, %98, %cst_34 {dimension_numbers = #tpu.dot_dimension_numbers<[1], [0], [0], [1], [0, 0, 1, 1], [], []>} : vector<8x32xf32>, vector<32x4xf32>, vector<8x4xf32> -> vector<8x4xf32>
    %100 = arith.addf %96, %99 : vector<8x4xf32>
    %101 = vector.extract_strided_slice %48 {offsets = [152, 0], sizes = [8, 32], strides = [1, 1]} : vector<176x32xf32> to vector<8x32xf32>
    %102 = vector.extract_strided_slice %49 {offsets = [416, 0], sizes = [32, 4], strides = [1, 1]} : vector<512x4xf32> to vector<32x4xf32>
    %cst_35 = arith.constant dense<0.000000e+00> : vector<8x4xf32>
    %103 = tpu.matmul %101, %102, %cst_35 {dimension_numbers = #tpu.dot_dimension_numbers<[1], [0], [0], [1], [0, 0, 1, 1], [], []>} : vector<8x32xf32>, vector<32x4xf32>, vector<8x4xf32> -> vector<8x4xf32>
    %104 = arith.addf %100, %103 : vector<8x4xf32>
    %105 = vector.extract_strided_slice %48 {offsets = [160, 0], sizes = [8, 32], strides = [1, 1]} : vector<176x32xf32> to vector<8x32xf32>
    %106 = vector.extract_strided_slice %49 {offsets = [448, 0], sizes = [32, 4], strides = [1, 1]} : vector<512x4xf32> to vector<32x4xf32>
    %cst_36 = arith.constant dense<0.000000e+00> : vector<8x4xf32>
    %107 = tpu.matmul %105, %106, %cst_36 {dimension_numbers = #tpu.dot_dimension_numbers<[1], [0], [0], [1], [0, 0, 1, 1], [], []>} : vector<8x32xf32>, vector<32x4xf32>, vector<8x4xf32> -> vector<8x4xf32>
    %108 = arith.addf %104, %107 : vector<8x4xf32>
    %109 = vector.extract_strided_slice %48 {offsets = [168, 0], sizes = [8, 32], strides = [1, 1]} : vector<176x32xf32> to vector<8x32xf32>
    %110 = vector.extract_strided_slice %49 {offsets = [480, 0], sizes = [32, 4], strides = [1, 1]} : vector<512x4xf32> to vector<32x4xf32>
    %cst_37 = arith.constant dense<0.000000e+00> : vector<8x4xf32>
    %111 = tpu.matmul %109, %110, %cst_37 {dimension_numbers = #tpu.dot_dimension_numbers<[1], [0], [0], [1], [0, 0, 1, 1], [], []>} : vector<8x32xf32>, vector<32x4xf32>, vector<8x4xf32> -> vector<8x4xf32>
    %112 = arith.addf %108, %111 : vector<8x4xf32>
    %c0_38 = arith.constant 0 : index
    %c0_39 = arith.constant 0 : index
    %113 = vector.load %arg7[%c0_38, %c0_39] : memref<1x4xf32, #tpu.memory_space<vmem>>, vector<1x4xf32>
    %114 = vector.broadcast %113 : vector<1x4xf32> to vector<8x4xf32>
    %115 = arith.addf %112, %114 : vector<8x4xf32>
    %c0_40 = arith.constant 0 : index
    %c0_41 = arith.constant 0 : index
    %116 = vector.load %arg8[%c0_40, %c0_41] : memref<8x4xf32, #tpu.memory_space<vmem>>, vector<8x4xf32>
    tpu.vector_store %arg8[%c0_40, %c0_41], %115 {strides = array<i32>} : memref<8x4xf32, #tpu.memory_space<vmem>>, vector<8x4xf32>,
    return
  }
  func.func @transform_0(%arg0: i32) -> (i32, i32) {
    %c0_i32 = arith.constant 0 : i32
    %c0_i32_0 = arith.constant 0 : i32
    return %arg0, %c0_i32 : i32, i32
  }
  func.func @transform_1(%arg0: i32) -> (i32, i32) {
    %c0_i32 = arith.constant 0 : i32
    %c0_i32_0 = arith.constant 0 : i32
    %c0_i32_1 = arith.constant 0 : i32
    return %c0_i32, %c0_i32_0 : i32, i32
  }
  func.func @transform_2(%arg0: i32) -> (i32, i32) {
    %c0_i32 = arith.constant 0 : i32
    %c0_i32_0 = arith.constant 0 : i32
    %c0_i32_1 = arith.constant 0 : i32
    return %c0_i32, %c0_i32_0 : i32, i32
  }
  func.func @transform_3(%arg0: i32) -> (i32, i32) {
    %c0_i32 = arith.constant 0 : i32
    %c0_i32_0 = arith.constant 0 : i32
    %c0_i32_1 = arith.constant 0 : i32
    return %c0_i32, %c0_i32_0 : i32, i32
  }
  func.func @transform_4(%arg0: i32) -> (i32, i32) {
    %c0_i32 = arith.constant 0 : i32
    %c0_i32_0 = arith.constant 0 : i32
    %c0_i32_1 = arith.constant 0 : i32
    return %c0_i32, %c0_i32_0 : i32, i32
  }
  func.func @transform_5(%arg0: i32) -> (i32, i32) {
    %c0_i32 = arith.constant 0 : i32
    %c0_i32_0 = arith.constant 0 : i32
    %c0_i32_1 = arith.constant 0 : i32
    return %c0_i32, %c0_i32_0 : i32, i32
  }
  func.func @transform_6(%arg0: i32) -> (i32, i32) {
    %c0_i32 = arith.constant 0 : i32
    %c0_i32_0 = arith.constant 0 : i32
    %c0_i32_1 = arith.constant 0 : i32
    return %c0_i32, %c0_i32_0 : i32, i32
  }
  func.func @transform_7(%arg0: i32) -> (i32, i32) {
    %c0_i32 = arith.constant 0 : i32
    %c0_i32_0 = arith.constant 0 : i32
    return %arg0, %c0_i32 : i32, i32
  }
}

</mosaic_0001>

<llo_original>
// kernel: agent_forward.1
$region0: #{agent_forward.1}
  #allocation0 [shape = 'u32[]', space=smem, size = 0x4, offset = 0x4, fixed_abs, tag = 'smem constant byte address 0x4 - core index']
  #allocation1 [shape = 'u32[144,128]{1,0:T(1,128)}', space=vmem, size = 0x12000, scoped, tag = 'internal scratch']
  %s0 = inlined_call_operand.vmem [shape: bf16[288,32], index: 0, kind: input, shape index: {}]
  %s1 = inlined_call_operand.vmem [shape: bf16[32,16], index: 1, kind: input, shape index: {}]
  %s2 = inlined_call_operand.vmem [shape: f32[1,16], index: 2, kind: input, shape index: {}]
  %s3 = inlined_call_operand.vmem [shape: f32[144,32], index: 3, kind: input, shape index: {}]
  %s4 = inlined_call_operand.vmem [shape: f32[1,32], index: 4, kind: input, shape index: {}]
  %s5 = inlined_call_operand.vmem [shape: f32[512,4], index: 5, kind: input, shape index: {}]
  %s6 = inlined_call_operand.vmem [shape: f32[1,4], index: 6, kind: input, shape index: {}]
  %s7 = inlined_call_operand.vmem [shape: f32[8,4], index: 7, kind: output, shape index: {}]
  %s8 = sld [smem:[#allocation0]]
  $region38: #{agent_forward.1} parent=0
    _
  %s10 = ssub.s32 1, %s8
  %s11 = scalar_select 0, %s10, %s8
  // Predicated region
  $region2: #{agent_forward.1} parent=0 // pred_check
    _
  $region3: #{agent_forward.1} parent=0 // pred_check_branch
    %13 = sbr.rel (0) target = $region5
  $region4: #{agent_forward.1} parent=0 // pred_region
    _
  $region5: #{agent_forward.1} parent=0 // pred_fallthru
    _
  // Predicated region
  $region6: #{agent_forward.1} parent=0 // pred_check
    _
  $region7: #{agent_forward.1} parent=0 // pred_check_branch
    %15 = sbr.rel (0) target = $region9
  $region8: #{agent_forward.1} parent=0 // pred_region
    _
  $region9: #{agent_forward.1} parent=0 // pred_fallthru
    _
  // Predicated region
  $region10: #{agent_forward.1} parent=0 // pred_check
    _
  $region11: #{agent_forward.1} parent=0 // pred_check_branch
    %17 = sbr.rel (0) target = $region13
  $region12: #{agent_forward.1} parent=0 // pred_region
    _
  $region13: #{agent_forward.1} parent=0 // pred_fallthru
    _
  // Predicated region
  $region14: #{agent_forward.1} parent=0 // pred_check
    _
  $region15: #{agent_forward.1} parent=0 // pred_check_branch
    %19 = sbr.rel (0) target = $region17
  $region16: #{agent_forward.1} parent=0 // pred_region
    _
  $region17: #{agent_forward.1} parent=0 // pred_fallthru
    _
  // Predicated region
  $region18: #{agent_forward.1} parent=0 // pred_check
    _
  $region19: #{agent_forward.1} parent=0 // pred_check_branch
    %21 = sbr.rel (0) target = $region21
  $region20: #{agent_forward.1} parent=0 // pred_region
    _
  $region21: #{agent_forward.1} parent=0 // pred_fallthru
    _
  // Predicated region
  $region22: #{agent_forward.1} parent=0 // pred_check
    _
  $region23: #{agent_forward.1} parent=0 // pred_check_branch
    %23 = sbr.rel (0) target = $region25
  $region24: #{agent_forward.1} parent=0 // pred_region
    _
  $region25: #{agent_forward.1} parent=0 // pred_fallthru
    _
  // Predicated region
  $region26: #{agent_forward.1} parent=0 // pred_check
    _
  $region27: #{agent_forward.1} parent=0 // pred_check_branch
    %25 = sbr.rel (0) target = $region29
  $region28: #{agent_forward.1} parent=0 // pred_region
    _
  $region29: #{agent_forward.1} parent=0 // pred_fallthru
    _
  %v27 = vld [vmem:[%s0] sm:$0xf]
  %v28 = vld [vmem:[%s0 + $0x4] sm:$0xf]
  %v29 = vld [vmem:[%s0 + $0x8] sm:$0xf]
  %v30 = vld [vmem:[%s0 + $0xc] sm:$0xf]
  %v31 = vld [vmem:[%s0 + $0x10] sm:$0xf]
  %v32 = vld [vmem:[%s0 + $0x14] sm:$0xf]
  %v33 = vld [vmem:[%s0 + $0x18] sm:$0xf]
  %v34 = vld [vmem:[%s0 + $0x1c] sm:$0xf]
  %v35 = vld [vmem:[%s0 + $0x20] sm:$0xf]
  %v36 = vld [vmem:[%s0 + $0x24] sm:$0xf]
  %v37 = vld [vmem:[%s0 + $0x28] sm:$0xf]
  %v38 = vld [vmem:[%s0 + $0x2c] sm:$0xf]
  %v39 = vld [vmem:[%s0 + $0x30] sm:$0xf]
  %v40 = vld [vmem:[%s0 + $0x34] sm:$0xf]
  %v41 = vld [vmem:[%s0 + $0x38] sm:$0xf]
  %v42 = vld [vmem:[%s0 + $0x3c] sm:$0xf]
  %v43 = vld [vmem:[%s0 + $0x40] sm:$0xf]
  %v44 = vld [vmem:[%s0 + $0x44] sm:$0xf]
  %v45 = vld [vmem:[%s0 + $0x48] sm:$0xf]
  %v46 = vld [vmem:[%s0 + $0x4c] sm:$0xf]
  %v47 = vld [vmem:[%s0 + $0x50] sm:$0xf]
  %v48 = vld [vmem:[%s0 + $0x54] sm:$0xf]
  %v49 = vld [vmem:[%s0 + $0x58] sm:$0xf]
  %v50 = vld [vmem:[%s0 + $0x5c] sm:$0xf]
  %v51 = vld [vmem:[%s0 + $0x60] sm:$0xf]
  %v52 = vld [vmem:[%s0 + $0x64] sm:$0xf]
  %v53 = vld [vmem:[%s0 + $0x68] sm:$0xf]
  %v54 = vld [vmem:[%s0 + $0x6c] sm:$0xf]
  %v55 = vld [vmem:[%s0 + $0x70] sm:$0xf]
  %v56 = vld [vmem:[%s0 + $0x74] sm:$0xf]
  %v57 = vld [vmem:[%s0 + $0x78] sm:$0xf]
  %v58 = vld [vmem:[%s0 + $0x7c] sm:$0xf]
  %v59 = vld [vmem:[%s0 + $0x80] sm:$0xf]
  %v60 = vld [vmem:[%s0 + $0x84] sm:$0xf]
  %v61 = vld [vmem:[%s0 + $0x88] sm:$0xf]
  %v62 = vld [vmem:[%s0 + $0x8c] sm:$0xf]
  %v63 = vld [vmem:[%s1] sm:$0xf]
  %v64 = vld [vmem:[%s1 + $0x4] sm:$0xf]
  %v65 = vld [vmem:[%s1 + $0x8] sm:$0xf]
  %v66 = vld [vmem:[%s1 + $0xc] sm:$0xf]
  %v67 = vld [vmem:[%s2] sm:$0x1]
  %v69 = vlaneseq
  %v70 = vshrl.u32 %v69, 7
  %v71 = vsub.s32 0, %v70
  %v72 = vrot.slane %v67, %v71
  %v110 = vunpack.c.l.b16 %v27
  %v111 = vunpack.c.l.b16 %v28
  %v112 = vunpack.c.l.b16 %v29
  %v113 = vunpack.c.l.b16 %v30
  %v114 = vunpack.c.l.b16 %v31
  %v115 = vunpack.c.l.b16 %v32
  %v116 = vunpack.c.l.b16 %v33
  %v117 = vunpack.c.l.b16 %v34
  %v118 = vunpack.c.l.b16 %v35
  %v119 = vunpack.c.l.b16 %v36
  %v120 = vunpack.c.l.b16 %v37
  %v121 = vunpack.c.l.b16 %v38
  %v122 = vunpack.c.l.b16 %v39
  %v123 = vunpack.c.l.b16 %v40
  %v124 = vunpack.c.l.b16 %v41
  %v125 = vunpack.c.l.b16 %v42
  %v126 = vunpack.c.l.b16 %v43
  %v127 = vunpack.c.l.b16 %v44
  %v128 = vunpack.c.l.b16 %v45
  %v129 = vunpack.c.l.b16 %v46
  %v130 = vunpack.c.l.b16 %v47
  %v131 = vunpack.c.l.b16 %v48
  %v132 = vunpack.c.l.b16 %v49
  %v133 = vunpack.c.l.b16 %v50
  %v134 = vunpack.c.l.b16 %v51
  %v135 = vunpack.c.l.b16 %v52
  %v136 = vunpack.c.l.b16 %v53
  %v137 = vunpack.c.l.b16 %v54
  %v138 = vunpack.c.l.b16 %v55
  %v139 = vunpack.c.l.b16 %v56
  %v140 = vunpack.c.l.b16 %v57
  %v141 = vunpack.c.l.b16 %v58
  %v142 = vunpack.c.l.b16 %v59
  %v143 = vunpack.c.l.b16 %v60
  %v144 = vunpack.c.l.b16 %v61
  %v145 = vunpack.c.l.b16 %v62
  %v146 = vpack.c.b16 %v111, %v110
  %v147 = vpack.c.b16 %v113, %v112
  %v148 = vpack.c.b16 %v115, %v114
  %v149 = vpack.c.b16 %v117, %v116
  %v150 = vpack.c.b16 %v119, %v118
  %v151 = vpack.c.b16 %v121, %v120
  %v152 = vpack.c.b16 %v123, %v122
  %v153 = vpack.c.b16 %v125, %v124
  %v154 = vpack.c.b16 %v127, %v126
  %v155 = vpack.c.b16 %v129, %v128
  %v156 = vpack.c.b16 %v131, %v130
  %v157 = vpack.c.b16 %v133, %v132
  %v158 = vpack.c.b16 %v135, %v134
  %v159 = vpack.c.b16 %v137, %v136
  %v160 = vpack.c.b16 %v139, %v138
  %v161 = vpack.c.b16 %v141, %v140
  %v162 = vpack.c.b16 %v143, %v142
  %v163 = vpack.c.b16 %v145, %v144
  %v168 = vunpack.c.l.b16 %v63
  %v169 = vunpack.c.l.b16 %v64
  %v170 = vunpack.c.l.b16 %v65
  %v171 = vunpack.c.l.b16 %v66
  %v172 = vpack.c.b16 %v169, %v168
  %v173 = vpack.c.b16 %v171, %v170
  %vm176 = vcmask 261120
  %v178 = vsel %vm176, %v146, 0
  %v181 = vsel %vm176, %v147, 0
  %v184 = vsel %vm176, %v148, 0
  %v187 = vsel %vm176, %v149, 0
  %v190 = vsel %vm176, %v150, 0
  %v193 = vsel %vm176, %v151, 0
  %v196 = vsel %vm176, %v152, 0
  %v199 = vsel %vm176, %v153, 0
  %v202 = vsel %vm176, %v154, 0
  %v205 = vsel %vm176, %v155, 0
  %v208 = vsel %vm176, %v156, 0
  %v211 = vsel %vm176, %v157, 0
  %v214 = vsel %vm176, %v158, 0
  %v217 = vsel %vm176, %v159, 0
  %v220 = vsel %vm176, %v160, 0
  %v223 = vsel %vm176, %v161, 0
  %v226 = vsel %vm176, %v162, 0
  %v229 = vsel %vm176, %v163, 0
  %231 = vmatprep.subr.bf16.mxu0 0
  %232 = vmatpush1.bf16.msra.mxu0 %v172
  %233 = vmatprep.subr.bf16.mxu0 0
  %234 = vmatpush1.bf16.msra.mxu0 %v173
  %235 = vmatprep.subr.bf16.mxu0 0
  %236 = vmatpush1.bf16.msra.mxu0 0
  %237 = vmatprep.subr.bf16.mxu0 0
  %238 = vmatpush1.bf16.msra.mxu0 0
  %239 = vmatprep.subr.bf16.mxu0 0
  %240 = vmatpush1.bf16.msra.mxu0 0
  %241 = vmatprep.subr.bf16.mxu0 0
  %242 = vmatpush1.bf16.msra.mxu0 0
  %243 = vmatprep.subr.bf16.mxu0 0
  %244 = vmatpush1.bf16.msra.mxu0 0
  %245 = vmatprep.subr.bf16.mxu0 0
  %246 = vmatpush1.bf16.msra.mxu0 0
  %247 = vmatprep.subr.bf16.mxu0 0
  %248 = vmatpush1.bf16.msra.mxu0 0
  %249 = vmatprep.subr.bf16.mxu0 0
  %250 = vmatpush1.bf16.msra.mxu0 0
  %251 = vmatprep.subr.bf16.mxu0 0
  %252 = vmatpush1.bf16.msra.mxu0 0
  %253 = vmatprep.subr.bf16.mxu0 0
  %254 = vmatpush1.bf16.msra.mxu0 0
  %255 = vmatprep.subr.bf16.mxu0 0
  %256 = vmatpush1.bf16.msra.mxu0 0
  %257 = vmatprep.subr.bf16.mxu0 0
  %258 = vmatpush1.bf16.msra.mxu0 0
  %259 = vmatprep.subr.bf16.mxu0 0
  %260 = vmatpush1.bf16.msra.mxu0 0
  %261 = vmatprep.subr.bf16.mxu0 0
  %262 = vmatpush1.bf16.msra.mxu0 0
  %263 = vmatprep.mubr.bf16.mxu0 0
  %264 = vmatmul.mubr.bf16.gmra.mrb[0].mxu0 %v178
  %v265 = vpop.f32.mrb[0].mxu0
  %v266 = vadd.f32 %v72, %v265
  %v267 = vpop.f32.mrb[0].mxu0
  %v268 = vpop.f32.mrb[0].mxu0
  %v269 = vadd.f32 %v72, %v268
  %v270 = vpop.f32.mrb[0].mxu0
  %271 = vmatprep.mubr.bf16.mxu0 0
  %272 = vmatmul.mubr.bf16.gmra.mrb[0].mxu0 %v181
  %v273 = vpop.f32.mrb[0].mxu0
  %v274 = vadd.f32 %v72, %v273
  %v275 = vpop.f32.mrb[0].mxu0
  %v276 = vpop.f32.mrb[0].mxu0
  %v277 = vadd.f32 %v72, %v276
  %v278 = vpop.f32.mrb[0].mxu0
  %279 = vmatprep.mubr.bf16.mxu0 0
  %280 = vmatmul.mubr.bf16.gmra.mrb[0].mxu0 %v184
  %v281 = vpop.f32.mrb[0].mxu0
  %v282 = vadd.f32 %v72, %v281
  %v283 = vpop.f32.mrb[0].mxu0
  %v284 = vpop.f32.mrb[0].mxu0
  %v285 = vadd.f32 %v72, %v284
  %v286 = vpop.f32.mrb[0].mxu0
  %287 = vmatprep.mubr.bf16.mxu0 0
  %288 = vmatmul.mubr.bf16.gmra.mrb[0].mxu0 %v187
  %v289 = vpop.f32.mrb[0].mxu0
  %v290 = vadd.f32 %v72, %v289
  %v291 = vpop.f32.mrb[0].mxu0
  %v292 = vpop.f32.mrb[0].mxu0
  %v293 = vadd.f32 %v72, %v292
  %v294 = vpop.f32.mrb[0].mxu0
  %295 = vmatprep.mubr.bf16.mxu0 0
  %296 = vmatmul.mubr.bf16.gmra.mrb[0].mxu0 %v190
  %v297 = vpop.f32.mrb[0].mxu0
  %v298 = vadd.f32 %v72, %v297
  %v299 = vpop.f32.mrb[0].mxu0
  %v300 = vpop.f32.mrb[0].mxu0
  %v301 = vadd.f32 %v72, %v300
  %v302 = vpop.f32.mrb[0].mxu0
  %303 = vmatprep.mubr.bf16.mxu0 0
  %304 = vmatmul.mubr.bf16.gmra.mrb[0].mxu0 %v193
  %v305 = vpop.f32.mrb[0].mxu0
  %v306 = vadd.f32 %v72, %v305
  %v307 = vpop.f32.mrb[0].mxu0
  %v308 = vpop.f32.mrb[0].mxu0
  %v309 = vadd.f32 %v72, %v308
  %v310 = vpop.f32.mrb[0].mxu0
  %311 = vmatprep.mubr.bf16.mxu0 0
  %312 = vmatmul.mubr.bf16.gmra.mrb[0].mxu0 %v196
  %v313 = vpop.f32.mrb[0].mxu0
  %v314 = vadd.f32 %v72, %v313
  %v315 = vpop.f32.mrb[0].mxu0
  %v316 = vpop.f32.mrb[0].mxu0
  %v317 = vadd.f32 %v72, %v316
  %v318 = vpop.f32.mrb[0].mxu0
  %319 = vmatprep.mubr.bf16.mxu0 0
  %320 = vmatmul.mubr.bf16.gmra.mrb[0].mxu0 %v199
  %v321 = vpop.f32.mrb[0].mxu0
  %v322 = vadd.f32 %v72, %v321
  %v323 = vpop.f32.mrb[0].mxu0
  %v324 = vpop.f32.mrb[0].mxu0
  %v325 = vadd.f32 %v72, %v324
  %v326 = vpop.f32.mrb[0].mxu0
  %327 = vmatprep.mubr.bf16.mxu0 0
  %328 = vmatmul.mubr.bf16.gmra.mrb[0].mxu0 %v202
  %v329 = vpop.f32.mrb[0].mxu0
  %v330 = vadd.f32 %v72, %v329
  %v331 = vpop.f32.mrb[0].mxu0
  %v332 = vpop.f32.mrb[0].mxu0
  %v333 = vadd.f32 %v72, %v332
  %v334 = vpop.f32.mrb[0].mxu0
  %335 = vmatprep.mubr.bf16.mxu0 0
  %336 = vmatmul.mubr.bf16.gmra.mrb[0].mxu0 %v205
  %v337 = vpop.f32.mrb[0].mxu0
  %v338 = vadd.f32 %v72, %v337
  %v339 = vpop.f32.mrb[0].mxu0
  %v340 = vpop.f32.mrb[0].mxu0
  %v341 = vadd.f32 %v72, %v340
  %v342 = vpop.f32.mrb[0].mxu0
  %343 = vmatprep.mubr.bf16.mxu0 0
  %344 = vmatmul.mubr.bf16.gmra.mrb[0].mxu0 %v208
  %v345 = vpop.f32.mrb[0].mxu0
  %v346 = vadd.f32 %v72, %v345
  %v347 = vpop.f32.mrb[0].mxu0
  %v348 = vpop.f32.mrb[0].mxu0
  %v349 = vadd.f32 %v72, %v348
  %v350 = vpop.f32.mrb[0].mxu0
  %351 = vmatprep.mubr.bf16.mxu0 0
  %352 = vmatmul.mubr.bf16.gmra.mrb[0].mxu0 %v211
  %v353 = vpop.f32.mrb[0].mxu0
  %v354 = vadd.f32 %v72, %v353
  %v355 = vpop.f32.mrb[0].mxu0
  %v356 = vpop.f32.mrb[0].mxu0
  %v357 = vadd.f32 %v72, %v356
  %v358 = vpop.f32.mrb[0].mxu0
  %359 = vmatprep.mubr.bf16.mxu0 0
  %360 = vmatmul.mubr.bf16.gmra.mrb[0].mxu0 %v214
  %v361 = vpop.f32.mrb[0].mxu0
  %v362 = vadd.f32 %v72, %v361
  %v363 = vpop.f32.mrb[0].mxu0
  %v364 = vpop.f32.mrb[0].mxu0
  %v365 = vadd.f32 %v72, %v364
  %v366 = vpop.f32.mrb[0].mxu0
  %367 = vmatprep.mubr.bf16.mxu0 0
  %368 = vmatmul.mubr.bf16.gmra.mrb[0].mxu0 %v217
  %v369 = vpop.f32.mrb[0].mxu0
  %v370 = vadd.f32 %v72, %v369
  %v371 = vpop.f32.mrb[0].mxu0
  %v372 = vpop.f32.mrb[0].mxu0
  %v373 = vadd.f32 %v72, %v372
  %v374 = vpop.f32.mrb[0].mxu0
  %375 = vmatprep.mubr.bf16.mxu0 0
  %376 = vmatmul.mubr.bf16.gmra.mrb[0].mxu0 %v220
  %v377 = vpop.f32.mrb[0].mxu0
  %v378 = vadd.f32 %v72, %v377
  %v379 = vpop.f32.mrb[0].mxu0
  %v380 = vpop.f32.mrb[0].mxu0
  %v381 = vadd.f32 %v72, %v380
  %v382 = vpop.f32.mrb[0].mxu0
  %383 = vmatprep.mubr.bf16.mxu0 0
  %384 = vmatmul.mubr.bf16.gmra.mrb[0].mxu0 %v223
  %v385 = vpop.f32.mrb[0].mxu0
  %v386 = vadd.f32 %v72, %v385
  %v387 = vpop.f32.mrb[0].mxu0
  %v388 = vpop.f32.mrb[0].mxu0
  %v389 = vadd.f32 %v72, %v388
  %v390 = vpop.f32.mrb[0].mxu0
  %391 = vmatprep.mubr.bf16.mxu0 0
  %392 = vmatmul.mubr.bf16.gmra.mrb[0].mxu0 %v226
  %v393 = vpop.f32.mrb[0].mxu0
  %v394 = vadd.f32 %v72, %v393
  %v395 = vpop.f32.mrb[0].mxu0
  %v396 = vpop.f32.mrb[0].mxu0
  %v397 = vadd.f32 %v72, %v396
  %v398 = vpop.f32.mrb[0].mxu0
  %399 = vmatprep.mubr.bf16.mxu0 0
  %400 = vmatmul.mubr.bf16.gmra.mrb[0].mxu0 %v229
  %v401 = vpop.f32.mrb[0].mxu0
  %v402 = vadd.f32 %v72, %v401
  %v403 = vpop.f32.mrb[0].mxu0
  %v404 = vpop.f32.mrb[0].mxu0
  %v405 = vadd.f32 %v72, %v404
  %v406 = vpop.f32.mrb[0].mxu0
  %407 = vdwg.mxu0
  %v408 = vmax.f32 %v266, 0.0
  %v409 = vmax.f32 %v269, 0.0
  %v410 = vmax.f32 %v274, 0.0
  %v411 = vmax.f32 %v277, 0.0
  %v412 = vmax.f32 %v282, 0.0
  %v413 = vmax.f32 %v285, 0.0
  %v414 = vmax.f32 %v290, 0.0
  %v415 = vmax.f32 %v293, 0.0
  %v416 = vmax.f32 %v298, 0.0
  %v417 = vmax.f32 %v301, 0.0
  %v418 = vmax.f32 %v306, 0.0
  %v419 = vmax.f32 %v309, 0.0
  %v420 = vmax.f32 %v314, 0.0
  %v421 = vmax.f32 %v317, 0.0
  %v422 = vmax.f32 %v322, 0.0
  %v423 = vmax.f32 %v325, 0.0
  %v424 = vmax.f32 %v330, 0.0
  %v425 = vmax.f32 %v333, 0.0
  %v426 = vmax.f32 %v338, 0.0
  %v427 = vmax.f32 %v341, 0.0
  %v428 = vmax.f32 %v346, 0.0
  %v429 = vmax.f32 %v349, 0.0
  %v430 = vmax.f32 %v354, 0.0
  %v431 = vmax.f32 %v357, 0.0
  %v432 = vmax.f32 %v362, 0.0
  %v433 = vmax.f32 %v365, 0.0
  %v434 = vmax.f32 %v370, 0.0
  %v435 = vmax.f32 %v373, 0.0
  %v436 = vmax.f32 %v378, 0.0
  %v437 = vmax.f32 %v381, 0.0
  %v438 = vmax.f32 %v386, 0.0
  %v439 = vmax.f32 %v389, 0.0
  %v440 = vmax.f32 %v394, 0.0
  %v441 = vmax.f32 %v397, 0.0
  %v442 = vmax.f32 %v402, 0.0
  %v443 = vmax.f32 %v405, 0.0
  %v444 = vld [vmem:[%s3] sm:$0xff]
  %v445 = vld [vmem:[%s3 + $0x8] sm:$0xff]
  %v446 = vld [vmem:[%s3 + $0x10] sm:$0xff]
  %v447 = vld [vmem:[%s3 + $0x18] sm:$0xff]
  %v448 = vld [vmem:[%s3 + $0x20] sm:$0xff]
  %v449 = vld [vmem:[%s3 + $0x28] sm:$0xff]
  %v450 = vld [vmem:[%s3 + $0x30] sm:$0xff]
  %v451 = vld [vmem:[%s3 + $0x38] sm:$0xff]
  %v452 = vld [vmem:[%s3 + $0x40] sm:$0xff]
  %v453 = vld [vmem:[%s3 + $0x48] sm:$0xff]
  %v454 = vld [vmem:[%s3 + $0x50] sm:$0xff]
  %v455 = vld [vmem:[%s3 + $0x58] sm:$0xff]
  %v456 = vld [vmem:[%s3 + $0x60] sm:$0xff]
  %v457 = vld [vmem:[%s3 + $0x68] sm:$0xff]
  %v458 = vld [vmem:[%s3 + $0x70] sm:$0xff]
  %v459 = vld [vmem:[%s3 + $0x78] sm:$0xff]
  %v460 = vld [vmem:[%s3 + $0x80] sm:$0xff]
  %v461 = vld [vmem:[%s3 + $0x88] sm:$0xff]
  %vm462 = vcmask 130048
  %v464 = vsel %vm462, %v409, 0
  %v467 = vsel %vm462, %v410, 0
  %v470 = vsel %vm462, %v411, 0
  %v473 = vsel %vm462, %v412, 0
  %v476 = vsel %vm462, %v413, 0
  %v479 = vsel %vm462, %v414, 0
  %v482 = vsel %vm462, %v415, 0
  %v485 = vsel %vm462, %v416, 0
  %v488 = vsel %vm462, %v417, 0
  %v491 = vsel %vm462, %v418, 0
  %v494 = vsel %vm462, %v419, 0
  %v497 = vsel %vm462, %v420, 0
  %v500 = vsel %vm462, %v421, 0
  %v503 = vsel %vm462, %v422, 0
  %v506 = vsel %vm462, %v423, 0
  %v509 = vsel %vm462, %v424, 0
  %v512 = vsel %vm462, %v425, 0
  %v515 = vsel %vm462, %v426, 0
  %v518 = vsel %vm462, %v427, 0
  %v521 = vsel %vm462, %v428, 0
  %v524 = vsel %vm462, %v429, 0
  %v527 = vsel %vm462, %v430, 0
  %529 = vmatprep.subr.mxu0 0.0
  %530 = vmatpush1.msra.mxu0 %v446
  %531 = vmatprep.subr.mxu0 0.0
  %532 = vmatpush1.msra.mxu0 %v447
  %533 = vmatprep.subr.mxu0 0.0
  %534 = vmatpush1.msra.mxu0 0.0
  %535 = vmatprep.subr.mxu0 0.0
  %536 = vmatpush1.msra.mxu0 0.0
  %537 = vmatprep.subr.mxu0 0.0
  %538 = vmatpush1.msra.mxu0 0.0
  %539 = vmatprep.subr.mxu0 0.0
  %540 = vmatpush1.msra.mxu0 0.0
  %541 = vmatprep.subr.mxu0 0.0
  %542 = vmatpush1.msra.mxu0 0.0
  %543 = vmatprep.subr.mxu0 0.0
  %544 = vmatpush1.msra.mxu0 0.0
  %545 = vmatprep.subr.mxu0 0.0
  %546 = vmatpush1.msra.mxu0 0.0
  %547 = vmatprep.subr.mxu0 0.0
  %548 = vmatpush1.msra.mxu0 0.0
  %549 = vmatprep.subr.mxu0 0.0
  %550 = vmatpush1.msra.mxu0 0.0
  %551 = vmatprep.subr.mxu0 0.0
  %552 = vmatpush1.msra.mxu0 0.0
  %553 = vmatprep.subr.mxu0 0.0
  %554 = vmatpush1.msra.mxu0 0.0
  %555 = vmatprep.subr.mxu0 0.0
  %556 = vmatpush1.msra.mxu0 0.0
  %557 = vmatprep.subr.mxu0 0.0
  %558 = vmatpush1.msra.mxu0 0.0
  %559 = vmatprep.subr.mxu0 0.0
  %560 = vmatpush1.msra.mxu0 0.0
  %561 = vmatprep.subr.mxu0 0.0
  %562 = vmatpush1.msra.mxu0 0.0
  %563 = vmatprep.subr.mxu0 0.0
  %564 = vmatpush1.msra.mxu0 0.0
  %565 = vmatprep.subr.mxu0 0.0
  %566 = vmatpush1.msra.mxu0 0.0
  %567 = vmatprep.subr.mxu0 0.0
  %568 = vmatpush1.msra.mxu0 0.0
  %569 = vmatprep.subr.mxu0 0.0
  %570 = vmatpush1.msra.mxu0 0.0
  %571 = vmatprep.subr.mxu0 0.0
  %572 = vmatpush1.msra.mxu0 0.0
  %573 = vmatprep.subr.mxu0 0.0
  %574 = vmatpush1.msra.mxu0 0.0
  %575 = vmatprep.subr.mxu0 0.0
  %576 = vmatpush1.msra.mxu0 0.0
  %577 = vmatprep.subr.mxu0 0.0
  %578 = vmatpush1.msra.mxu0 0.0
  %579 = vmatprep.subr.mxu0 0.0
  %580 = vmatpush1.msra.mxu0 0.0
  %581 = vmatprep.subr.mxu0 0.0
  %582 = vmatpush1.msra.mxu0 0.0
  %583 = vmatprep.subr.mxu0 0.0
  %584 = vmatpush1.msra.mxu0 0.0
  %585 = vmatprep.subr.mxu0 0.0
  %586 = vmatpush1.msra.mxu0 0.0
  %587 = vmatprep.subr.mxu0 0.0
  %588 = vmatpush1.msra.mxu0 0.0
  %589 = vmatprep.subr.mxu0 0.0
  %590 = vmatpush1.msra.mxu0 0.0
  %591 = vmatprep.subr.mxu0 0.0
  %592 = vmatpush1.msra.mxu0 0.0
  %593 = vmatprep.mubr.f32.mxu0 0.0
  %594 = vmatmul.mubr.f32.gmra.mrb[0].mxu0 %v464
  %v595 = vpop.f32.mrb[0].mxu0
  %v596 = vadd.f32 0.0, %v595
  %v597 = vpop.f32.mrb[0].mxu0
  %598 = vmatprep.mubr.f32.mxu0 0.0
  %599 = vmatmul.mubr.f32.gmra.mrb[0].mxu0 %v467
  %v600 = vpop.f32.mrb[0].mxu0
  %v601 = vadd.f32 0.0, %v600
  %v602 = vpop.f32.mrb[0].mxu0
  %603 = vmatprep.mubr.f32.mxu0 0.0
  %604 = vmatmul.mubr.f32.gmra.mrb[0].mxu0 %v470
  %v605 = vpop.f32.mrb[0].mxu0
  %v606 = vadd.f32 0.0, %v605
  %v607 = vpop.f32.mrb[0].mxu0
  %608 = vmatprep.mubr.f32.mxu0 0.0
  %609 = vmatmul.mubr.f32.gmra.mrb[0].mxu0 %v473
  %v610 = vpop.f32.mrb[0].mxu0
  %v611 = vadd.f32 0.0, %v610
  %v612 = vpop.f32.mrb[0].mxu0
  %613 = vmatprep.mubr.f32.mxu0 0.0
  %614 = vmatmul.mubr.f32.gmra.mrb[0].mxu0 %v476
  %v615 = vpop.f32.mrb[0].mxu0
  %v616 = vpop.f32.mrb[0].mxu0
  %617 = vmatprep.mubr.f32.mxu0 0.0
  %618 = vmatmul.mubr.f32.gmra.mrb[0].mxu0 %v479
  %v619 = vpop.f32.mrb[0].mxu0
  %v620 = vpop.f32.mrb[0].mxu0
  %621 = vmatprep.mubr.f32.mxu0 0.0
  %622 = vmatmul.mubr.f32.gmra.mrb[0].mxu0 %v482
  %v623 = vpop.f32.mrb[0].mxu0
  %v624 = vadd.f32 0.0, %v623
  %v625 = vpop.f32.mrb[0].mxu0
  %626 = vmatprep.mubr.f32.mxu0 0.0
  %627 = vmatmul.mubr.f32.gmra.mrb[0].mxu0 %v485
  %v628 = vpop.f32.mrb[0].mxu0
  %v629 = vadd.f32 0.0, %v628
  %v630 = vpop.f32.mrb[0].mxu0
  %631 = vmatprep.mubr.f32.mxu0 0.0
  %632 = vmatmul.mubr.f32.gmra.mrb[0].mxu0 %v488
  %v633 = vpop.f32.mrb[0].mxu0
  %v634 = vadd.f32 0.0, %v633
  %v635 = vpop.f32.mrb[0].mxu0
  %636 = vmatprep.mubr.f32.mxu0 0.0
  %637 = vmatmul.mubr.f32.gmra.mrb[0].mxu0 %v491
  %v638 = vpop.f32.mrb[0].mxu0
  %v639 = vadd.f32 0.0, %v638
  %v640 = vpop.f32.mrb[0].mxu0
  %641 = vmatprep.mubr.f32.mxu0 0.0
  %642 = vmatmul.mubr.f32.gmra.mrb[0].mxu0 %v494
  %v643 = vpop.f32.mrb[0].mxu0
  %v644 = vpop.f32.mrb[0].mxu0
  %645 = vmatprep.mubr.f32.mxu0 0.0
  %646 = vmatmul.mubr.f32.gmra.mrb[0].mxu0 %v497
  %v647 = vpop.f32.mrb[0].mxu0
  %v648 = vpop.f32.mrb[0].mxu0
  %649 = vmatprep.mubr.f32.mxu0 0.0
  %650 = vmatmul.mubr.f32.gmra.mrb[0].mxu0 %v500
  %v651 = vpop.f32.mrb[0].mxu0
  %v652 = vadd.f32 0.0, %v651
  %v653 = vpop.f32.mrb[0].mxu0
  %654 = vmatprep.mubr.f32.mxu0 0.0
  %655 = vmatmul.mubr.f32.gmra.mrb[0].mxu0 %v503
  %v656 = vpop.f32.mrb[0].mxu0
  %v657 = vadd.f32 0.0, %v656
  %v658 = vpop.f32.mrb[0].mxu0
  %659 = vmatprep.mubr.f32.mxu0 0.0
  %660 = vmatmul.mubr.f32.gmra.mrb[0].mxu0 %v506
  %v661 = vpop.f32.mrb[0].mxu0
  %v662 = vadd.f32 0.0, %v661
  %v663 = vpop.f32.mrb[0].mxu0
  %664 = vmatprep.mubr.f32.mxu0 0.0
  %665 = vmatmul.mubr.f32.gmra.mrb[0].mxu0 %v509
  %v666 = vpop.f32.mrb[0].mxu0
  %v667 = vadd.f32 0.0, %v666
  %v668 = vpop.f32.mrb[0].mxu0
  %669 = vmatprep.mubr.f32.mxu0 0.0
  %670 = vmatmul.mubr.f32.gmra.mrb[0].mxu0 %v512
  %v671 = vpop.f32.mrb[0].mxu0
  %v672 = vpop.f32.mrb[0].mxu0
  %673 = vmatprep.mubr.f32.mxu0 0.0
  %674 = vmatmul.mubr.f32.gmra.mrb[0].mxu0 %v515
  %v675 = vpop.f32.mrb[0].mxu0
  %v676 = vpop.f32.mrb[0].mxu0
  %677 = vmatprep.mubr.f32.mxu0 0.0
  %678 = vmatmul.mubr.f32.gmra.mrb[0].mxu0 %v518
  %v679 = vpop.f32.mrb[0].mxu0
  %v680 = vadd.f32 0.0, %v679
  %v681 = vpop.f32.mrb[0].mxu0
  %682 = vmatprep.mubr.f32.mxu0 0.0
  %683 = vmatmul.mubr.f32.gmra.mrb[0].mxu0 %v521
  %v684 = vpop.f32.mrb[0].mxu0
  %v685 = vadd.f32 0.0, %v684
  %v686 = vpop.f32.mrb[0].mxu0
  %687 = vmatprep.mubr.f32.mxu0 0.0
  %688 = vmatmul.mubr.f32.gmra.mrb[0].mxu0 %v524
  %v689 = vpop.f32.mrb[0].mxu0
  %v690 = vadd.f32 0.0, %v689
  %v691 = vpop.f32.mrb[0].mxu0
  %692 = vmatprep.mubr.f32.mxu0 0.0
  %693 = vmatmul.mubr.f32.gmra.mrb[0].mxu0 %v527
  %v694 = vpop.f32.mrb[0].mxu0
  %v695 = vadd.f32 0.0, %v694
  %v696 = vpop.f32.mrb[0].mxu0
  %697 = vdwg.mxu0
  %v699 = vsel %vm462, %v408, 0
  %701 = vmatprep.subr.mxu0 0.0
  %702 = vmatpush1.msra.mxu0 %v444
  %703 = vmatprep.subr.mxu0 0.0
  %704 = vmatpush1.msra.mxu0 %v445
  %705 = vmatprep.subr.mxu0 0.0
  %706 = vmatpush1.msra.mxu0 0.0
  %707 = vmatprep.subr.mxu0 0.0
  %708 = vmatpush1.msra.mxu0 0.0
  %709 = vmatprep.subr.mxu0 0.0
  %710 = vmatpush1.msra.mxu0 0.0
  %711 = vmatprep.subr.mxu0 0.0
  %712 = vmatpush1.msra.mxu0 0.0
  %713 = vmatprep.subr.mxu0 0.0
  %714 = vmatpush1.msra.mxu0 0.0
  %715 = vmatprep.subr.mxu0 0.0
  %716 = vmatpush1.msra.mxu0 0.0
  %717 = vmatprep.subr.mxu0 0.0
  %718 = vmatpush1.msra.mxu0 0.0
  %719 = vmatprep.subr.mxu0 0.0
  %720 = vmatpush1.msra.mxu0 0.0
  %721 = vmatprep.subr.mxu0 0.0
  %722 = vmatpush1.msra.mxu0 0.0
  %723 = vmatprep.subr.mxu0 0.0
  %724 = vmatpush1.msra.mxu0 0.0
  %725 = vmatprep.subr.mxu0 0.0
  %726 = vmatpush1.msra.mxu0 0.0
  %727 = vmatprep.subr.mxu0 0.0
  %728 = vmatpush1.msra.mxu0 0.0
  %729 = vmatprep.subr.mxu0 0.0
  %730 = vmatpush1.msra.mxu0 0.0
  %731 = vmatprep.subr.mxu0 0.0
  %732 = vmatpush1.msra.mxu0 0.0
  %733 = vmatprep.subr.mxu0 0.0
  %734 = vmatpush1.msra.mxu0 0.0
  %735 = vmatprep.subr.mxu0 0.0
  %736 = vmatpush1.msra.mxu0 0.0
  %737 = vmatprep.subr.mxu0 0.0
  %738 = vmatpush1.msra.mxu0 0.0
  %739 = vmatprep.subr.mxu0 0.0
  %740 = vmatpush1.msra.mxu0 0.0
  %741 = vmatprep.subr.mxu0 0.0
  %742 = vmatpush1.msra.mxu0 0.0
  %743 = vmatprep.subr.mxu0 0.0
  %744 = vmatpush1.msra.mxu0 0.0
  %745 = vmatprep.subr.mxu0 0.0
  %746 = vmatpush1.msra.mxu0 0.0
  %747 = vmatprep.subr.mxu0 0.0
  %748 = vmatpush1.msra.mxu0 0.0
  %749 = vmatprep.subr.mxu0 0.0
  %750 = vmatpush1.msra.mxu0 0.0
  %751 = vmatprep.subr.mxu0 0.0
  %752 = vmatpush1.msra.mxu0 0.0
  %753 = vmatprep.subr.mxu0 0.0
  %754 = vmatpush1.msra.mxu0 0.0
  %755 = vmatprep.subr.mxu0 0.0
  %756 = vmatpush1.msra.mxu0 0.0
  %757 = vmatprep.subr.mxu0 0.0
  %758 = vmatpush1.msra.mxu0 0.0
  %759 = vmatprep.subr.mxu0 0.0
  %760 = vmatpush1.msra.mxu0 0.0
  %761 = vmatprep.subr.mxu0 0.0
  %762 = vmatpush1.msra.mxu0 0.0
  %763 = vmatprep.subr.mxu0 0.0
  %764 = vmatpush1.msra.mxu0 0.0
  %765 = vmatprep.mubr.f32.mxu0 0.0
  %766 = vmatmul.mubr.f32.gmra.mrb[0].mxu0 %v699
  %v767 = vpop.f32.mrb[0].mxu0
  %v768 = vadd.f32 %v596, %v767
  %v769 = vpop.f32.mrb[0].mxu0
  %770 = vmatprep.mubr.f32.mxu0 0.0
  %771 = vmatmul.mubr.f32.gmra.mrb[0].mxu0 %v464
  %v772 = vpop.f32.mrb[0].mxu0
  %v773 = vadd.f32 %v601, %v772
  %v774 = vpop.f32.mrb[0].mxu0
  %775 = vmatprep.mubr.f32.mxu0 0.0
  %776 = vmatmul.mubr.f32.gmra.mrb[0].mxu0 %v467
  %v777 = vpop.f32.mrb[0].mxu0
  %v778 = vadd.f32 %v606, %v777
  %v779 = vpop.f32.mrb[0].mxu0
  %780 = vmatprep.mubr.f32.mxu0 0.0
  %781 = vmatmul.mubr.f32.gmra.mrb[0].mxu0 %v470
  %v782 = vpop.f32.mrb[0].mxu0
  %v783 = vadd.f32 %v611, %v782
  %v784 = vpop.f32.mrb[0].mxu0
  %785 = vmatprep.mubr.f32.mxu0 0.0
  %786 = vmatmul.mubr.f32.gmra.mrb[0].mxu0 %v473
  %v787 = vpop.f32.mrb[0].mxu0
  %v788 = vpop.f32.mrb[0].mxu0
  %789 = vmatprep.mubr.f32.mxu0 0.0
  %790 = vmatmul.mubr.f32.gmra.mrb[0].mxu0 %v476
  %v791 = vpop.f32.mrb[0].mxu0
  %v792 = vpop.f32.mrb[0].mxu0
  %793 = vmatprep.mubr.f32.mxu0 0.0
  %794 = vmatmul.mubr.f32.gmra.mrb[0].mxu0 %v479
  %v795 = vpop.f32.mrb[0].mxu0
  %v796 = vadd.f32 %v624, %v795
  %v797 = vpop.f32.mrb[0].mxu0
  %798 = vmatprep.mubr.f32.mxu0 0.0
  %799 = vmatmul.mubr.f32.gmra.mrb[0].mxu0 %v482
  %v800 = vpop.f32.mrb[0].mxu0
  %v801 = vadd.f32 %v629, %v800
  %v802 = vpop.f32.mrb[0].mxu0
  %803 = vmatprep.mubr.f32.mxu0 0.0
  %804 = vmatmul.mubr.f32.gmra.mrb[0].mxu0 %v485
  %v805 = vpop.f32.mrb[0].mxu0
  %v806 = vadd.f32 %v634, %v805
  %v807 = vpop.f32.mrb[0].mxu0
  %808 = vmatprep.mubr.f32.mxu0 0.0
  %809 = vmatmul.mubr.f32.gmra.mrb[0].mxu0 %v488
  %v810 = vpop.f32.mrb[0].mxu0
  %v811 = vadd.f32 %v639, %v810
  %v812 = vpop.f32.mrb[0].mxu0
  %813 = vmatprep.mubr.f32.mxu0 0.0
  %814 = vmatmul.mubr.f32.gmra.mrb[0].mxu0 %v491
  %v815 = vpop.f32.mrb[0].mxu0
  %v816 = vpop.f32.mrb[0].mxu0
  %817 = vmatprep.mubr.f32.mxu0 0.0
  %818 = vmatmul.mubr.f32.gmra.mrb[0].mxu0 %v494
  %v819 = vpop.f32.mrb[0].mxu0
  %v820 = vpop.f32.mrb[0].mxu0
  %821 = vmatprep.mubr.f32.mxu0 0.0
  %822 = vmatmul.mubr.f32.gmra.mrb[0].mxu0 %v497
  %v823 = vpop.f32.mrb[0].mxu0
  %v824 = vadd.f32 %v652, %v823
  %v825 = vpop.f32.mrb[0].mxu0
  %826 = vmatprep.mubr.f32.mxu0 0.0
  %827 = vmatmul.mubr.f32.gmra.mrb[0].mxu0 %v500
  %v828 = vpop.f32.mrb[0].mxu0
  %v829 = vadd.f32 %v657, %v828
  %v830 = vpop.f32.mrb[0].mxu0
  %831 = vmatprep.mubr.f32.mxu0 0.0
  %832 = vmatmul.mubr.f32.gmra.mrb[0].mxu0 %v503
  %v833 = vpop.f32.mrb[0].mxu0
  %v834 = vadd.f32 %v662, %v833
  %v835 = vpop.f32.mrb[0].mxu0
  %836 = vmatprep.mubr.f32.mxu0 0.0
  %837 = vmatmul.mubr.f32.gmra.mrb[0].mxu0 %v506
  %v838 = vpop.f32.mrb[0].mxu0
  %v839 = vadd.f32 %v667, %v838
  %v840 = vpop.f32.mrb[0].mxu0
  %841 = vmatprep.mubr.f32.mxu0 0.0
  %842 = vmatmul.mubr.f32.gmra.mrb[0].mxu0 %v509
  %v843 = vpop.f32.mrb[0].mxu0
  %v844 = vpop.f32.mrb[0].mxu0
  %845 = vmatprep.mubr.f32.mxu0 0.0
  %846 = vmatmul.mubr.f32.gmra.mrb[0].mxu0 %v512
  %v847 = vpop.f32.mrb[0].mxu0
  %v848 = vpop.f32.mrb[0].mxu0
  %849 = vmatprep.mubr.f32.mxu0 0.0
  %850 = vmatmul.mubr.f32.gmra.mrb[0].mxu0 %v515
  %v851 = vpop.f32.mrb[0].mxu0
  %v852 = vadd.f32 %v680, %v851
  %v853 = vpop.f32.mrb[0].mxu0
  %854 = vmatprep.mubr.f32.mxu0 0.0
  %855 = vmatmul.mubr.f32.gmra.mrb[0].mxu0 %v518
  %v856 = vpop.f32.mrb[0].mxu0
  %v857 = vadd.f32 %v685, %v856
  %v858 = vpop.f32.mrb[0].mxu0
  %859 = vmatprep.mubr.f32.mxu0 0.0
  %860 = vmatmul.mubr.f32.gmra.mrb[0].mxu0 %v521
  %v861 = vpop.f32.mrb[0].mxu0
  %v862 = vadd.f32 %v690, %v861
  %v863 = vpop.f32.mrb[0].mxu0
  %864 = vmatprep.mubr.f32.mxu0 0.0
  %865 = vmatmul.mubr.f32.gmra.mrb[0].mxu0 %v524
  %v866 = vpop.f32.mrb[0].mxu0
  %v867 = vadd.f32 %v695, %v866
  %v868 = vpop.f32.mrb[0].mxu0
  %869 = vdwg.mxu0
  %v871 = vsel %vm462, %v431, 0
  %873 = vmatprep.subr.mxu0 0.0
  %874 = vmatpush1.msra.mxu0 %v448
  %875 = vmatprep.subr.mxu0 0.0
  %876 = vmatpush1.msra.mxu0 %v449
  %877 = vmatprep.subr.mxu0 0.0
  %878 = vmatpush1.msra.mxu0 0.0
  %879 = vmatprep.subr.mxu0 0.0
  %880 = vmatpush1.msra.mxu0 0.0
  %881 = vmatprep.subr.mxu0 0.0
  %882 = vmatpush1.msra.mxu0 0.0
  %883 = vmatprep.subr.mxu0 0.0
  %884 = vmatpush1.msra.mxu0 0.0
  %885 = vmatprep.subr.mxu0 0.0
  %886 = vmatpush1.msra.mxu0 0.0
  %887 = vmatprep.subr.mxu0 0.0
  %888 = vmatpush1.msra.mxu0 0.0
  %889 = vmatprep.subr.mxu0 0.0
  %890 = vmatpush1.msra.mxu0 0.0
  %891 = vmatprep.subr.mxu0 0.0
  %892 = vmatpush1.msra.mxu0 0.0
  %893 = vmatprep.subr.mxu0 0.0
  %894 = vmatpush1.msra.mxu0 0.0
  %895 = vmatprep.subr.mxu0 0.0
  %896 = vmatpush1.msra.mxu0 0.0
  %897 = vmatprep.subr.mxu0 0.0
  %898 = vmatpush1.msra.mxu0 0.0
  %899 = vmatprep.subr.mxu0 0.0
  %900 = vmatpush1.msra.mxu0 0.0
  %901 = vmatprep.subr.mxu0 0.0
  %902 = vmatpush1.msra.mxu0 0.0
  %903 = vmatprep.subr.mxu0 0.0
  %904 = vmatpush1.msra.mxu0 0.0
  %905 = vmatprep.subr.mxu0 0.0
  %906 = vmatpush1.msra.mxu0 0.0
  %907 = vmatprep.subr.mxu0 0.0
  %908 = vmatpush1.msra.mxu0 0.0
  %909 = vmatprep.subr.mxu0 0.0
  %910 = vmatpush1.msra.mxu0 0.0
  %911 = vmatprep.subr.mxu0 0.0
  %912 = vmatpush1.msra.mxu0 0.0
  %913 = vmatprep.subr.mxu0 0.0
  %914 = vmatpush1.msra.mxu0 0.0
  %915 = vmatprep.subr.mxu0 0.0
  %916 = vmatpush1.msra.mxu0 0.0
  %917 = vmatprep.subr.mxu0 0.0
  %918 = vmatpush1.msra.mxu0 0.0
  %919 = vmatprep.subr.mxu0 0.0
  %920 = vmatpush1.msra.mxu0 0.0
  %921 = vmatprep.subr.mxu0 0.0
  %922 = vmatpush1.msra.mxu0 0.0
  %923 = vmatprep.subr.mxu0 0.0
  %924 = vmatpush1.msra.mxu0 0.0
  %925 = vmatprep.subr.mxu0 0.0
  %926 = vmatpush1.msra.mxu0 0.0
  %927 = vmatprep.subr.mxu0 0.0
  %928 = vmatpush1.msra.mxu0 0.0
  %929 = vmatprep.subr.mxu0 0.0
  %930 = vmatpush1.msra.mxu0 0.0
  %931 = vmatprep.subr.mxu0 0.0
  %932 = vmatpush1.msra.mxu0 0.0
  %933 = vmatprep.subr.mxu0 0.0
  %934 = vmatpush1.msra.mxu0 0.0
  %935 = vmatprep.subr.mxu0 0.0
  %936 = vmatpush1.msra.mxu0 0.0
  %937 = vmatprep.mubr.f32.mxu0 0.0
  %938 = vmatmul.mubr.f32.gmra.mrb[0].mxu0 %v467
  %v939 = vpop.f32.mrb[0].mxu0
  %v940 = vadd.f32 0.0, %v939
  %v941 = vpop.f32.mrb[0].mxu0
  %942 = vmatprep.mubr.f32.mxu0 0.0
  %943 = vmatmul.mubr.f32.gmra.mrb[0].mxu0 %v470
  %v944 = vpop.f32.mrb[0].mxu0
  %v945 = vadd.f32 0.0, %v944
  %v946 = vpop.f32.mrb[0].mxu0
  %947 = vmatprep.mubr.f32.mxu0 0.0
  %948 = vmatmul.mubr.f32.gmra.mrb[0].mxu0 %v473
  %v949 = vpop.f32.mrb[0].mxu0
  %v950 = vadd.f32 0.0, %v949
  %v951 = vpop.f32.mrb[0].mxu0
  %952 = vmatprep.mubr.f32.mxu0 0.0
  %953 = vmatmul.mubr.f32.gmra.mrb[0].mxu0 %v476
  %v954 = vpop.f32.mrb[0].mxu0
  %v955 = vadd.f32 0.0, %v954
  %v956 = vpop.f32.mrb[0].mxu0
  %957 = vmatprep.mubr.f32.mxu0 0.0
  %958 = vmatmul.mubr.f32.gmra.mrb[0].mxu0 %v479
  %v959 = vpop.f32.mrb[0].mxu0
  %v960 = vpop.f32.mrb[0].mxu0
  %961 = vmatprep.mubr.f32.mxu0 0.0
  %962 = vmatmul.mubr.f32.gmra.mrb[0].mxu0 %v482
  %v963 = vpop.f32.mrb[0].mxu0
  %v964 = vpop.f32.mrb[0].mxu0
  %965 = vmatprep.mubr.f32.mxu0 0.0
  %966 = vmatmul.mubr.f32.gmra.mrb[0].mxu0 %v485
  %v967 = vpop.f32.mrb[0].mxu0
  %v968 = vadd.f32 0.0, %v967
  %v969 = vpop.f32.mrb[0].mxu0
  %970 = vmatprep.mubr.f32.mxu0 0.0
  %971 = vmatmul.mubr.f32.gmra.mrb[0].mxu0 %v488
  %v972 = vpop.f32.mrb[0].mxu0
  %v973 = vadd.f32 0.0, %v972
  %v974 = vpop.f32.mrb[0].mxu0
  %975 = vmatprep.mubr.f32.mxu0 0.0
  %976 = vmatmul.mubr.f32.gmra.mrb[0].mxu0 %v491
  %v977 = vpop.f32.mrb[0].mxu0
  %v978 = vadd.f32 0.0, %v977
  %v979 = vpop.f32.mrb[0].mxu0
  %980 = vmatprep.mubr.f32.mxu0 0.0
  %981 = vmatmul.mubr.f32.gmra.mrb[0].mxu0 %v494
  %v982 = vpop.f32.mrb[0].mxu0
  %v983 = vadd.f32 0.0, %v982
  %v984 = vpop.f32.mrb[0].mxu0
  %985 = vmatprep.mubr.f32.mxu0 0.0
  %986 = vmatmul.mubr.f32.gmra.mrb[0].mxu0 %v497
  %v987 = vpop.f32.mrb[0].mxu0
  %v988 = vpop.f32.mrb[0].mxu0
  %989 = vmatprep.mubr.f32.mxu0 0.0
  %990 = vmatmul.mubr.f32.gmra.mrb[0].mxu0 %v500
  %v991 = vpop.f32.mrb[0].mxu0
  %v992 = vpop.f32.mrb[0].mxu0
  %993 = vmatprep.mubr.f32.mxu0 0.0
  %994 = vmatmul.mubr.f32.gmra.mrb[0].mxu0 %v503
  %v995 = vpop.f32.mrb[0].mxu0
  %v996 = vadd.f32 0.0, %v995
  %v997 = vpop.f32.mrb[0].mxu0
  %998 = vmatprep.mubr.f32.mxu0 0.0
  %999 = vmatmul.mubr.f32.gmra.mrb[0].mxu0 %v506
  %v1000 = vpop.f32.mrb[0].mxu0
  %v1001 = vadd.f32 0.0, %v1000
  %v1002 = vpop.f32.mrb[0].mxu0
  %1003 = vmatprep.mubr.f32.mxu0 0.0
  %1004 = vmatmul.mubr.f32.gmra.mrb[0].mxu0 %v509
  %v1005 = vpop.f32.mrb[0].mxu0
  %v1006 = vadd.f32 0.0, %v1005
  %v1007 = vpop.f32.mrb[0].mxu0
  %1008 = vmatprep.mubr.f32.mxu0 0.0
  %1009 = vmatmul.mubr.f32.gmra.mrb[0].mxu0 %v512
  %v1010 = vpop.f32.mrb[0].mxu0
  %v1011 = vadd.f32 0.0, %v1010
  %v1012 = vpop.f32.mrb[0].mxu0
  %1013 = vmatprep.mubr.f32.mxu0 0.0
  %1014 = vmatmul.mubr.f32.gmra.mrb[0].mxu0 %v515
  %v1015 = vpop.f32.mrb[0].mxu0
  %v1016 = vpop.f32.mrb[0].mxu0
  %1017 = vmatprep.mubr.f32.mxu0 0.0
  %1018 = vmatmul.mubr.f32.gmra.mrb[0].mxu0 %v518
  %v1019 = vpop.f32.mrb[0].mxu0
  %v1020 = vpop.f32.mrb[0].mxu0
  %1021 = vmatprep.mubr.f32.mxu0 0.0
  %1022 = vmatmul.mubr.f32.gmra.mrb[0].mxu0 %v521
  %v1023 = vpop.f32.mrb[0].mxu0
  %v1024 = vadd.f32 0.0, %v1023
  %v1025 = vpop.f32.mrb[0].mxu0
  %1026 = vmatprep.mubr.f32.mxu0 0.0
  %1027 = vmatmul.mubr.f32.gmra.mrb[0].mxu0 %v524
  %v1028 = vpop.f32.mrb[0].mxu0
  %v1029 = vadd.f32 0.0, %v1028
  %v1030 = vpop.f32.mrb[0].mxu0
  %1031 = vmatprep.mubr.f32.mxu0 0.0
  %1032 = vmatmul.mubr.f32.gmra.mrb[0].mxu0 %v527
  %v1033 = vpop.f32.mrb[0].mxu0
  %v1034 = vadd.f32 0.0, %v1033
  %v1035 = vpop.f32.mrb[0].mxu0
  %1036 = vmatprep.mubr.f32.mxu0 0.0
  %1037 = vmatmul.mubr.f32.gmra.mrb[0].mxu0 %v871
  %v1038 = vpop.f32.mrb[0].mxu0
  %v1039 = vadd.f32 0.0, %v1038
  %v1040 = vpop.f32.mrb[0].mxu0
  %1041 = vdwg.mxu0
  %v1042 = vadd.f32 %v768, %v940
  %v1043 = vadd.f32 %v773, %v945
  %v1044 = vadd.f32 %v778, %v950
  %v1045 = vadd.f32 %v783, %v955
  %v1046 = vadd.f32 %v796, %v968
  %v1047 = vadd.f32 %v801, %v973
  %v1048 = vadd.f32 %v806, %v978
  %v1049 = vadd.f32 %v811, %v983
  %v1050 = vadd.f32 %v824, %v996
  %v1051 = vadd.f32 %v829, %v1001
  %v1052 = vadd.f32 %v834, %v1006
  %v1053 = vadd.f32 %v839, %v1011
  %v1054 = vadd.f32 %v852, %v1024
  %v1055 = vadd.f32 %v857, %v1029
  %v1056 = vadd.f32 %v862, %v1034
  %v1057 = vadd.f32 %v867, %v1039
  %v1059 = vsel %vm462, %v432, 0
  %v1062 = vsel %vm462, %v433, 0
  %v1065 = vsel %vm462, %v434, 0
  %v1068 = vsel %vm462, %v435, 0
  %1070 = vmatprep.subr.mxu0 0.0
  %1071 = vmatpush1.msra.mxu0 %v450
  %1072 = vmatprep.subr.mxu0 0.0
  %1073 = vmatpush1.msra.mxu0 %v451
  %1074 = vmatprep.subr.mxu0 0.0
  %1075 = vmatpush1.msra.mxu0 0.0
  %1076 = vmatprep.subr.mxu0 0.0
  %1077 = vmatpush1.msra.mxu0 0.0
  %1078 = vmatprep.subr.mxu0 0.0
  %1079 = vmatpush1.msra.mxu0 0.0
  %1080 = vmatprep.subr.mxu0 0.0
  %1081 = vmatpush1.msra.mxu0 0.0
  %1082 = vmatprep.subr.mxu0 0.0
  %1083 = vmatpush1.msra.mxu0 0.0
  %1084 = vmatprep.subr.mxu0 0.0
  %1085 = vmatpush1.msra.mxu0 0.0
  %1086 = vmatprep.subr.mxu0 0.0
  %1087 = vmatpush1.msra.mxu0 0.0
  %1088 = vmatprep.subr.mxu0 0.0
  %1089 = vmatpush1.msra.mxu0 0.0
  %1090 = vmatprep.subr.mxu0 0.0
  %1091 = vmatpush1.msra.mxu0 0.0
  %1092 = vmatprep.subr.mxu0 0.0
  %1093 = vmatpush1.msra.mxu0 0.0
  %1094 = vmatprep.subr.mxu0 0.0
  %1095 = vmatpush1.msra.mxu0 0.0
  %1096 = vmatprep.subr.mxu0 0.0
  %1097 = vmatpush1.msra.mxu0 0.0
  %1098 = vmatprep.subr.mxu0 0.0
  %1099 = vmatpush1.msra.mxu0 0.0
  %1100 = vmatprep.subr.mxu0 0.0
  %1101 = vmatpush1.msra.mxu0 0.0
  %1102 = vmatprep.subr.mxu0 0.0
  %1103 = vmatpush1.msra.mxu0 0.0
  %1104 = vmatprep.subr.mxu0 0.0
  %1105 = vmatpush1.msra.mxu0 0.0
  %1106 = vmatprep.subr.mxu0 0.0
  %1107 = vmatpush1.msra.mxu0 0.0
  %1108 = vmatprep.subr.mxu0 0.0
  %1109 = vmatpush1.msra.mxu0 0.0
  %1110 = vmatprep.subr.mxu0 0.0
  %1111 = vmatpush1.msra.mxu0 0.0
  %1112 = vmatprep.subr.mxu0 0.0
  %1113 = vmatpush1.msra.mxu0 0.0
  %1114 = vmatprep.subr.mxu0 0.0
  %1115 = vmatpush1.msra.mxu0 0.0
  %1116 = vmatprep.subr.mxu0 0.0
  %1117 = vmatpush1.msra.mxu0 0.0
  %1118 = vmatprep.subr.mxu0 0.0
  %1119 = vmatpush1.msra.mxu0 0.0
  %1120 = vmatprep.subr.mxu0 0.0
  %1121 = vmatpush1.msra.mxu0 0.0
  %1122 = vmatprep.subr.mxu0 0.0
  %1123 = vmatpush1.msra.mxu0 0.0
  %1124 = vmatprep.subr.mxu0 0.0
  %1125 = vmatpush1.msra.mxu0 0.0
  %1126 = vmatprep.subr.mxu0 0.0
  %1127 = vmatpush1.msra.mxu0 0.0
  %1128 = vmatprep.subr.mxu0 0.0
  %1129 = vmatpush1.msra.mxu0 0.0
  %1130 = vmatprep.subr.mxu0 0.0
  %1131 = vmatpush1.msra.mxu0 0.0
  %1132 = vmatprep.subr.mxu0 0.0
  %1133 = vmatpush1.msra.mxu0 0.0
  %1134 = vmatprep.mubr.f32.mxu0 0.0
  %1135 = vmatmul.mubr.f32.gmra.mrb[0].mxu0 %v479
  %v1136 = vpop.f32.mrb[0].mxu0
  %v1137 = vadd.f32 0.0, %v1136
  %v1138 = vpop.f32.mrb[0].mxu0
  %1139 = vmatprep.mubr.f32.mxu0 0.0
  %1140 = vmatmul.mubr.f32.gmra.mrb[0].mxu0 %v482
  %v1141 = vpop.f32.mrb[0].mxu0
  %v1142 = vadd.f32 0.0, %v1141
  %v1143 = vpop.f32.mrb[0].mxu0
  %1144 = vmatprep.mubr.f32.mxu0 0.0
  %1145 = vmatmul.mubr.f32.gmra.mrb[0].mxu0 %v485
  %v1146 = vpop.f32.mrb[0].mxu0
  %v1147 = vadd.f32 0.0, %v1146
  %v1148 = vpop.f32.mrb[0].mxu0
  %1149 = vmatprep.mubr.f32.mxu0 0.0
  %1150 = vmatmul.mubr.f32.gmra.mrb[0].mxu0 %v488
  %v1151 = vpop.f32.mrb[0].mxu0
  %v1152 = vadd.f32 0.0, %v1151
  %v1153 = vpop.f32.mrb[0].mxu0
  %1154 = vmatprep.mubr.f32.mxu0 0.0
  %1155 = vmatmul.mubr.f32.gmra.mrb[0].mxu0 %v491
  %v1156 = vpop.f32.mrb[0].mxu0
  %v1157 = vpop.f32.mrb[0].mxu0
  %1158 = vmatprep.mubr.f32.mxu0 0.0
  %1159 = vmatmul.mubr.f32.gmra.mrb[0].mxu0 %v494
  %v1160 = vpop.f32.mrb[0].mxu0
  %v1161 = vpop.f32.mrb[0].mxu0
  %1162 = vmatprep.mubr.f32.mxu0 0.0
  %1163 = vmatmul.mubr.f32.gmra.mrb[0].mxu0 %v497
  %v1164 = vpop.f32.mrb[0].mxu0
  %v1165 = vadd.f32 0.0, %v1164
  %v1166 = vpop.f32.mrb[0].mxu0
  %1167 = vmatprep.mubr.f32.mxu0 0.0
  %1168 = vmatmul.mubr.f32.gmra.mrb[0].mxu0 %v500
  %v1169 = vpop.f32.mrb[0].mxu0
  %v1170 = vadd.f32 0.0, %v1169
  %v1171 = vpop.f32.mrb[0].mxu0
  %1172 = vmatprep.mubr.f32.mxu0 0.0
  %1173 = vmatmul.mubr.f32.gmra.mrb[0].mxu0 %v503
  %v1174 = vpop.f32.mrb[0].mxu0
  %v1175 = vadd.f32 0.0, %v1174
  %v1176 = vpop.f32.mrb[0].mxu0
  %1177 = vmatprep.mubr.f32.mxu0 0.0
  %1178 = vmatmul.mubr.f32.gmra.mrb[0].mxu0 %v506
  %v1179 = vpop.f32.mrb[0].mxu0
  %v1180 = vadd.f32 0.0, %v1179
  %v1181 = vpop.f32.mrb[0].mxu0
  %1182 = vmatprep.mubr.f32.mxu0 0.0
  %1183 = vmatmul.mubr.f32.gmra.mrb[0].mxu0 %v509
  %v1184 = vpop.f32.mrb[0].mxu0
  %v1185 = vpop.f32.mrb[0].mxu0
  %1186 = vmatprep.mubr.f32.mxu0 0.0
  %1187 = vmatmul.mubr.f32.gmra.mrb[0].mxu0 %v512
  %v1188 = vpop.f32.mrb[0].mxu0
  %v1189 = vpop.f32.mrb[0].mxu0
  %1190 = vmatprep.mubr.f32.mxu0 0.0
  %1191 = vmatmul.mubr.f32.gmra.mrb[0].mxu0 %v515
  %v1192 = vpop.f32.mrb[0].mxu0
  %v1193 = vadd.f32 0.0, %v1192
  %v1194 = vpop.f32.mrb[0].mxu0
  %1195 = vmatprep.mubr.f32.mxu0 0.0
  %1196 = vmatmul.mubr.f32.gmra.mrb[0].mxu0 %v518
  %v1197 = vpop.f32.mrb[0].mxu0
  %v1198 = vadd.f32 0.0, %v1197
  %v1199 = vpop.f32.mrb[0].mxu0
  %1200 = vmatprep.mubr.f32.mxu0 0.0
  %1201 = vmatmul.mubr.f32.gmra.mrb[0].mxu0 %v521
  %v1202 = vpop.f32.mrb[0].mxu0
  %v1203 = vadd.f32 0.0, %v1202
  %v1204 = vpop.f32.mrb[0].mxu0
  %1205 = vmatprep.mubr.f32.mxu0 0.0
  %1206 = vmatmul.mubr.f32.gmra.mrb[0].mxu0 %v524
  %v1207 = vpop.f32.mrb[0].mxu0
  %v1208 = vadd.f32 0.0, %v1207
  %v1209 = vpop.f32.mrb[0].mxu0
  %1210 = vmatprep.mubr.f32.mxu0 0.0
  %1211 = vmatmul.mubr.f32.gmra.mrb[0].mxu0 %v527
  %v1212 = vpop.f32.mrb[0].mxu0
  %v1213 = vpop.f32.mrb[0].mxu0
  %1214 = vmatprep.mubr.f32.mxu0 0.0
  %1215 = vmatmul.mubr.f32.gmra.mrb[0].mxu0 %v871
  %v1216 = vpop.f32.mrb[0].mxu0
  %v1217 = vpop.f32.mrb[0].mxu0
  %1218 = vmatprep.mubr.f32.mxu0 0.0
  %1219 = vmatmul.mubr.f32.gmra.mrb[0].mxu0 %v1059
  %v1220 = vpop.f32.mrb[0].mxu0
  %v1221 = vadd.f32 0.0, %v1220
  %v1222 = vpop.f32.mrb[0].mxu0
  %1223 = vmatprep.mubr.f32.mxu0 0.0
  %1224 = vmatmul.mubr.f32.gmra.mrb[0].mxu0 %v1062
  %v1225 = vpop.f32.mrb[0].mxu0
  %v1226 = vadd.f32 0.0, %v1225
  %v1227 = vpop.f32.mrb[0].mxu0
  %1228 = vmatprep.mubr.f32.mxu0 0.0
  %1229 = vmatmul.mubr.f32.gmra.mrb[0].mxu0 %v1065
  %v1230 = vpop.f32.mrb[0].mxu0
  %v1231 = vadd.f32 0.0, %v1230
  %v1232 = vpop.f32.mrb[0].mxu0
  %1233 = vmatprep.mubr.f32.mxu0 0.0
  %1234 = vmatmul.mubr.f32.gmra.mrb[0].mxu0 %v1068
  %v1235 = vpop.f32.mrb[0].mxu0
  %v1236 = vadd.f32 0.0, %v1235
  %v1237 = vpop.f32.mrb[0].mxu0
  %1238 = vdwg.mxu0
  %v1239 = vadd.f32 %v1042, %v1137
  %v1240 = vadd.f32 %v1043, %v1142
  %v1241 = vadd.f32 %v1044, %v1147
  %v1242 = vadd.f32 %v1045, %v1152
  %v1243 = vadd.f32 %v1046, %v1165
  %v1244 = vadd.f32 %v1047, %v1170
  %v1245 = vadd.f32 %v1048, %v1175
  %v1246 = vadd.f32 %v1049, %v1180
  %v1247 = vadd.f32 %v1050, %v1193
  %v1248 = vadd.f32 %v1051, %v1198
  %v1249 = vadd.f32 %v1052, %v1203
  %v1250 = vadd.f32 %v1053, %v1208
  %v1251 = vadd.f32 %v1054, %v1221
  %v1252 = vadd.f32 %v1055, %v1226
  %v1253 = vadd.f32 %v1056, %v1231
  %v1254 = vadd.f32 %v1057, %v1236
  %v1256 = vsel %vm462, %v436, 0
  %1258 = vmatprep.subr.mxu0 0.0
  %1259 = vmatpush1.msra.mxu0 %v452
  %1260 = vmatprep.subr.mxu0 0.0
  %1261 = vmatpush1.msra.mxu0 %v453
  %1262 = vmatprep.subr.mxu0 0.0
  %1263 = vmatpush1.msra.mxu0 0.0
  %1264 = vmatprep.subr.mxu0 0.0
  %1265 = vmatpush1.msra.mxu0 0.0
  %1266 = vmatprep.subr.mxu0 0.0
  %1267 = vmatpush1.msra.mxu0 0.0
  %1268 = vmatprep.subr.mxu0 0.0
  %1269 = vmatpush1.msra.mxu0 0.0
  %1270 = vmatprep.subr.mxu0 0.0
  %1271 = vmatpush1.msra.mxu0 0.0
  %1272 = vmatprep.subr.mxu0 0.0
  %1273 = vmatpush1.msra.mxu0 0.0
  %1274 = vmatprep.subr.mxu0 0.0
  %1275 = vmatpush1.msra.mxu0 0.0
  %1276 = vmatprep.subr.mxu0 0.0
  %1277 = vmatpush1.msra.mxu0 0.0
  %1278 = vmatprep.subr.mxu0 0.0
  %1279 = vmatpush1.msra.mxu0 0.0
  %1280 = vmatprep.subr.mxu0 0.0
  %1281 = vmatpush1.msra.mxu0 0.0
  %1282 = vmatprep.subr.mxu0 0.0
  %1283 = vmatpush1.msra.mxu0 0.0
  %1284 = vmatprep.subr.mxu0 0.0
  %1285 = vmatpush1.msra.mxu0 0.0
  %1286 = vmatprep.subr.mxu0 0.0
  %1287 = vmatpush1.msra.mxu0 0.0
  %1288 = vmatprep.subr.mxu0 0.0
  %1289 = vmatpush1.msra.mxu0 0.0
  %1290 = vmatprep.subr.mxu0 0.0
  %1291 = vmatpush1.msra.mxu0 0.0
  %1292 = vmatprep.subr.mxu0 0.0
  %1293 = vmatpush1.msra.mxu0 0.0
  %1294 = vmatprep.subr.mxu0 0.0
  %1295 = vmatpush1.msra.mxu0 0.0
  %1296 = vmatprep.subr.mxu0 0.0
  %1297 = vmatpush1.msra.mxu0 0.0
  %1298 = vmatprep.subr.mxu0 0.0
  %1299 = vmatpush1.msra.mxu0 0.0
  %1300 = vmatprep.subr.mxu0 0.0
  %1301 = vmatpush1.msra.mxu0 0.0
  %1302 = vmatprep.subr.mxu0 0.0
  %1303 = vmatpush1.msra.mxu0 0.0
  %1304 = vmatprep.subr.mxu0 0.0
  %1305 = vmatpush1.msra.mxu0 0.0
  %1306 = vmatprep.subr.mxu0 0.0
  %1307 = vmatpush1.msra.mxu0 0.0
  %1308 = vmatprep.subr.mxu0 0.0
  %1309 = vmatpush1.msra.mxu0 0.0
  %1310 = vmatprep.subr.mxu0 0.0
  %1311 = vmatpush1.msra.mxu0 0.0
  %1312 = vmatprep.subr.mxu0 0.0
  %1313 = vmatpush1.msra.mxu0 0.0
  %1314 = vmatprep.subr.mxu0 0.0
  %1315 = vmatpush1.msra.mxu0 0.0
  %1316 = vmatprep.subr.mxu0 0.0
  %1317 = vmatpush1.msra.mxu0 0.0
  %1318 = vmatprep.subr.mxu0 0.0
  %1319 = vmatpush1.msra.mxu0 0.0
  %1320 = vmatprep.subr.mxu0 0.0
  %1321 = vmatpush1.msra.mxu0 0.0
  %1322 = vmatprep.mubr.f32.mxu0 0.0
  %1323 = vmatmul.mubr.f32.gmra.mrb[0].mxu0 %v482
  %v1324 = vpop.f32.mrb[0].mxu0
  %v1325 = vadd.f32 0.0, %v1324
  %v1326 = vpop.f32.mrb[0].mxu0
  %1327 = vmatprep.mubr.f32.mxu0 0.0
  %1328 = vmatmul.mubr.f32.gmra.mrb[0].mxu0 %v485
  %v1329 = vpop.f32.mrb[0].mxu0
  %v1330 = vadd.f32 0.0, %v1329
  %v1331 = vpop.f32.mrb[0].mxu0
  %1332 = vmatprep.mubr.f32.mxu0 0.0
  %1333 = vmatmul.mubr.f32.gmra.mrb[0].mxu0 %v488
  %v1334 = vpop.f32.mrb[0].mxu0
  %v1335 = vadd.f32 0.0, %v1334
  %v1336 = vpop.f32.mrb[0].mxu0
  %1337 = vmatprep.mubr.f32.mxu0 0.0
  %1338 = vmatmul.mubr.f32.gmra.mrb[0].mxu0 %v491
  %v1339 = vpop.f32.mrb[0].mxu0
  %v1340 = vadd.f32 0.0, %v1339
  %v1341 = vpop.f32.mrb[0].mxu0
  %1342 = vmatprep.mubr.f32.mxu0 0.0
  %1343 = vmatmul.mubr.f32.gmra.mrb[0].mxu0 %v494
  %v1344 = vpop.f32.mrb[0].mxu0
  %v1345 = vpop.f32.mrb[0].mxu0
  %1346 = vmatprep.mubr.f32.mxu0 0.0
  %1347 = vmatmul.mubr.f32.gmra.mrb[0].mxu0 %v497
  %v1348 = vpop.f32.mrb[0].mxu0
  %v1349 = vpop.f32.mrb[0].mxu0
  %1350 = vmatprep.mubr.f32.mxu0 0.0
  %1351 = vmatmul.mubr.f32.gmra.mrb[0].mxu0 %v500
  %v1352 = vpop.f32.mrb[0].mxu0
  %v1353 = vadd.f32 0.0, %v1352
  %v1354 = vpop.f32.mrb[0].mxu0
  %1355 = vmatprep.mubr.f32.mxu0 0.0
  %1356 = vmatmul.mubr.f32.gmra.mrb[0].mxu0 %v503
  %v1357 = vpop.f32.mrb[0].mxu0
  %v1358 = vadd.f32 0.0, %v1357
  %v1359 = vpop.f32.mrb[0].mxu0
  %1360 = vmatprep.mubr.f32.mxu0 0.0
  %1361 = vmatmul.mubr.f32.gmra.mrb[0].mxu0 %v506
  %v1362 = vpop.f32.mrb[0].mxu0
  %v1363 = vadd.f32 0.0, %v1362
  %v1364 = vpop.f32.mrb[0].mxu0
  %1365 = vmatprep.mubr.f32.mxu0 0.0
  %1366 = vmatmul.mubr.f32.gmra.mrb[0].mxu0 %v509
  %v1367 = vpop.f32.mrb[0].mxu0
  %v1368 = vadd.f32 0.0, %v1367
  %v1369 = vpop.f32.mrb[0].mxu0
  %1370 = vmatprep.mubr.f32.mxu0 0.0
  %1371 = vmatmul.mubr.f32.gmra.mrb[0].mxu0 %v512
  %v1372 = vpop.f32.mrb[0].mxu0
  %v1373 = vpop.f32.mrb[0].mxu0
  %1374 = vmatprep.mubr.f32.mxu0 0.0
  %1375 = vmatmul.mubr.f32.gmra.mrb[0].mxu0 %v515
  %v1376 = vpop.f32.mrb[0].mxu0
  %v1377 = vpop.f32.mrb[0].mxu0
  %1378 = vmatprep.mubr.f32.mxu0 0.0
  %1379 = vmatmul.mubr.f32.gmra.mrb[0].mxu0 %v518
  %v1380 = vpop.f32.mrb[0].mxu0
  %v1381 = vadd.f32 0.0, %v1380
  %v1382 = vpop.f32.mrb[0].mxu0
  %1383 = vmatprep.mubr.f32.mxu0 0.0
  %1384 = vmatmul.mubr.f32.gmra.mrb[0].mxu0 %v521
  %v1385 = vpop.f32.mrb[0].mxu0
  %v1386 = vadd.f32 0.0, %v1385
  %v1387 = vpop.f32.mrb[0].mxu0
  %1388 = vmatprep.mubr.f32.mxu0 0.0
  %1389 = vmatmul.mubr.f32.gmra.mrb[0].mxu0 %v524
  %v1390 = vpop.f32.mrb[0].mxu0
  %v1391 = vadd.f32 0.0, %v1390
  %v1392 = vpop.f32.mrb[0].mxu0
  %1393 = vmatprep.mubr.f32.mxu0 0.0
  %1394 = vmatmul.mubr.f32.gmra.mrb[0].mxu0 %v527
  %v1395 = vpop.f32.mrb[0].mxu0
  %v1396 = vadd.f32 0.0, %v1395
  %v1397 = vpop.f32.mrb[0].mxu0
  %1398 = vmatprep.mubr.f32.mxu0 0.0
  %1399 = vmatmul.mubr.f32.gmra.mrb[0].mxu0 %v871
  %v1400 = vpop.f32.mrb[0].mxu0
  %v1401 = vpop.f32.mrb[0].mxu0
  %1402 = vmatprep.mubr.f32.mxu0 0.0
  %1403 = vmatmul.mubr.f32.gmra.mrb[0].mxu0 %v1059
  %v1404 = vpop.f32.mrb[0].mxu0
  %v1405 = vpop.f32.mrb[0].mxu0
  %1406 = vmatprep.mubr.f32.mxu0 0.0
  %1407 = vmatmul.mubr.f32.gmra.mrb[0].mxu0 %v1062
  %v1408 = vpop.f32.mrb[0].mxu0
  %v1409 = vadd.f32 0.0, %v1408
  %v1410 = vpop.f32.mrb[0].mxu0
  %1411 = vmatprep.mubr.f32.mxu0 0.0
  %1412 = vmatmul.mubr.f32.gmra.mrb[0].mxu0 %v1065
  %v1413 = vpop.f32.mrb[0].mxu0
  %v1414 = vadd.f32 0.0, %v1413
  %v1415 = vpop.f32.mrb[0].mxu0
  %1416 = vmatprep.mubr.f32.mxu0 0.0
  %1417 = vmatmul.mubr.f32.gmra.mrb[0].mxu0 %v1068
  %v1418 = vpop.f32.mrb[0].mxu0
  %v1419 = vadd.f32 0.0, %v1418
  %v1420 = vpop.f32.mrb[0].mxu0
  %1421 = vmatprep.mubr.f32.mxu0 0.0
  %1422 = vmatmul.mubr.f32.gmra.mrb[0].mxu0 %v1256
  %v1423 = vpop.f32.mrb[0].mxu0
  %v1424 = vadd.f32 0.0, %v1423
  %v1425 = vpop.f32.mrb[0].mxu0
  %1426 = vdwg.mxu0
  %v1427 = vadd.f32 %v1239, %v1325
  %v1428 = vadd.f32 %v1240, %v1330
  %v1429 = vadd.f32 %v1241, %v1335
  %v1430 = vadd.f32 %v1242, %v1340
  %v1431 = vadd.f32 %v1243, %v1353
  %v1432 = vadd.f32 %v1244, %v1358
  %v1433 = vadd.f32 %v1245, %v1363
  %v1434 = vadd.f32 %v1246, %v1368
  %v1435 = vadd.f32 %v1247, %v1381
  %v1436 = vadd.f32 %v1248, %v1386
  %v1437 = vadd.f32 %v1249, %v1391
  %v1438 = vadd.f32 %v1250, %v1396
  %v1439 = vadd.f32 %v1251, %v1409
  %v1440 = vadd.f32 %v1252, %v1414
  %v1441 = vadd.f32 %v1253, %v1419
  %v1442 = vadd.f32 %v1254, %v1424
  %v1444 = vsel %vm462, %v437, 0
  %1446 = vmatprep.subr.mxu0 0.0
  %1447 = vmatpush1.msra.mxu0 %v454
  %1448 = vmatprep.subr.mxu0 0.0
  %1449 = vmatpush1.msra.mxu0 %v455
  %1450 = vmatprep.subr.mxu0 0.0
  %1451 = vmatpush1.msra.mxu0 0.0
  %1452 = vmatprep.subr.mxu0 0.0
  %1453 = vmatpush1.msra.mxu0 0.0
  %1454 = vmatprep.subr.mxu0 0.0
  %1455 = vmatpush1.msra.mxu0 0.0
  %1456 = vmatprep.subr.mxu0 0.0
  %1457 = vmatpush1.msra.mxu0 0.0
  %1458 = vmatprep.subr.mxu0 0.0
  %1459 = vmatpush1.msra.mxu0 0.0
  %1460 = vmatprep.subr.mxu0 0.0
  %1461 = vmatpush1.msra.mxu0 0.0
  %1462 = vmatprep.subr.mxu0 0.0
  %1463 = vmatpush1.msra.mxu0 0.0
  %1464 = vmatprep.subr.mxu0 0.0
  %1465 = vmatpush1.msra.mxu0 0.0
  %1466 = vmatprep.subr.mxu0 0.0
  %1467 = vmatpush1.msra.mxu0 0.0
  %1468 = vmatprep.subr.mxu0 0.0
  %1469 = vmatpush1.msra.mxu0 0.0
  %1470 = vmatprep.subr.mxu0 0.0
  %1471 = vmatpush1.msra.mxu0 0.0
  %1472 = vmatprep.subr.mxu0 0.0
  %1473 = vmatpush1.msra.mxu0 0.0
  %1474 = vmatprep.subr.mxu0 0.0
  %1475 = vmatpush1.msra.mxu0 0.0
  %1476 = vmatprep.subr.mxu0 0.0
  %1477 = vmatpush1.msra.mxu0 0.0
  %1478 = vmatprep.subr.mxu0 0.0
  %1479 = vmatpush1.msra.mxu0 0.0
  %1480 = vmatprep.subr.mxu0 0.0
  %1481 = vmatpush1.msra.mxu0 0.0
  %1482 = vmatprep.subr.mxu0 0.0
  %1483 = vmatpush1.msra.mxu0 0.0
  %1484 = vmatprep.subr.mxu0 0.0
  %1485 = vmatpush1.msra.mxu0 0.0
  %1486 = vmatprep.subr.mxu0 0.0
  %1487 = vmatpush1.msra.mxu0 0.0
  %1488 = vmatprep.subr.mxu0 0.0
  %1489 = vmatpush1.msra.mxu0 0.0
  %1490 = vmatprep.subr.mxu0 0.0
  %1491 = vmatpush1.msra.mxu0 0.0
  %1492 = vmatprep.subr.mxu0 0.0
  %1493 = vmatpush1.msra.mxu0 0.0
  %1494 = vmatprep.subr.mxu0 0.0
  %1495 = vmatpush1.msra.mxu0 0.0
  %1496 = vmatprep.subr.mxu0 0.0
  %1497 = vmatpush1.msra.mxu0 0.0
  %1498 = vmatprep.subr.mxu0 0.0
  %1499 = vmatpush1.msra.mxu0 0.0
  %1500 = vmatprep.subr.mxu0 0.0
  %1501 = vmatpush1.msra.mxu0 0.0
  %1502 = vmatprep.subr.mxu0 0.0
  %1503 = vmatpush1.msra.mxu0 0.0
  %1504 = vmatprep.subr.mxu0 0.0
  %1505 = vmatpush1.msra.mxu0 0.0
  %1506 = vmatprep.subr.mxu0 0.0
  %1507 = vmatpush1.msra.mxu0 0.0
  %1508 = vmatprep.subr.mxu0 0.0
  %1509 = vmatpush1.msra.mxu0 0.0
  %1510 = vmatprep.mubr.f32.mxu0 0.0
  %1511 = vmatmul.mubr.f32.gmra.mrb[0].mxu0 %v485
  %v1512 = vpop.f32.mrb[0].mxu0
  %v1513 = vadd.f32 0.0, %v1512
  %v1514 = vpop.f32.mrb[0].mxu0
  %1515 = vmatprep.mubr.f32.mxu0 0.0
  %1516 = vmatmul.mubr.f32.gmra.mrb[0].mxu0 %v488
  %v1517 = vpop.f32.mrb[0].mxu0
  %v1518 = vadd.f32 0.0, %v1517
  %v1519 = vpop.f32.mrb[0].mxu0
  %1520 = vmatprep.mubr.f32.mxu0 0.0
  %1521 = vmatmul.mubr.f32.gmra.mrb[0].mxu0 %v491
  %v1522 = vpop.f32.mrb[0].mxu0
  %v1523 = vadd.f32 0.0, %v1522
  %v1524 = vpop.f32.mrb[0].mxu0
  %1525 = vmatprep.mubr.f32.mxu0 0.0
  %1526 = vmatmul.mubr.f32.gmra.mrb[0].mxu0 %v494
  %v1527 = vpop.f32.mrb[0].mxu0
  %v1528 = vadd.f32 0.0, %v1527
  %v1529 = vpop.f32.mrb[0].mxu0
  %1530 = vmatprep.mubr.f32.mxu0 0.0
  %1531 = vmatmul.mubr.f32.gmra.mrb[0].mxu0 %v497
  %v1532 = vpop.f32.mrb[0].mxu0
  %v1533 = vpop.f32.mrb[0].mxu0
  %1534 = vmatprep.mubr.f32.mxu0 0.0
  %1535 = vmatmul.mubr.f32.gmra.mrb[0].mxu0 %v500
  %v1536 = vpop.f32.mrb[0].mxu0
  %v1537 = vpop.f32.mrb[0].mxu0
  %1538 = vmatprep.mubr.f32.mxu0 0.0
  %1539 = vmatmul.mubr.f32.gmra.mrb[0].mxu0 %v503
  %v1540 = vpop.f32.mrb[0].mxu0
  %v1541 = vadd.f32 0.0, %v1540
  %v1542 = vpop.f32.mrb[0].mxu0
  %1543 = vmatprep.mubr.f32.mxu0 0.0
  %1544 = vmatmul.mubr.f32.gmra.mrb[0].mxu0 %v506
  %v1545 = vpop.f32.mrb[0].mxu0
  %v1546 = vadd.f32 0.0, %v1545
  %v1547 = vpop.f32.mrb[0].mxu0
  %1548 = vmatprep.mubr.f32.mxu0 0.0
  %1549 = vmatmul.mubr.f32.gmra.mrb[0].mxu0 %v509
  %v1550 = vpop.f32.mrb[0].mxu0
  %v1551 = vadd.f32 0.0, %v1550
  %v1552 = vpop.f32.mrb[0].mxu0
  %1553 = vmatprep.mubr.f32.mxu0 0.0
  %1554 = vmatmul.mubr.f32.gmra.mrb[0].mxu0 %v512
  %v1555 = vpop.f32.mrb[0].mxu0
  %v1556 = vadd.f32 0.0, %v1555
  %v1557 = vpop.f32.mrb[0].mxu0
  %1558 = vmatprep.mubr.f32.mxu0 0.0
  %1559 = vmatmul.mubr.f32.gmra.mrb[0].mxu0 %v515
  %v1560 = vpop.f32.mrb[0].mxu0
  %v1561 = vpop.f32.mrb[0].mxu0
  %1562 = vmatprep.mubr.f32.mxu0 0.0
  %1563 = vmatmul.mubr.f32.gmra.mrb[0].mxu0 %v518
  %v1564 = vpop.f32.mrb[0].mxu0
  %v1565 = vpop.f32.mrb[0].mxu0
  %1566 = vmatprep.mubr.f32.mxu0 0.0
  %1567 = vmatmul.mubr.f32.gmra.mrb[0].mxu0 %v521
  %v1568 = vpop.f32.mrb[0].mxu0
  %v1569 = vadd.f32 0.0, %v1568
  %v1570 = vpop.f32.mrb[0].mxu0
  %1571 = vmatprep.mubr.f32.mxu0 0.0
  %1572 = vmatmul.mubr.f32.gmra.mrb[0].mxu0 %v524
  %v1573 = vpop.f32.mrb[0].mxu0
  %v1574 = vadd.f32 0.0, %v1573
  %v1575 = vpop.f32.mrb[0].mxu0
  %1576 = vmatprep.mubr.f32.mxu0 0.0
  %1577 = vmatmul.mubr.f32.gmra.mrb[0].mxu0 %v527
  %v1578 = vpop.f32.mrb[0].mxu0
  %v1579 = vadd.f32 0.0, %v1578
  %v1580 = vpop.f32.mrb[0].mxu0
  %1581 = vmatprep.mubr.f32.mxu0 0.0
  %1582 = vmatmul.mubr.f32.gmra.mrb[0].mxu0 %v871
  %v1583 = vpop.f32.mrb[0].mxu0
  %v1584 = vadd.f32 0.0, %v1583
  %v1585 = vpop.f32.mrb[0].mxu0
  %1586 = vmatprep.mubr.f32.mxu0 0.0
  %1587 = vmatmul.mubr.f32.gmra.mrb[0].mxu0 %v1059
  %v1588 = vpop.f32.mrb[0].mxu0
  %v1589 = vpop.f32.mrb[0].mxu0
  %1590 = vmatprep.mubr.f32.mxu0 0.0
  %1591 = vmatmul.mubr.f32.gmra.mrb[0].mxu0 %v1062
  %v1592 = vpop.f32.mrb[0].mxu0
  %v1593 = vpop.f32.mrb[0].mxu0
  %1594 = vmatprep.mubr.f32.mxu0 0.0
  %1595 = vmatmul.mubr.f32.gmra.mrb[0].mxu0 %v1065
  %v1596 = vpop.f32.mrb[0].mxu0
  %v1597 = vadd.f32 0.0, %v1596
  %v1598 = vpop.f32.mrb[0].mxu0
  %1599 = vmatprep.mubr.f32.mxu0 0.0
  %1600 = vmatmul.mubr.f32.gmra.mrb[0].mxu0 %v1068
  %v1601 = vpop.f32.mrb[0].mxu0
  %v1602 = vadd.f32 0.0, %v1601
  %v1603 = vpop.f32.mrb[0].mxu0
  %1604 = vmatprep.mubr.f32.mxu0 0.0
  %1605 = vmatmul.mubr.f32.gmra.mrb[0].mxu0 %v1256
  %v1606 = vpop.f32.mrb[0].mxu0
  %v1607 = vadd.f32 0.0, %v1606
  %v1608 = vpop.f32.mrb[0].mxu0
  %1609 = vmatprep.mubr.f32.mxu0 0.0
  %1610 = vmatmul.mubr.f32.gmra.mrb[0].mxu0 %v1444
  %v1611 = vpop.f32.mrb[0].mxu0
  %v1612 = vadd.f32 0.0, %v1611
  %v1613 = vpop.f32.mrb[0].mxu0
  %1614 = vdwg.mxu0
  %v1615 = vadd.f32 %v1427, %v1513
  %v1616 = vadd.f32 %v1428, %v1518
  %v1617 = vadd.f32 %v1429, %v1523
  %v1618 = vadd.f32 %v1430, %v1528
  %v1619 = vadd.f32 %v1431, %v1541
  %v1620 = vadd.f32 %v1432, %v1546
  %v1621 = vadd.f32 %v1433, %v1551
  %v1622 = vadd.f32 %v1434, %v1556
  %v1623 = vadd.f32 %v1435, %v1569
  %v1624 = vadd.f32 %v1436, %v1574
  %v1625 = vadd.f32 %v1437, %v1579
  %v1626 = vadd.f32 %v1438, %v1584
  %v1627 = vadd.f32 %v1439, %v1597
  %v1628 = vadd.f32 %v1440, %v1602
  %v1629 = vadd.f32 %v1441, %v1607
  %v1630 = vadd.f32 %v1442, %v1612
  %v1632 = vsel %vm462, %v438, 0
  %v1635 = vsel %vm462, %v439, 0
  %v1638 = vsel %vm462, %v440, 0
  %v1641 = vsel %vm462, %v441, 0
  %1643 = vmatprep.subr.mxu0 0.0
  %1644 = vmatpush1.msra.mxu0 %v456
  %1645 = vmatprep.subr.mxu0 0.0
  %1646 = vmatpush1.msra.mxu0 %v457
  %1647 = vmatprep.subr.mxu0 0.0
  %1648 = vmatpush1.msra.mxu0 0.0
  %1649 = vmatprep.subr.mxu0 0.0
  %1650 = vmatpush1.msra.mxu0 0.0
  %1651 = vmatprep.subr.mxu0 0.0
  %1652 = vmatpush1.msra.mxu0 0.0
  %1653 = vmatprep.subr.mxu0 0.0
  %1654 = vmatpush1.msra.mxu0 0.0
  %1655 = vmatprep.subr.mxu0 0.0
  %1656 = vmatpush1.msra.mxu0 0.0
  %1657 = vmatprep.subr.mxu0 0.0
  %1658 = vmatpush1.msra.mxu0 0.0
  %1659 = vmatprep.subr.mxu0 0.0
  %1660 = vmatpush1.msra.mxu0 0.0
  %1661 = vmatprep.subr.mxu0 0.0
  %1662 = vmatpush1.msra.mxu0 0.0
  %1663 = vmatprep.subr.mxu0 0.0
  %1664 = vmatpush1.msra.mxu0 0.0
  %1665 = vmatprep.subr.mxu0 0.0
  %1666 = vmatpush1.msra.mxu0 0.0
  %1667 = vmatprep.subr.mxu0 0.0
  %1668 = vmatpush1.msra.mxu0 0.0
  %1669 = vmatprep.subr.mxu0 0.0
  %1670 = vmatpush1.msra.mxu0 0.0
  %1671 = vmatprep.subr.mxu0 0.0
  %1672 = vmatpush1.msra.mxu0 0.0
  %1673 = vmatprep.subr.mxu0 0.0
  %1674 = vmatpush1.msra.mxu0 0.0
  %1675 = vmatprep.subr.mxu0 0.0
  %1676 = vmatpush1.msra.mxu0 0.0
  %1677 = vmatprep.subr.mxu0 0.0
  %1678 = vmatpush1.msra.mxu0 0.0
  %1679 = vmatprep.subr.mxu0 0.0
  %1680 = vmatpush1.msra.mxu0 0.0
  %1681 = vmatprep.subr.mxu0 0.0
  %1682 = vmatpush1.msra.mxu0 0.0
  %1683 = vmatprep.subr.mxu0 0.0
  %1684 = vmatpush1.msra.mxu0 0.0
  %1685 = vmatprep.subr.mxu0 0.0
  %1686 = vmatpush1.msra.mxu0 0.0
  %1687 = vmatprep.subr.mxu0 0.0
  %1688 = vmatpush1.msra.mxu0 0.0
  %1689 = vmatprep.subr.mxu0 0.0
  %1690 = vmatpush1.msra.mxu0 0.0
  %1691 = vmatprep.subr.mxu0 0.0
  %1692 = vmatpush1.msra.mxu0 0.0
  %1693 = vmatprep.subr.mxu0 0.0
  %1694 = vmatpush1.msra.mxu0 0.0
  %1695 = vmatprep.subr.mxu0 0.0
  %1696 = vmatpush1.msra.mxu0 0.0
  %1697 = vmatprep.subr.mxu0 0.0
  %1698 = vmatpush1.msra.mxu0 0.0
  %1699 = vmatprep.subr.mxu0 0.0
  %1700 = vmatpush1.msra.mxu0 0.0
  %1701 = vmatprep.subr.mxu0 0.0
  %1702 = vmatpush1.msra.mxu0 0.0
  %1703 = vmatprep.subr.mxu0 0.0
  %1704 = vmatpush1.msra.mxu0 0.0
  %1705 = vmatprep.subr.mxu0 0.0
  %1706 = vmatpush1.msra.mxu0 0.0
  %1707 = vmatprep.mubr.f32.mxu0 0.0
  %1708 = vmatmul.mubr.f32.gmra.mrb[0].mxu0 %v497
  %v1709 = vpop.f32.mrb[0].mxu0
  %v1710 = vadd.f32 0.0, %v1709
  %v1711 = vpop.f32.mrb[0].mxu0
  %1712 = vmatprep.mubr.f32.mxu0 0.0
  %1713 = vmatmul.mubr.f32.gmra.mrb[0].mxu0 %v500
  %v1714 = vpop.f32.mrb[0].mxu0
  %v1715 = vadd.f32 0.0, %v1714
  %v1716 = vpop.f32.mrb[0].mxu0
  %1717 = vmatprep.mubr.f32.mxu0 0.0
  %1718 = vmatmul.mubr.f32.gmra.mrb[0].mxu0 %v503
  %v1719 = vpop.f32.mrb[0].mxu0
  %v1720 = vadd.f32 0.0, %v1719
  %v1721 = vpop.f32.mrb[0].mxu0
  %1722 = vmatprep.mubr.f32.mxu0 0.0
  %1723 = vmatmul.mubr.f32.gmra.mrb[0].mxu0 %v506
  %v1724 = vpop.f32.mrb[0].mxu0
  %v1725 = vadd.f32 0.0, %v1724
  %v1726 = vpop.f32.mrb[0].mxu0
  %1727 = vmatprep.mubr.f32.mxu0 0.0
  %1728 = vmatmul.mubr.f32.gmra.mrb[0].mxu0 %v509
  %v1729 = vpop.f32.mrb[0].mxu0
  %v1730 = vpop.f32.mrb[0].mxu0
  %1731 = vmatprep.mubr.f32.mxu0 0.0
  %1732 = vmatmul.mubr.f32.gmra.mrb[0].mxu0 %v512
  %v1733 = vpop.f32.mrb[0].mxu0
  %v1734 = vpop.f32.mrb[0].mxu0
  %1735 = vmatprep.mubr.f32.mxu0 0.0
  %1736 = vmatmul.mubr.f32.gmra.mrb[0].mxu0 %v515
  %v1737 = vpop.f32.mrb[0].mxu0
  %v1738 = vadd.f32 0.0, %v1737
  %v1739 = vpop.f32.mrb[0].mxu0
  %1740 = vmatprep.mubr.f32.mxu0 0.0
  %1741 = vmatmul.mubr.f32.gmra.mrb[0].mxu0 %v518
  %v1742 = vpop.f32.mrb[0].mxu0
  %v1743 = vadd.f32 0.0, %v1742
  %v1744 = vpop.f32.mrb[0].mxu0
  %1745 = vmatprep.mubr.f32.mxu0 0.0
  %1746 = vmatmul.mubr.f32.gmra.mrb[0].mxu0 %v521
  %v1747 = vpop.f32.mrb[0].mxu0
  %v1748 = vadd.f32 0.0, %v1747
  %v1749 = vpop.f32.mrb[0].mxu0
  %1750 = vmatprep.mubr.f32.mxu0 0.0
  %1751 = vmatmul.mubr.f32.gmra.mrb[0].mxu0 %v524
  %v1752 = vpop.f32.mrb[0].mxu0
  %v1753 = vadd.f32 0.0, %v1752
  %v1754 = vpop.f32.mrb[0].mxu0
  %1755 = vmatprep.mubr.f32.mxu0 0.0
  %1756 = vmatmul.mubr.f32.gmra.mrb[0].mxu0 %v527
  %v1757 = vpop.f32.mrb[0].mxu0
  %v1758 = vpop.f32.mrb[0].mxu0
  %1759 = vmatprep.mubr.f32.mxu0 0.0
  %1760 = vmatmul.mubr.f32.gmra.mrb[0].mxu0 %v871
  %v1761 = vpop.f32.mrb[0].mxu0
  %v1762 = vpop.f32.mrb[0].mxu0
  %1763 = vmatprep.mubr.f32.mxu0 0.0
  %1764 = vmatmul.mubr.f32.gmra.mrb[0].mxu0 %v1059
  %v1765 = vpop.f32.mrb[0].mxu0
  %v1766 = vadd.f32 0.0, %v1765
  %v1767 = vpop.f32.mrb[0].mxu0
  %1768 = vmatprep.mubr.f32.mxu0 0.0
  %1769 = vmatmul.mubr.f32.gmra.mrb[0].mxu0 %v1062
  %v1770 = vpop.f32.mrb[0].mxu0
  %v1771 = vadd.f32 0.0, %v1770
  %v1772 = vpop.f32.mrb[0].mxu0
  %1773 = vmatprep.mubr.f32.mxu0 0.0
  %1774 = vmatmul.mubr.f32.gmra.mrb[0].mxu0 %v1065
  %v1775 = vpop.f32.mrb[0].mxu0
  %v1776 = vadd.f32 0.0, %v1775
  %v1777 = vpop.f32.mrb[0].mxu0
  %1778 = vmatprep.mubr.f32.mxu0 0.0
  %1779 = vmatmul.mubr.f32.gmra.mrb[0].mxu0 %v1068
  %v1780 = vpop.f32.mrb[0].mxu0
  %v1781 = vadd.f32 0.0, %v1780
  %v1782 = vpop.f32.mrb[0].mxu0
  %1783 = vmatprep.mubr.f32.mxu0 0.0
  %1784 = vmatmul.mubr.f32.gmra.mrb[0].mxu0 %v1256
  %v1785 = vpop.f32.mrb[0].mxu0
  %v1786 = vpop.f32.mrb[0].mxu0
  %1787 = vmatprep.mubr.f32.mxu0 0.0
  %1788 = vmatmul.mubr.f32.gmra.mrb[0].mxu0 %v1444
  %v1789 = vpop.f32.mrb[0].mxu0
  %v1790 = vpop.f32.mrb[0].mxu0
  %1791 = vmatprep.mubr.f32.mxu0 0.0
  %1792 = vmatmul.mubr.f32.gmra.mrb[0].mxu0 %v1632
  %v1793 = vpop.f32.mrb[0].mxu0
  %v1794 = vadd.f32 0.0, %v1793
  %v1795 = vpop.f32.mrb[0].mxu0
  %1796 = vmatprep.mubr.f32.mxu0 0.0
  %1797 = vmatmul.mubr.f32.gmra.mrb[0].mxu0 %v1635
  %v1798 = vpop.f32.mrb[0].mxu0
  %v1799 = vadd.f32 0.0, %v1798
  %v1800 = vpop.f32.mrb[0].mxu0
  %1801 = vmatprep.mubr.f32.mxu0 0.0
  %1802 = vmatmul.mubr.f32.gmra.mrb[0].mxu0 %v1638
  %v1803 = vpop.f32.mrb[0].mxu0
  %v1804 = vadd.f32 0.0, %v1803
  %v1805 = vpop.f32.mrb[0].mxu0
  %1806 = vmatprep.mubr.f32.mxu0 0.0
  %1807 = vmatmul.mubr.f32.gmra.mrb[0].mxu0 %v1641
  %v1808 = vpop.f32.mrb[0].mxu0
  %v1809 = vadd.f32 0.0, %v1808
  %v1810 = vpop.f32.mrb[0].mxu0
  %1811 = vdwg.mxu0
  %v1812 = vadd.f32 %v1615, %v1710
  %v1813 = vadd.f32 %v1616, %v1715
  %v1814 = vadd.f32 %v1617, %v1720
  %v1815 = vadd.f32 %v1618, %v1725
  %v1816 = vadd.f32 %v1619, %v1738
  %v1817 = vadd.f32 %v1620, %v1743
  %v1818 = vadd.f32 %v1621, %v1748
  %v1819 = vadd.f32 %v1622, %v1753
  %v1820 = vadd.f32 %v1623, %v1766
  %v1821 = vadd.f32 %v1624, %v1771
  %v1822 = vadd.f32 %v1625, %v1776
  %v1823 = vadd.f32 %v1626, %v1781
  %v1824 = vadd.f32 %v1627, %v1794
  %v1825 = vadd.f32 %v1628, %v1799
  %v1826 = vadd.f32 %v1629, %v1804
  %v1827 = vadd.f32 %v1630, %v1809
  %v1829 = vsel %vm462, %v442, 0
  %1831 = vmatprep.subr.mxu0 0.0
  %1832 = vmatpush1.msra.mxu0 %v458
  %1833 = vmatprep.subr.mxu0 0.0
  %1834 = vmatpush1.msra.mxu0 %v459
  %1835 = vmatprep.subr.mxu0 0.0
  %1836 = vmatpush1.msra.mxu0 0.0
  %1837 = vmatprep.subr.mxu0 0.0
  %1838 = vmatpush1.msra.mxu0 0.0
  %1839 = vmatprep.subr.mxu0 0.0
  %1840 = vmatpush1.msra.mxu0 0.0
  %1841 = vmatprep.subr.mxu0 0.0
  %1842 = vmatpush1.msra.mxu0 0.0
  %1843 = vmatprep.subr.mxu0 0.0
  %1844 = vmatpush1.msra.mxu0 0.0
  %1845 = vmatprep.subr.mxu0 0.0
  %1846 = vmatpush1.msra.mxu0 0.0
  %1847 = vmatprep.subr.mxu0 0.0
  %1848 = vmatpush1.msra.mxu0 0.0
  %1849 = vmatprep.subr.mxu0 0.0
  %1850 = vmatpush1.msra.mxu0 0.0
  %1851 = vmatprep.subr.mxu0 0.0
  %1852 = vmatpush1.msra.mxu0 0.0
  %1853 = vmatprep.subr.mxu0 0.0
  %1854 = vmatpush1.msra.mxu0 0.0
  %1855 = vmatprep.subr.mxu0 0.0
  %1856 = vmatpush1.msra.mxu0 0.0
  %1857 = vmatprep.subr.mxu0 0.0
  %1858 = vmatpush1.msra.mxu0 0.0
  %1859 = vmatprep.subr.mxu0 0.0
  %1860 = vmatpush1.msra.mxu0 0.0
  %1861 = vmatprep.subr.mxu0 0.0
  %1862 = vmatpush1.msra.mxu0 0.0
  %1863 = vmatprep.subr.mxu0 0.0
  %1864 = vmatpush1.msra.mxu0 0.0
  %1865 = vmatprep.subr.mxu0 0.0
  %1866 = vmatpush1.msra.mxu0 0.0
  %1867 = vmatprep.subr.mxu0 0.0
  %1868 = vmatpush1.msra.mxu0 0.0
  %1869 = vmatprep.subr.mxu0 0.0
  %1870 = vmatpush1.msra.mxu0 0.0
  %1871 = vmatprep.subr.mxu0 0.0
  %1872 = vmatpush1.msra.mxu0 0.0
  %1873 = vmatprep.subr.mxu0 0.0
  %1874 = vmatpush1.msra.mxu0 0.0
  %1875 = vmatprep.subr.mxu0 0.0
  %1876 = vmatpush1.msra.mxu0 0.0
  %1877 = vmatprep.subr.mxu0 0.0
  %1878 = vmatpush1.msra.mxu0 0.0
  %1879 = vmatprep.subr.mxu0 0.0
  %1880 = vmatpush1.msra.mxu0 0.0
  %1881 = vmatprep.subr.mxu0 0.0
  %1882 = vmatpush1.msra.mxu0 0.0
  %1883 = vmatprep.subr.mxu0 0.0
  %1884 = vmatpush1.msra.mxu0 0.0
  %1885 = vmatprep.subr.mxu0 0.0
  %1886 = vmatpush1.msra.mxu0 0.0
  %1887 = vmatprep.subr.mxu0 0.0
  %1888 = vmatpush1.msra.mxu0 0.0
  %1889 = vmatprep.subr.mxu0 0.0
  %1890 = vmatpush1.msra.mxu0 0.0
  %1891 = vmatprep.subr.mxu0 0.0
  %1892 = vmatpush1.msra.mxu0 0.0
  %1893 = vmatprep.subr.mxu0 0.0
  %1894 = vmatpush1.msra.mxu0 0.0
  %1895 = vmatprep.mubr.f32.mxu0 0.0
  %1896 = vmatmul.mubr.f32.gmra.mrb[0].mxu0 %v500
  %v1897 = vpop.f32.mrb[0].mxu0
  %v1898 = vadd.f32 0.0, %v1897
  %v1899 = vpop.f32.mrb[0].mxu0
  %1900 = vmatprep.mubr.f32.mxu0 0.0
  %1901 = vmatmul.mubr.f32.gmra.mrb[0].mxu0 %v503
  %v1902 = vpop.f32.mrb[0].mxu0
  %v1903 = vadd.f32 0.0, %v1902
  %v1904 = vpop.f32.mrb[0].mxu0
  %1905 = vmatprep.mubr.f32.mxu0 0.0
  %1906 = vmatmul.mubr.f32.gmra.mrb[0].mxu0 %v506
  %v1907 = vpop.f32.mrb[0].mxu0
  %v1908 = vadd.f32 0.0, %v1907
  %v1909 = vpop.f32.mrb[0].mxu0
  %1910 = vmatprep.mubr.f32.mxu0 0.0
  %1911 = vmatmul.mubr.f32.gmra.mrb[0].mxu0 %v509
  %v1912 = vpop.f32.mrb[0].mxu0
  %v1913 = vadd.f32 0.0, %v1912
  %v1914 = vpop.f32.mrb[0].mxu0
  %1915 = vmatprep.mubr.f32.mxu0 0.0
  %1916 = vmatmul.mubr.f32.gmra.mrb[0].mxu0 %v512
  %v1917 = vpop.f32.mrb[0].mxu0
  %v1918 = vpop.f32.mrb[0].mxu0
  %1919 = vmatprep.mubr.f32.mxu0 0.0
  %1920 = vmatmul.mubr.f32.gmra.mrb[0].mxu0 %v515
  %v1921 = vpop.f32.mrb[0].mxu0
  %v1922 = vpop.f32.mrb[0].mxu0
  %1923 = vmatprep.mubr.f32.mxu0 0.0
  %1924 = vmatmul.mubr.f32.gmra.mrb[0].mxu0 %v518
  %v1925 = vpop.f32.mrb[0].mxu0
  %v1926 = vadd.f32 0.0, %v1925
  %v1927 = vpop.f32.mrb[0].mxu0
  %1928 = vmatprep.mubr.f32.mxu0 0.0
  %1929 = vmatmul.mubr.f32.gmra.mrb[0].mxu0 %v521
  %v1930 = vpop.f32.mrb[0].mxu0
  %v1931 = vadd.f32 0.0, %v1930
  %v1932 = vpop.f32.mrb[0].mxu0
  %1933 = vmatprep.mubr.f32.mxu0 0.0
  %1934 = vmatmul.mubr.f32.gmra.mrb[0].mxu0 %v524
  %v1935 = vpop.f32.mrb[0].mxu0
  %v1936 = vadd.f32 0.0, %v1935
  %v1937 = vpop.f32.mrb[0].mxu0
  %1938 = vmatprep.mubr.f32.mxu0 0.0
  %1939 = vmatmul.mubr.f32.gmra.mrb[0].mxu0 %v527
  %v1940 = vpop.f32.mrb[0].mxu0
  %v1941 = vadd.f32 0.0, %v1940
  %v1942 = vpop.f32.mrb[0].mxu0
  %1943 = vmatprep.mubr.f32.mxu0 0.0
  %1944 = vmatmul.mubr.f32.gmra.mrb[0].mxu0 %v871
  %v1945 = vpop.f32.mrb[0].mxu0
  %v1946 = vpop.f32.mrb[0].mxu0
  %1947 = vmatprep.mubr.f32.mxu0 0.0
  %1948 = vmatmul.mubr.f32.gmra.mrb[0].mxu0 %v1059
  %v1949 = vpop.f32.mrb[0].mxu0
  %v1950 = vpop.f32.mrb[0].mxu0
  %1951 = vmatprep.mubr.f32.mxu0 0.0
  %1952 = vmatmul.mubr.f32.gmra.mrb[0].mxu0 %v1062
  %v1953 = vpop.f32.mrb[0].mxu0
  %v1954 = vadd.f32 0.0, %v1953
  %v1955 = vpop.f32.mrb[0].mxu0
  %1956 = vmatprep.mubr.f32.mxu0 0.0
  %1957 = vmatmul.mubr.f32.gmra.mrb[0].mxu0 %v1065
  %v1958 = vpop.f32.mrb[0].mxu0
  %v1959 = vadd.f32 0.0, %v1958
  %v1960 = vpop.f32.mrb[0].mxu0
  %1961 = vmatprep.mubr.f32.mxu0 0.0
  %1962 = vmatmul.mubr.f32.gmra.mrb[0].mxu0 %v1068
  %v1963 = vpop.f32.mrb[0].mxu0
  %v1964 = vadd.f32 0.0, %v1963
  %v1965 = vpop.f32.mrb[0].mxu0
  %1966 = vmatprep.mubr.f32.mxu0 0.0
  %1967 = vmatmul.mubr.f32.gmra.mrb[0].mxu0 %v1256
  %v1968 = vpop.f32.mrb[0].mxu0
  %v1969 = vadd.f32 0.0, %v1968
  %v1970 = vpop.f32.mrb[0].mxu0
  %1971 = vmatprep.mubr.f32.mxu0 0.0
  %1972 = vmatmul.mubr.f32.gmra.mrb[0].mxu0 %v1444
  %v1973 = vpop.f32.mrb[0].mxu0
  %v1974 = vpop.f32.mrb[0].mxu0
  %1975 = vmatprep.mubr.f32.mxu0 0.0
  %1976 = vmatmul.mubr.f32.gmra.mrb[0].mxu0 %v1632
  %v1977 = vpop.f32.mrb[0].mxu0
  %v1978 = vpop.f32.mrb[0].mxu0
  %1979 = vmatprep.mubr.f32.mxu0 0.0
  %1980 = vmatmul.mubr.f32.gmra.mrb[0].mxu0 %v1635
  %v1981 = vpop.f32.mrb[0].mxu0
  %v1982 = vadd.f32 0.0, %v1981
  %v1983 = vpop.f32.mrb[0].mxu0
  %1984 = vmatprep.mubr.f32.mxu0 0.0
  %1985 = vmatmul.mubr.f32.gmra.mrb[0].mxu0 %v1638
  %v1986 = vpop.f32.mrb[0].mxu0
  %v1987 = vadd.f32 0.0, %v1986
  %v1988 = vpop.f32.mrb[0].mxu0
  %1989 = vmatprep.mubr.f32.mxu0 0.0
  %1990 = vmatmul.mubr.f32.gmra.mrb[0].mxu0 %v1641
  %v1991 = vpop.f32.mrb[0].mxu0
  %v1992 = vadd.f32 0.0, %v1991
  %v1993 = vpop.f32.mrb[0].mxu0
  %1994 = vmatprep.mubr.f32.mxu0 0.0
  %1995 = vmatmul.mubr.f32.gmra.mrb[0].mxu0 %v1829
  %v1996 = vpop.f32.mrb[0].mxu0
  %v1997 = vadd.f32 0.0, %v1996
  %v1998 = vpop.f32.mrb[0].mxu0
  %1999 = vdwg.mxu0
  %v2000 = vadd.f32 %v1812, %v1898
  %v2001 = vadd.f32 %v1813, %v1903
  %v2002 = vadd.f32 %v1814, %v1908
  %v2003 = vadd.f32 %v1815, %v1913
  %v2004 = vadd.f32 %v1816, %v1926
  %v2005 = vadd.f32 %v1817, %v1931
  %v2006 = vadd.f32 %v1818, %v1936
  %v2007 = vadd.f32 %v1819, %v1941
  %v2008 = vadd.f32 %v1820, %v1954
  %v2009 = vadd.f32 %v1821, %v1959
  %v2010 = vadd.f32 %v1822, %v1964
  %v2011 = vadd.f32 %v1823, %v1969
  %v2012 = vadd.f32 %v1824, %v1982
  %v2013 = vadd.f32 %v1825, %v1987
  %v2014 = vadd.f32 %v1826, %v1992
  %v2015 = vadd.f32 %v1827, %v1997
  %v2017 = vsel %vm462, %v443, 0
  %2019 = vmatprep.subr.mxu0 0.0
  %2020 = vmatpush1.msra.mxu0 %v460
  %2021 = vmatprep.subr.mxu0 0.0
  %2022 = vmatpush1.msra.mxu0 %v461
  %2023 = vmatprep.subr.mxu0 0.0
  %2024 = vmatpush1.msra.mxu0 0.0
  %2025 = vmatprep.subr.mxu0 0.0
  %2026 = vmatpush1.msra.mxu0 0.0
  %2027 = vmatprep.subr.mxu0 0.0
  %2028 = vmatpush1.msra.mxu0 0.0
  %2029 = vmatprep.subr.mxu0 0.0
  %2030 = vmatpush1.msra.mxu0 0.0
  %2031 = vmatprep.subr.mxu0 0.0
  %2032 = vmatpush1.msra.mxu0 0.0
  %2033 = vmatprep.subr.mxu0 0.0
  %2034 = vmatpush1.msra.mxu0 0.0
  %2035 = vmatprep.subr.mxu0 0.0
  %2036 = vmatpush1.msra.mxu0 0.0
  %2037 = vmatprep.subr.mxu0 0.0
  %2038 = vmatpush1.msra.mxu0 0.0
  %2039 = vmatprep.subr.mxu0 0.0
  %2040 = vmatpush1.msra.mxu0 0.0
  %2041 = vmatprep.subr.mxu0 0.0
  %2042 = vmatpush1.msra.mxu0 0.0
  %2043 = vmatprep.subr.mxu0 0.0
  %2044 = vmatpush1.msra.mxu0 0.0
  %2045 = vmatprep.subr.mxu0 0.0
  %2046 = vmatpush1.msra.mxu0 0.0
  %2047 = vmatprep.subr.mxu0 0.0
  %2048 = vmatpush1.msra.mxu0 0.0
  %2049 = vmatprep.subr.mxu0 0.0
  %2050 = vmatpush1.msra.mxu0 0.0
  %2051 = vmatprep.subr.mxu0 0.0
  %2052 = vmatpush1.msra.mxu0 0.0
  %2053 = vmatprep.subr.mxu0 0.0
  %2054 = vmatpush1.msra.mxu0 0.0
  %2055 = vmatprep.subr.mxu0 0.0
  %2056 = vmatpush1.msra.mxu0 0.0
  %2057 = vmatprep.subr.mxu0 0.0
  %2058 = vmatpush1.msra.mxu0 0.0
  %2059 = vmatprep.subr.mxu0 0.0
  %2060 = vmatpush1.msra.mxu0 0.0
  %2061 = vmatprep.subr.mxu0 0.0
  %2062 = vmatpush1.msra.mxu0 0.0
  %2063 = vmatprep.subr.mxu0 0.0
  %2064 = vmatpush1.msra.mxu0 0.0
  %2065 = vmatprep.subr.mxu0 0.0
  %2066 = vmatpush1.msra.mxu0 0.0
  %2067 = vmatprep.subr.mxu0 0.0
  %2068 = vmatpush1.msra.mxu0 0.0
  %2069 = vmatprep.subr.mxu0 0.0
  %2070 = vmatpush1.msra.mxu0 0.0
  %2071 = vmatprep.subr.mxu0 0.0
  %2072 = vmatpush1.msra.mxu0 0.0
  %2073 = vmatprep.subr.mxu0 0.0
  %2074 = vmatpush1.msra.mxu0 0.0
  %2075 = vmatprep.subr.mxu0 0.0
  %2076 = vmatpush1.msra.mxu0 0.0
  %2077 = vmatprep.subr.mxu0 0.0
  %2078 = vmatpush1.msra.mxu0 0.0
  %2079 = vmatprep.subr.mxu0 0.0
  %2080 = vmatpush1.msra.mxu0 0.0
  %2081 = vmatprep.subr.mxu0 0.0
  %2082 = vmatpush1.msra.mxu0 0.0
  %2083 = vmatprep.mubr.f32.mxu0 0.0
  %2084 = vmatmul.mubr.f32.gmra.mrb[0].mxu0 %v503
  %v2085 = vpop.f32.mrb[0].mxu0
  %v2086 = vadd.f32 0.0, %v2085
  %v2087 = vpop.f32.mrb[0].mxu0
  %2088 = vmatprep.mubr.f32.mxu0 0.0
  %2089 = vmatmul.mubr.f32.gmra.mrb[0].mxu0 %v506
  %v2090 = vpop.f32.mrb[0].mxu0
  %v2091 = vadd.f32 0.0, %v2090
  %v2092 = vpop.f32.mrb[0].mxu0
  %2093 = vmatprep.mubr.f32.mxu0 0.0
  %2094 = vmatmul.mubr.f32.gmra.mrb[0].mxu0 %v509
  %v2095 = vpop.f32.mrb[0].mxu0
  %v2096 = vadd.f32 0.0, %v2095
  %v2097 = vpop.f32.mrb[0].mxu0
  %2098 = vmatprep.mubr.f32.mxu0 0.0
  %2099 = vmatmul.mubr.f32.gmra.mrb[0].mxu0 %v512
  %v2100 = vpop.f32.mrb[0].mxu0
  %v2101 = vadd.f32 0.0, %v2100
  %v2102 = vpop.f32.mrb[0].mxu0
  %2103 = vmatprep.mubr.f32.mxu0 0.0
  %2104 = vmatmul.mubr.f32.gmra.mrb[0].mxu0 %v515
  %v2105 = vpop.f32.mrb[0].mxu0
  %v2106 = vpop.f32.mrb[0].mxu0
  %2107 = vmatprep.mubr.f32.mxu0 0.0
  %2108 = vmatmul.mubr.f32.gmra.mrb[0].mxu0 %v518
  %v2109 = vpop.f32.mrb[0].mxu0
  %v2110 = vpop.f32.mrb[0].mxu0
  %2111 = vmatprep.mubr.f32.mxu0 0.0
  %2112 = vmatmul.mubr.f32.gmra.mrb[0].mxu0 %v521
  %v2113 = vpop.f32.mrb[0].mxu0
  %v2114 = vadd.f32 0.0, %v2113
  %v2115 = vpop.f32.mrb[0].mxu0
  %2116 = vmatprep.mubr.f32.mxu0 0.0
  %2117 = vmatmul.mubr.f32.gmra.mrb[0].mxu0 %v524
  %v2118 = vpop.f32.mrb[0].mxu0
  %v2119 = vadd.f32 0.0, %v2118
  %v2120 = vpop.f32.mrb[0].mxu0
  %2121 = vmatprep.mubr.f32.mxu0 0.0
  %2122 = vmatmul.mubr.f32.gmra.mrb[0].mxu0 %v527
  %v2123 = vpop.f32.mrb[0].mxu0
  %v2124 = vadd.f32 0.0, %v2123
  %v2125 = vpop.f32.mrb[0].mxu0
  %2126 = vmatprep.mubr.f32.mxu0 0.0
  %2127 = vmatmul.mubr.f32.gmra.mrb[0].mxu0 %v871
  %v2128 = vpop.f32.mrb[0].mxu0
  %v2129 = vadd.f32 0.0, %v2128
  %v2130 = vpop.f32.mrb[0].mxu0
  %2131 = vmatprep.mubr.f32.mxu0 0.0
  %2132 = vmatmul.mubr.f32.gmra.mrb[0].mxu0 %v1059
  %v2133 = vpop.f32.mrb[0].mxu0
  %v2134 = vpop.f32.mrb[0].mxu0
  %2135 = vmatprep.mubr.f32.mxu0 0.0
  %2136 = vmatmul.mubr.f32.gmra.mrb[0].mxu0 %v1062
  %v2137 = vpop.f32.mrb[0].mxu0
  %v2138 = vpop.f32.mrb[0].mxu0
  %2139 = vmatprep.mubr.f32.mxu0 0.0
  %2140 = vmatmul.mubr.f32.gmra.mrb[0].mxu0 %v1065
  %v2141 = vpop.f32.mrb[0].mxu0
  %v2142 = vadd.f32 0.0, %v2141
  %v2143 = vpop.f32.mrb[0].mxu0
  %2144 = vmatprep.mubr.f32.mxu0 0.0
  %2145 = vmatmul.mubr.f32.gmra.mrb[0].mxu0 %v1068
  %v2146 = vpop.f32.mrb[0].mxu0
  %v2147 = vadd.f32 0.0, %v2146
  %v2148 = vpop.f32.mrb[0].mxu0
  %2149 = vmatprep.mubr.f32.mxu0 0.0
  %2150 = vmatmul.mubr.f32.gmra.mrb[0].mxu0 %v1256
  %v2151 = vpop.f32.mrb[0].mxu0
  %v2152 = vadd.f32 0.0, %v2151
  %v2153 = vpop.f32.mrb[0].mxu0
  %2154 = vmatprep.mubr.f32.mxu0 0.0
  %2155 = vmatmul.mubr.f32.gmra.mrb[0].mxu0 %v1444
  %v2156 = vpop.f32.mrb[0].mxu0
  %v2157 = vadd.f32 0.0, %v2156
  %v2158 = vpop.f32.mrb[0].mxu0
  %2159 = vmatprep.mubr.f32.mxu0 0.0
  %2160 = vmatmul.mubr.f32.gmra.mrb[0].mxu0 %v1632
  %v2161 = vpop.f32.mrb[0].mxu0
  %v2162 = vpop.f32.mrb[0].mxu0
  %2163 = vmatprep.mubr.f32.mxu0 0.0
  %2164 = vmatmul.mubr.f32.gmra.mrb[0].mxu0 %v1635
  %v2165 = vpop.f32.mrb[0].mxu0
  %v2166 = vpop.f32.mrb[0].mxu0
  %2167 = vmatprep.mubr.f32.mxu0 0.0
  %2168 = vmatmul.mubr.f32.gmra.mrb[0].mxu0 %v1638
  %v2169 = vpop.f32.mrb[0].mxu0
  %v2170 = vadd.f32 0.0, %v2169
  %v2171 = vpop.f32.mrb[0].mxu0
  %2172 = vmatprep.mubr.f32.mxu0 0.0
  %2173 = vmatmul.mubr.f32.gmra.mrb[0].mxu0 %v1641
  %v2174 = vpop.f32.mrb[0].mxu0
  %v2175 = vadd.f32 0.0, %v2174
  %v2176 = vpop.f32.mrb[0].mxu0
  %2177 = vmatprep.mubr.f32.mxu0 0.0
  %2178 = vmatmul.mubr.f32.gmra.mrb[0].mxu0 %v1829
  %v2179 = vpop.f32.mrb[0].mxu0
  %v2180 = vadd.f32 0.0, %v2179
  %v2181 = vpop.f32.mrb[0].mxu0
  %2182 = vmatprep.mubr.f32.mxu0 0.0
  %2183 = vmatmul.mubr.f32.gmra.mrb[0].mxu0 %v2017
  %v2184 = vpop.f32.mrb[0].mxu0
  %v2185 = vadd.f32 0.0, %v2184
  %v2186 = vpop.f32.mrb[0].mxu0
  %2187 = vdwg.mxu0
  %v2188 = vadd.f32 %v2000, %v2086
  %v2189 = vadd.f32 %v2001, %v2091
  %v2190 = vadd.f32 %v2002, %v2096
  %v2191 = vadd.f32 %v2003, %v2101
  %v2192 = vadd.f32 %v2004, %v2114
  %v2193 = vadd.f32 %v2005, %v2119
  %v2194 = vadd.f32 %v2006, %v2124
  %v2195 = vadd.f32 %v2007, %v2129
  %v2196 = vadd.f32 %v2008, %v2142
  %v2197 = vadd.f32 %v2009, %v2147
  %v2198 = vadd.f32 %v2010, %v2152
  %v2199 = vadd.f32 %v2011, %v2157
  %v2200 = vadd.f32 %v2012, %v2170
  %v2201 = vadd.f32 %v2013, %v2175
  %v2202 = vadd.f32 %v2014, %v2180
  %v2203 = vadd.f32 %v2015, %v2185
  %v2204 = vld [vmem:[%s4] sm:$0x1]
  %v2206 = vlaneseq
  %v2207 = vshrl.u32 %v2206, 7
  %v2208 = vsub.s32 0, %v2207
  %v2209 = vrot.slane %v2204, %v2208
  %v2211 = vadd.f32 %v2188, %v2209
  %v2212 = vadd.f32 %v2189, %v2209
  %v2213 = vadd.f32 %v2190, %v2209
  %v2214 = vadd.f32 %v2191, %v2209
  %v2215 = vadd.f32 %v2192, %v2209
  %v2216 = vadd.f32 %v2193, %v2209
  %v2217 = vadd.f32 %v2194, %v2209
  %v2218 = vadd.f32 %v2195, %v2209
  %v2219 = vadd.f32 %v2196, %v2209
  %v2220 = vadd.f32 %v2197, %v2209
  %v2221 = vadd.f32 %v2198, %v2209
  %v2222 = vadd.f32 %v2199, %v2209
  %v2223 = vadd.f32 %v2200, %v2209
  %v2224 = vadd.f32 %v2201, %v2209
  %v2225 = vadd.f32 %v2202, %v2209
  %v2226 = vadd.f32 %v2203, %v2209
  %v2227 = vmax.f32 %v2211, 0.0
  %v2228 = vmax.f32 %v2212, 0.0
  %v2229 = vmax.f32 %v2213, 0.0
  %v2230 = vmax.f32 %v2214, 0.0
  %v2231 = vmax.f32 %v2215, 0.0
  %v2232 = vmax.f32 %v2216, 0.0
  %v2233 = vmax.f32 %v2217, 0.0
  %v2234 = vmax.f32 %v2218, 0.0
  %v2235 = vmax.f32 %v2219, 0.0
  %v2236 = vmax.f32 %v2220, 0.0
  %v2237 = vmax.f32 %v2221, 0.0
  %v2238 = vmax.f32 %v2222, 0.0
  %v2239 = vmax.f32 %v2223, 0.0
  %v2240 = vmax.f32 %v2224, 0.0
  %v2241 = vmax.f32 %v2225, 0.0
  %v2242 = vmax.f32 %v2226, 0.0
  %v2243 = vld [vmem:[%s5] sm:$0xff]
  %v2244 = vld [vmem:[%s5 + $0x8] sm:$0xff]
  %v2245 = vld [vmem:[%s5 + $0x10] sm:$0xff]
  %v2246 = vld [vmem:[%s5 + $0x18] sm:$0xff]
  %v2247 = vld [vmem:[%s5 + $0x20] sm:$0xff]
  %v2248 = vld [vmem:[%s5 + $0x28] sm:$0xff]
  %v2249 = vld [vmem:[%s5 + $0x30] sm:$0xff]
  %v2250 = vld [vmem:[%s5 + $0x38] sm:$0xff]
  %v2251 = vld [vmem:[%s5 + $0x40] sm:$0xff]
  %v2252 = vld [vmem:[%s5 + $0x48] sm:$0xff]
  %v2253 = vld [vmem:[%s5 + $0x50] sm:$0xff]
  %v2254 = vld [vmem:[%s5 + $0x58] sm:$0xff]
  %v2255 = vld [vmem:[%s5 + $0x60] sm:$0xff]
  %v2256 = vld [vmem:[%s5 + $0x68] sm:$0xff]
  %v2257 = vld [vmem:[%s5 + $0x70] sm:$0xff]
  %v2258 = vld [vmem:[%s5 + $0x78] sm:$0xff]
  %v2259 = vld [vmem:[%s5 + $0x80] sm:$0xff]
  %v2260 = vld [vmem:[%s5 + $0x88] sm:$0xff]
  %v2261 = vld [vmem:[%s5 + $0x90] sm:$0xff]
  %v2262 = vld [vmem:[%s5 + $0x98] sm:$0xff]
  %v2263 = vld [vmem:[%s5 + $0xa0] sm:$0xff]
  %v2264 = vld [vmem:[%s5 + $0xa8] sm:$0xff]
  %v2265 = vld [vmem:[%s5 + $0xb0] sm:$0xff]
  %v2266 = vld [vmem:[%s5 + $0xb8] sm:$0xff]
  %v2267 = vld [vmem:[%s5 + $0xc0] sm:$0xff]
  %v2268 = vld [vmem:[%s5 + $0xc8] sm:$0xff]
  %v2269 = vld [vmem:[%s5 + $0xd0] sm:$0xff]
  %v2270 = vld [vmem:[%s5 + $0xd8] sm:$0xff]
  %v2271 = vld [vmem:[%s5 + $0xe0] sm:$0xff]
  %v2272 = vld [vmem:[%s5 + $0xe8] sm:$0xff]
  %v2273 = vld [vmem:[%s5 + $0xf0] sm:$0xff]
  %v2274 = vld [vmem:[%s5 + $0xf8] sm:$0xff]
  %v2275 = vld [vmem:[%s5 + $0x100] sm:$0xff]
  %v2276 = vld [vmem:[%s5 + $0x108] sm:$0xff]
  %v2277 = vld [vmem:[%s5 + $0x110] sm:$0xff]
  %v2278 = vld [vmem:[%s5 + $0x118] sm:$0xff]
  %v2279 = vld [vmem:[%s5 + $0x120] sm:$0xff]
  %v2280 = vld [vmem:[%s5 + $0x128] sm:$0xff]
  %v2281 = vld [vmem:[%s5 + $0x130] sm:$0xff]
  %v2282 = vld [vmem:[%s5 + $0x138] sm:$0xff]
  %v2283 = vld [vmem:[%s5 + $0x140] sm:$0xff]
  %v2284 = vld [vmem:[%s5 + $0x148] sm:$0xff]
  %v2285 = vld [vmem:[%s5 + $0x150] sm:$0xff]
  %v2286 = vld [vmem:[%s5 + $0x158] sm:$0xff]
  %v2287 = vld [vmem:[%s5 + $0x160] sm:$0xff]
  %v2288 = vld [vmem:[%s5 + $0x168] sm:$0xff]
  %v2289 = vld [vmem:[%s5 + $0x170] sm:$0xff]
  %v2290 = vld [vmem:[%s5 + $0x178] sm:$0xff]
  %v2291 = vld [vmem:[%s5 + $0x180] sm:$0xff]
  %v2292 = vld [vmem:[%s5 + $0x188] sm:$0xff]
  %v2293 = vld [vmem:[%s5 + $0x190] sm:$0xff]
  %v2294 = vld [vmem:[%s5 + $0x198] sm:$0xff]
  %v2295 = vld [vmem:[%s5 + $0x1a0] sm:$0xff]
  %v2296 = vld [vmem:[%s5 + $0x1a8] sm:$0xff]
  %v2297 = vld [vmem:[%s5 + $0x1b0] sm:$0xff]
  %v2298 = vld [vmem:[%s5 + $0x1b8] sm:$0xff]
  %v2299 = vld [vmem:[%s5 + $0x1c0] sm:$0xff]
  %v2300 = vld [vmem:[%s5 + $0x1c8] sm:$0xff]
  %v2301 = vld [vmem:[%s5 + $0x1d0] sm:$0xff]
  %v2302 = vld [vmem:[%s5 + $0x1d8] sm:$0xff]
  %v2303 = vld [vmem:[%s5 + $0x1e0] sm:$0xff]
  %v2304 = vld [vmem:[%s5 + $0x1e8] sm:$0xff]
  %v2305 = vld [vmem:[%s5 + $0x1f0] sm:$0xff]
  %v2306 = vld [vmem:[%s5 + $0x1f8] sm:$0xff]
  %v2308 = vsel %vm176, %v2228, 0
  %2310 = vmatprep.subr.mxu0 0.0
  %2311 = vmatpush1.msra.mxu0 %v2247
  %2312 = vmatprep.subr.mxu0 0.0
  %2313 = vmatpush1.msra.mxu0 %v2248
  %2314 = vmatprep.subr.mxu0 0.0
  %2315 = vmatpush1.msra.mxu0 %v2249
  %2316 = vmatprep.subr.mxu0 0.0
  %2317 = vmatpush1.msra.mxu0 %v2250
  %2318 = vmatprep.subr.mxu0 0.0
  %2319 = vmatpush1.msra.mxu0 0.0
  %2320 = vmatprep.subr.mxu0 0.0
  %2321 = vmatpush1.msra.mxu0 0.0
  %2322 = vmatprep.subr.mxu0 0.0
  %2323 = vmatpush1.msra.mxu0 0.0
  %2324 = vmatprep.subr.mxu0 0.0
  %2325 = vmatpush1.msra.mxu0 0.0
  %2326 = vmatprep.subr.mxu0 0.0
  %2327 = vmatpush1.msra.mxu0 0.0
  %2328 = vmatprep.subr.mxu0 0.0
  %2329 = vmatpush1.msra.mxu0 0.0
  %2330 = vmatprep.subr.mxu0 0.0
  %2331 = vmatpush1.msra.mxu0 0.0
  %2332 = vmatprep.subr.mxu0 0.0
  %2333 = vmatpush1.msra.mxu0 0.0
  %2334 = vmatprep.subr.mxu0 0.0
  %2335 = vmatpush1.msra.mxu0 0.0
  %2336 = vmatprep.subr.mxu0 0.0
  %2337 = vmatpush1.msra.mxu0 0.0
  %2338 = vmatprep.subr.mxu0 0.0
  %2339 = vmatpush1.msra.mxu0 0.0
  %2340 = vmatprep.subr.mxu0 0.0
  %2341 = vmatpush1.msra.mxu0 0.0
  %2342 = vmatprep.subr.mxu0 0.0
  %2343 = vmatpush1.msra.mxu0 0.0
  %2344 = vmatprep.subr.mxu0 0.0
  %2345 = vmatpush1.msra.mxu0 0.0
  %2346 = vmatprep.subr.mxu0 0.0
  %2347 = vmatpush1.msra.mxu0 0.0
  %2348 = vmatprep.subr.mxu0 0.0
  %2349 = vmatpush1.msra.mxu0 0.0
  %2350 = vmatprep.subr.mxu0 0.0
  %2351 = vmatpush1.msra.mxu0 0.0
  %2352 = vmatprep.subr.mxu0 0.0
  %2353 = vmatpush1.msra.mxu0 0.0
  %2354 = vmatprep.subr.mxu0 0.0
  %2355 = vmatpush1.msra.mxu0 0.0
  %2356 = vmatprep.subr.mxu0 0.0
  %2357 = vmatpush1.msra.mxu0 0.0
  %2358 = vmatprep.subr.mxu0 0.0
  %2359 = vmatpush1.msra.mxu0 0.0
  %2360 = vmatprep.subr.mxu0 0.0
  %2361 = vmatpush1.msra.mxu0 0.0
  %2362 = vmatprep.subr.mxu0 0.0
  %2363 = vmatpush1.msra.mxu0 0.0
  %2364 = vmatprep.subr.mxu0 0.0
  %2365 = vmatpush1.msra.mxu0 0.0
  %2366 = vmatprep.subr.mxu0 0.0
  %2367 = vmatpush1.msra.mxu0 0.0
  %2368 = vmatprep.subr.mxu0 0.0
  %2369 = vmatpush1.msra.mxu0 0.0
  %2370 = vmatprep.subr.mxu0 0.0
  %2371 = vmatpush1.msra.mxu0 0.0
  %2372 = vmatprep.subr.mxu0 0.0
  %2373 = vmatpush1.msra.mxu0 0.0
  %2374 = vmatprep.mubr.f32.mxu0 0.0
  %2375 = vmatmul.mubr.f32.gmra.mrb[0].mxu0 %v2308
  %v2376 = vpop.f32.mrb[0].mxu0
  %v2377 = vadd.f32 0.0, %v2376
  %v2378 = vpop.f32.mrb[0].mxu0
  %2379 = vdwg.mxu0
  %v2381 = vsel %vm176, %v2227, 0
  %2383 = vmatprep.subr.mxu0 0.0
  %2384 = vmatpush1.msra.mxu0 %v2243
  %2385 = vmatprep.subr.mxu0 0.0
  %2386 = vmatpush1.msra.mxu0 %v2244
  %2387 = vmatprep.subr.mxu0 0.0
  %2388 = vmatpush1.msra.mxu0 %v2245
  %2389 = vmatprep.subr.mxu0 0.0
  %2390 = vmatpush1.msra.mxu0 %v2246
  %2391 = vmatprep.subr.mxu0 0.0
  %2392 = vmatpush1.msra.mxu0 0.0
  %2393 = vmatprep.subr.mxu0 0.0
  %2394 = vmatpush1.msra.mxu0 0.0
  %2395 = vmatprep.subr.mxu0 0.0
  %2396 = vmatpush1.msra.mxu0 0.0
  %2397 = vmatprep.subr.mxu0 0.0
  %2398 = vmatpush1.msra.mxu0 0.0
  %2399 = vmatprep.subr.mxu0 0.0
  %2400 = vmatpush1.msra.mxu0 0.0
  %2401 = vmatprep.subr.mxu0 0.0
  %2402 = vmatpush1.msra.mxu0 0.0
  %2403 = vmatprep.subr.mxu0 0.0
  %2404 = vmatpush1.msra.mxu0 0.0
  %2405 = vmatprep.subr.mxu0 0.0
  %2406 = vmatpush1.msra.mxu0 0.0
  %2407 = vmatprep.subr.mxu0 0.0
  %2408 = vmatpush1.msra.mxu0 0.0
  %2409 = vmatprep.subr.mxu0 0.0
  %2410 = vmatpush1.msra.mxu0 0.0
  %2411 = vmatprep.subr.mxu0 0.0
  %2412 = vmatpush1.msra.mxu0 0.0
  %2413 = vmatprep.subr.mxu0 0.0
  %2414 = vmatpush1.msra.mxu0 0.0
  %2415 = vmatprep.subr.mxu0 0.0
  %2416 = vmatpush1.msra.mxu0 0.0
  %2417 = vmatprep.subr.mxu0 0.0
  %2418 = vmatpush1.msra.mxu0 0.0
  %2419 = vmatprep.subr.mxu0 0.0
  %2420 = vmatpush1.msra.mxu0 0.0
  %2421 = vmatprep.subr.mxu0 0.0
  %2422 = vmatpush1.msra.mxu0 0.0
  %2423 = vmatprep.subr.mxu0 0.0
  %2424 = vmatpush1.msra.mxu0 0.0
  %2425 = vmatprep.subr.mxu0 0.0
  %2426 = vmatpush1.msra.mxu0 0.0
  %2427 = vmatprep.subr.mxu0 0.0
  %2428 = vmatpush1.msra.mxu0 0.0
  %2429 = vmatprep.subr.mxu0 0.0
  %2430 = vmatpush1.msra.mxu0 0.0
  %2431 = vmatprep.subr.mxu0 0.0
  %2432 = vmatpush1.msra.mxu0 0.0
  %2433 = vmatprep.subr.mxu0 0.0
  %2434 = vmatpush1.msra.mxu0 0.0
  %2435 = vmatprep.subr.mxu0 0.0
  %2436 = vmatpush1.msra.mxu0 0.0
  %2437 = vmatprep.subr.mxu0 0.0
  %2438 = vmatpush1.msra.mxu0 0.0
  %2439 = vmatprep.subr.mxu0 0.0
  %2440 = vmatpush1.msra.mxu0 0.0
  %2441 = vmatprep.subr.mxu0 0.0
  %2442 = vmatpush1.msra.mxu0 0.0
  %2443 = vmatprep.subr.mxu0 0.0
  %2444 = vmatpush1.msra.mxu0 0.0
  %2445 = vmatprep.subr.mxu0 0.0
  %2446 = vmatpush1.msra.mxu0 0.0
  %2447 = vmatprep.mubr.f32.mxu0 0.0
  %2448 = vmatmul.mubr.f32.gmra.mrb[0].mxu0 %v2381
  %v2449 = vpop.f32.mrb[0].mxu0
  %v2450 = vadd.f32 %v2377, %v2449
  %v2451 = vpop.f32.mrb[0].mxu0
  %2452 = vdwg.mxu0
  %v2454 = vsel %vm176, %v2229, 0
  %2456 = vmatprep.subr.mxu0 0.0
  %2457 = vmatpush1.msra.mxu0 %v2251
  %2458 = vmatprep.subr.mxu0 0.0
  %2459 = vmatpush1.msra.mxu0 %v2252
  %2460 = vmatprep.subr.mxu0 0.0
  %2461 = vmatpush1.msra.mxu0 %v2253
  %2462 = vmatprep.subr.mxu0 0.0
  %2463 = vmatpush1.msra.mxu0 %v2254
  %2464 = vmatprep.subr.mxu0 0.0
  %2465 = vmatpush1.msra.mxu0 0.0
  %2466 = vmatprep.subr.mxu0 0.0
  %2467 = vmatpush1.msra.mxu0 0.0
  %2468 = vmatprep.subr.mxu0 0.0
  %2469 = vmatpush1.msra.mxu0 0.0
  %2470 = vmatprep.subr.mxu0 0.0
  %2471 = vmatpush1.msra.mxu0 0.0
  %2472 = vmatprep.subr.mxu0 0.0
  %2473 = vmatpush1.msra.mxu0 0.0
  %2474 = vmatprep.subr.mxu0 0.0
  %2475 = vmatpush1.msra.mxu0 0.0
  %2476 = vmatprep.subr.mxu0 0.0
  %2477 = vmatpush1.msra.mxu0 0.0
  %2478 = vmatprep.subr.mxu0 0.0
  %2479 = vmatpush1.msra.mxu0 0.0
  %2480 = vmatprep.subr.mxu0 0.0
  %2481 = vmatpush1.msra.mxu0 0.0
  %2482 = vmatprep.subr.mxu0 0.0
  %2483 = vmatpush1.msra.mxu0 0.0
  %2484 = vmatprep.subr.mxu0 0.0
  %2485 = vmatpush1.msra.mxu0 0.0
  %2486 = vmatprep.subr.mxu0 0.0
  %2487 = vmatpush1.msra.mxu0 0.0
  %2488 = vmatprep.subr.mxu0 0.0
  %2489 = vmatpush1.msra.mxu0 0.0
  %2490 = vmatprep.subr.mxu0 0.0
  %2491 = vmatpush1.msra.mxu0 0.0
  %2492 = vmatprep.subr.mxu0 0.0
  %2493 = vmatpush1.msra.mxu0 0.0
  %2494 = vmatprep.subr.mxu0 0.0
  %2495 = vmatpush1.msra.mxu0 0.0
  %2496 = vmatprep.subr.mxu0 0.0
  %2497 = vmatpush1.msra.mxu0 0.0
  %2498 = vmatprep.subr.mxu0 0.0
  %2499 = vmatpush1.msra.mxu0 0.0
  %2500 = vmatprep.subr.mxu0 0.0
  %2501 = vmatpush1.msra.mxu0 0.0
  %2502 = vmatprep.subr.mxu0 0.0
  %2503 = vmatpush1.msra.mxu0 0.0
  %2504 = vmatprep.subr.mxu0 0.0
  %2505 = vmatpush1.msra.mxu0 0.0
  %2506 = vmatprep.subr.mxu0 0.0
  %2507 = vmatpush1.msra.mxu0 0.0
  %2508 = vmatprep.subr.mxu0 0.0
  %2509 = vmatpush1.msra.mxu0 0.0
  %2510 = vmatprep.subr.mxu0 0.0
  %2511 = vmatpush1.msra.mxu0 0.0
  %2512 = vmatprep.subr.mxu0 0.0
  %2513 = vmatpush1.msra.mxu0 0.0
  %2514 = vmatprep.subr.mxu0 0.0
  %2515 = vmatpush1.msra.mxu0 0.0
  %2516 = vmatprep.subr.mxu0 0.0
  %2517 = vmatpush1.msra.mxu0 0.0
  %2518 = vmatprep.subr.mxu0 0.0
  %2519 = vmatpush1.msra.mxu0 0.0
  %2520 = vmatprep.mubr.f32.mxu0 0.0
  %2521 = vmatmul.mubr.f32.gmra.mrb[0].mxu0 %v2454
  %v2522 = vpop.f32.mrb[0].mxu0
  %v2523 = vadd.f32 0.0, %v2522
  %v2524 = vpop.f32.mrb[0].mxu0
  %2525 = vdwg.mxu0
  %v2526 = vadd.f32 %v2450, %v2523
  %v2528 = vsel %vm176, %v2230, 0
  %2530 = vmatprep.subr.mxu0 0.0
  %2531 = vmatpush1.msra.mxu0 %v2255
  %2532 = vmatprep.subr.mxu0 0.0
  %2533 = vmatpush1.msra.mxu0 %v2256
  %2534 = vmatprep.subr.mxu0 0.0
  %2535 = vmatpush1.msra.mxu0 %v2257
  %2536 = vmatprep.subr.mxu0 0.0
  %2537 = vmatpush1.msra.mxu0 %v2258
  %2538 = vmatprep.subr.mxu0 0.0
  %2539 = vmatpush1.msra.mxu0 0.0
  %2540 = vmatprep.subr.mxu0 0.0
  %2541 = vmatpush1.msra.mxu0 0.0
  %2542 = vmatprep.subr.mxu0 0.0
  %2543 = vmatpush1.msra.mxu0 0.0
  %2544 = vmatprep.subr.mxu0 0.0
  %2545 = vmatpush1.msra.mxu0 0.0
  %2546 = vmatprep.subr.mxu0 0.0
  %2547 = vmatpush1.msra.mxu0 0.0
  %2548 = vmatprep.subr.mxu0 0.0
  %2549 = vmatpush1.msra.mxu0 0.0
  %2550 = vmatprep.subr.mxu0 0.0
  %2551 = vmatpush1.msra.mxu0 0.0
  %2552 = vmatprep.subr.mxu0 0.0
  %2553 = vmatpush1.msra.mxu0 0.0
  %2554 = vmatprep.subr.mxu0 0.0
  %2555 = vmatpush1.msra.mxu0 0.0
  %2556 = vmatprep.subr.mxu0 0.0
  %2557 = vmatpush1.msra.mxu0 0.0
  %2558 = vmatprep.subr.mxu0 0.0
  %2559 = vmatpush1.msra.mxu0 0.0
  %2560 = vmatprep.subr.mxu0 0.0
  %2561 = vmatpush1.msra.mxu0 0.0
  %2562 = vmatprep.subr.mxu0 0.0
  %2563 = vmatpush1.msra.mxu0 0.0
  %2564 = vmatprep.subr.mxu0 0.0
  %2565 = vmatpush1.msra.mxu0 0.0
  %2566 = vmatprep.subr.mxu0 0.0
  %2567 = vmatpush1.msra.mxu0 0.0
  %2568 = vmatprep.subr.mxu0 0.0
  %2569 = vmatpush1.msra.mxu0 0.0
  %2570 = vmatprep.subr.mxu0 0.0
  %2571 = vmatpush1.msra.mxu0 0.0
  %2572 = vmatprep.subr.mxu0 0.0
  %2573 = vmatpush1.msra.mxu0 0.0
  %2574 = vmatprep.subr.mxu0 0.0
  %2575 = vmatpush1.msra.mxu0 0.0
  %2576 = vmatprep.subr.mxu0 0.0
  %2577 = vmatpush1.msra.mxu0 0.0
  %2578 = vmatprep.subr.mxu0 0.0
  %2579 = vmatpush1.msra.mxu0 0.0
  %2580 = vmatprep.subr.mxu0 0.0
  %2581 = vmatpush1.msra.mxu0 0.0
  %2582 = vmatprep.subr.mxu0 0.0
  %2583 = vmatpush1.msra.mxu0 0.0
  %2584 = vmatprep.subr.mxu0 0.0
  %2585 = vmatpush1.msra.mxu0 0.0
  %2586 = vmatprep.subr.mxu0 0.0
  %2587 = vmatpush1.msra.mxu0 0.0
  %2588 = vmatprep.subr.mxu0 0.0
  %2589 = vmatpush1.msra.mxu0 0.0
  %2590 = vmatprep.subr.mxu0 0.0
  %2591 = vmatpush1.msra.mxu0 0.0
  %2592 = vmatprep.subr.mxu0 0.0
  %2593 = vmatpush1.msra.mxu0 0.0
  %2594 = vmatprep.mubr.f32.mxu0 0.0
  %2595 = vmatmul.mubr.f32.gmra.mrb[0].mxu0 %v2528
  %v2596 = vpop.f32.mrb[0].mxu0
  %v2597 = vadd.f32 0.0, %v2596
  %v2598 = vpop.f32.mrb[0].mxu0
  %2599 = vdwg.mxu0
  %v2600 = vadd.f32 %v2526, %v2597
  %v2602 = vsel %vm176, %v2231, 0
  %2604 = vmatprep.subr.mxu0 0.0
  %2605 = vmatpush1.msra.mxu0 %v2259
  %2606 = vmatprep.subr.mxu0 0.0
  %2607 = vmatpush1.msra.mxu0 %v2260
  %2608 = vmatprep.subr.mxu0 0.0
  %2609 = vmatpush1.msra.mxu0 %v2261
  %2610 = vmatprep.subr.mxu0 0.0
  %2611 = vmatpush1.msra.mxu0 %v2262
  %2612 = vmatprep.subr.mxu0 0.0
  %2613 = vmatpush1.msra.mxu0 0.0
  %2614 = vmatprep.subr.mxu0 0.0
  %2615 = vmatpush1.msra.mxu0 0.0
  %2616 = vmatprep.subr.mxu0 0.0
  %2617 = vmatpush1.msra.mxu0 0.0
  %2618 = vmatprep.subr.mxu0 0.0
  %2619 = vmatpush1.msra.mxu0 0.0
  %2620 = vmatprep.subr.mxu0 0.0
  %2621 = vmatpush1.msra.mxu0 0.0
  %2622 = vmatprep.subr.mxu0 0.0
  %2623 = vmatpush1.msra.mxu0 0.0
  %2624 = vmatprep.subr.mxu0 0.0
  %2625 = vmatpush1.msra.mxu0 0.0
  %2626 = vmatprep.subr.mxu0 0.0
  %2627 = vmatpush1.msra.mxu0 0.0
  %2628 = vmatprep.subr.mxu0 0.0
  %2629 = vmatpush1.msra.mxu0 0.0
  %2630 = vmatprep.subr.mxu0 0.0
  %2631 = vmatpush1.msra.mxu0 0.0
  %2632 = vmatprep.subr.mxu0 0.0
  %2633 = vmatpush1.msra.mxu0 0.0
  %2634 = vmatprep.subr.mxu0 0.0
  %2635 = vmatpush1.msra.mxu0 0.0
  %2636 = vmatprep.subr.mxu0 0.0
  %2637 = vmatpush1.msra.mxu0 0.0
  %2638 = vmatprep.subr.mxu0 0.0
  %2639 = vmatpush1.msra.mxu0 0.0
  %2640 = vmatprep.subr.mxu0 0.0
  %2641 = vmatpush1.msra.mxu0 0.0
  %2642 = vmatprep.subr.mxu0 0.0
  %2643 = vmatpush1.msra.mxu0 0.0
  %2644 = vmatprep.subr.mxu0 0.0
  %2645 = vmatpush1.msra.mxu0 0.0
  %2646 = vmatprep.subr.mxu0 0.0
  %2647 = vmatpush1.msra.mxu0 0.0
  %2648 = vmatprep.subr.mxu0 0.0
  %2649 = vmatpush1.msra.mxu0 0.0
  %2650 = vmatprep.subr.mxu0 0.0
  %2651 = vmatpush1.msra.mxu0 0.0
  %2652 = vmatprep.subr.mxu0 0.0
  %2653 = vmatpush1.msra.mxu0 0.0
  %2654 = vmatprep.subr.mxu0 0.0
  %2655 = vmatpush1.msra.mxu0 0.0
  %2656 = vmatprep.subr.mxu0 0.0
  %2657 = vmatpush1.msra.mxu0 0.0
  %2658 = vmatprep.subr.mxu0 0.0
  %2659 = vmatpush1.msra.mxu0 0.0
  %2660 = vmatprep.subr.mxu0 0.0
  %2661 = vmatpush1.msra.mxu0 0.0
  %2662 = vmatprep.subr.mxu0 0.0
  %2663 = vmatpush1.msra.mxu0 0.0
  %2664 = vmatprep.subr.mxu0 0.0
  %2665 = vmatpush1.msra.mxu0 0.0
  %2666 = vmatprep.subr.mxu0 0.0
  %2667 = vmatpush1.msra.mxu0 0.0
  %2668 = vmatprep.mubr.f32.mxu0 0.0
  %2669 = vmatmul.mubr.f32.gmra.mrb[0].mxu0 %v2602
  %v2670 = vpop.f32.mrb[0].mxu0
  %v2671 = vadd.f32 0.0, %v2670
  %v2672 = vpop.f32.mrb[0].mxu0
  %2673 = vdwg.mxu0
  %v2674 = vadd.f32 %v2600, %v2671
  %v2676 = vsel %vm176, %v2232, 0
  %2678 = vmatprep.subr.mxu0 0.0
  %2679 = vmatpush1.msra.mxu0 %v2263
  %2680 = vmatprep.subr.mxu0 0.0
  %2681 = vmatpush1.msra.mxu0 %v2264
  %2682 = vmatprep.subr.mxu0 0.0
  %2683 = vmatpush1.msra.mxu0 %v2265
  %2684 = vmatprep.subr.mxu0 0.0
  %2685 = vmatpush1.msra.mxu0 %v2266
  %2686 = vmatprep.subr.mxu0 0.0
  %2687 = vmatpush1.msra.mxu0 0.0
  %2688 = vmatprep.subr.mxu0 0.0
  %2689 = vmatpush1.msra.mxu0 0.0
  %2690 = vmatprep.subr.mxu0 0.0
  %2691 = vmatpush1.msra.mxu0 0.0
  %2692 = vmatprep.subr.mxu0 0.0
  %2693 = vmatpush1.msra.mxu0 0.0
  %2694 = vmatprep.subr.mxu0 0.0
  %2695 = vmatpush1.msra.mxu0 0.0
  %2696 = vmatprep.subr.mxu0 0.0
  %2697 = vmatpush1.msra.mxu0 0.0
  %2698 = vmatprep.subr.mxu0 0.0
  %2699 = vmatpush1.msra.mxu0 0.0
  %2700 = vmatprep.subr.mxu0 0.0
  %2701 = vmatpush1.msra.mxu0 0.0
  %2702 = vmatprep.subr.mxu0 0.0
  %2703 = vmatpush1.msra.mxu0 0.0
  %2704 = vmatprep.subr.mxu0 0.0
  %2705 = vmatpush1.msra.mxu0 0.0
  %2706 = vmatprep.subr.mxu0 0.0
  %2707 = vmatpush1.msra.mxu0 0.0
  %2708 = vmatprep.subr.mxu0 0.0
  %2709 = vmatpush1.msra.mxu0 0.0
  %2710 = vmatprep.subr.mxu0 0.0
  %2711 = vmatpush1.msra.mxu0 0.0
  %2712 = vmatprep.subr.mxu0 0.0
  %2713 = vmatpush1.msra.mxu0 0.0
  %2714 = vmatprep.subr.mxu0 0.0
  %2715 = vmatpush1.msra.mxu0 0.0
  %2716 = vmatprep.subr.mxu0 0.0
  %2717 = vmatpush1.msra.mxu0 0.0
  %2718 = vmatprep.subr.mxu0 0.0
  %2719 = vmatpush1.msra.mxu0 0.0
  %2720 = vmatprep.subr.mxu0 0.0
  %2721 = vmatpush1.msra.mxu0 0.0
  %2722 = vmatprep.subr.mxu0 0.0
  %2723 = vmatpush1.msra.mxu0 0.0
  %2724 = vmatprep.subr.mxu0 0.0
  %2725 = vmatpush1.msra.mxu0 0.0
  %2726 = vmatprep.subr.mxu0 0.0
  %2727 = vmatpush1.msra.mxu0 0.0
  %2728 = vmatprep.subr.mxu0 0.0
  %2729 = vmatpush1.msra.mxu0 0.0
  %2730 = vmatprep.subr.mxu0 0.0
  %2731 = vmatpush1.msra.mxu0 0.0
  %2732 = vmatprep.subr.mxu0 0.0
  %2733 = vmatpush1.msra.mxu0 0.0
  %2734 = vmatprep.subr.mxu0 0.0
  %2735 = vmatpush1.msra.mxu0 0.0
  %2736 = vmatprep.subr.mxu0 0.0
  %2737 = vmatpush1.msra.mxu0 0.0
  %2738 = vmatprep.subr.mxu0 0.0
  %2739 = vmatpush1.msra.mxu0 0.0
  %2740 = vmatprep.subr.mxu0 0.0
  %2741 = vmatpush1.msra.mxu0 0.0
  %2742 = vmatprep.mubr.f32.mxu0 0.0
  %2743 = vmatmul.mubr.f32.gmra.mrb[0].mxu0 %v2676
  %v2744 = vpop.f32.mrb[0].mxu0
  %v2745 = vadd.f32 0.0, %v2744
  %v2746 = vpop.f32.mrb[0].mxu0
  %2747 = vdwg.mxu0
  %v2748 = vadd.f32 %v2674, %v2745
  %v2750 = vsel %vm176, %v2233, 0
  %2752 = vmatprep.subr.mxu0 0.0
  %2753 = vmatpush1.msra.mxu0 %v2267
  %2754 = vmatprep.subr.mxu0 0.0
  %2755 = vmatpush1.msra.mxu0 %v2268
  %2756 = vmatprep.subr.mxu0 0.0
  %2757 = vmatpush1.msra.mxu0 %v2269
  %2758 = vmatprep.subr.mxu0 0.0
  %2759 = vmatpush1.msra.mxu0 %v2270
  %2760 = vmatprep.subr.mxu0 0.0
  %2761 = vmatpush1.msra.mxu0 0.0
  %2762 = vmatprep.subr.mxu0 0.0
  %2763 = vmatpush1.msra.mxu0 0.0
  %2764 = vmatprep.subr.mxu0 0.0
  %2765 = vmatpush1.msra.mxu0 0.0
  %2766 = vmatprep.subr.mxu0 0.0
  %2767 = vmatpush1.msra.mxu0 0.0
  %2768 = vmatprep.subr.mxu0 0.0
  %2769 = vmatpush1.msra.mxu0 0.0
  %2770 = vmatprep.subr.mxu0 0.0
  %2771 = vmatpush1.msra.mxu0 0.0
  %2772 = vmatprep.subr.mxu0 0.0
  %2773 = vmatpush1.msra.mxu0 0.0
  %2774 = vmatprep.subr.mxu0 0.0
  %2775 = vmatpush1.msra.mxu0 0.0
  %2776 = vmatprep.subr.mxu0 0.0
  %2777 = vmatpush1.msra.mxu0 0.0
  %2778 = vmatprep.subr.mxu0 0.0
  %2779 = vmatpush1.msra.mxu0 0.0
  %2780 = vmatprep.subr.mxu0 0.0
  %2781 = vmatpush1.msra.mxu0 0.0
  %2782 = vmatprep.subr.mxu0 0.0
  %2783 = vmatpush1.msra.mxu0 0.0
  %2784 = vmatprep.subr.mxu0 0.0
  %2785 = vmatpush1.msra.mxu0 0.0
  %2786 = vmatprep.subr.mxu0 0.0
  %2787 = vmatpush1.msra.mxu0 0.0
  %2788 = vmatprep.subr.mxu0 0.0
  %2789 = vmatpush1.msra.mxu0 0.0
  %2790 = vmatprep.subr.mxu0 0.0
  %2791 = vmatpush1.msra.mxu0 0.0
  %2792 = vmatprep.subr.mxu0 0.0
  %2793 = vmatpush1.msra.mxu0 0.0
  %2794 = vmatprep.subr.mxu0 0.0
  %2795 = vmatpush1.msra.mxu0 0.0
  %2796 = vmatprep.subr.mxu0 0.0
  %2797 = vmatpush1.msra.mxu0 0.0
  %2798 = vmatprep.subr.mxu0 0.0
  %2799 = vmatpush1.msra.mxu0 0.0
  %2800 = vmatprep.subr.mxu0 0.0
  %2801 = vmatpush1.msra.mxu0 0.0
  %2802 = vmatprep.subr.mxu0 0.0
  %2803 = vmatpush1.msra.mxu0 0.0
  %2804 = vmatprep.subr.mxu0 0.0
  %2805 = vmatpush1.msra.mxu0 0.0
  %2806 = vmatprep.subr.mxu0 0.0
  %2807 = vmatpush1.msra.mxu0 0.0
  %2808 = vmatprep.subr.mxu0 0.0
  %2809 = vmatpush1.msra.mxu0 0.0
  %2810 = vmatprep.subr.mxu0 0.0
  %2811 = vmatpush1.msra.mxu0 0.0
  %2812 = vmatprep.subr.mxu0 0.0
  %2813 = vmatpush1.msra.mxu0 0.0
  %2814 = vmatprep.subr.mxu0 0.0
  %2815 = vmatpush1.msra.mxu0 0.0
  %2816 = vmatprep.mubr.f32.mxu0 0.0
  %2817 = vmatmul.mubr.f32.gmra.mrb[0].mxu0 %v2750
  %v2818 = vpop.f32.mrb[0].mxu0
  %v2819 = vadd.f32 0.0, %v2818
  %v2820 = vpop.f32.mrb[0].mxu0
  %2821 = vdwg.mxu0
  %v2822 = vadd.f32 %v2748, %v2819
  %v2824 = vsel %vm176, %v2234, 0
  %2826 = vmatprep.subr.mxu0 0.0
  %2827 = vmatpush1.msra.mxu0 %v2271
  %2828 = vmatprep.subr.mxu0 0.0
  %2829 = vmatpush1.msra.mxu0 %v2272
  %2830 = vmatprep.subr.mxu0 0.0
  %2831 = vmatpush1.msra.mxu0 %v2273
  %2832 = vmatprep.subr.mxu0 0.0
  %2833 = vmatpush1.msra.mxu0 %v2274
  %2834 = vmatprep.subr.mxu0 0.0
  %2835 = vmatpush1.msra.mxu0 0.0
  %2836 = vmatprep.subr.mxu0 0.0
  %2837 = vmatpush1.msra.mxu0 0.0
  %2838 = vmatprep.subr.mxu0 0.0
  %2839 = vmatpush1.msra.mxu0 0.0
  %2840 = vmatprep.subr.mxu0 0.0
  %2841 = vmatpush1.msra.mxu0 0.0
  %2842 = vmatprep.subr.mxu0 0.0
  %2843 = vmatpush1.msra.mxu0 0.0
  %2844 = vmatprep.subr.mxu0 0.0
  %2845 = vmatpush1.msra.mxu0 0.0
  %2846 = vmatprep.subr.mxu0 0.0
  %2847 = vmatpush1.msra.mxu0 0.0
  %2848 = vmatprep.subr.mxu0 0.0
  %2849 = vmatpush1.msra.mxu0 0.0
  %2850 = vmatprep.subr.mxu0 0.0
  %2851 = vmatpush1.msra.mxu0 0.0
  %2852 = vmatprep.subr.mxu0 0.0
  %2853 = vmatpush1.msra.mxu0 0.0
  %2854 = vmatprep.subr.mxu0 0.0
  %2855 = vmatpush1.msra.mxu0 0.0
  %2856 = vmatprep.subr.mxu0 0.0
  %2857 = vmatpush1.msra.mxu0 0.0
  %2858 = vmatprep.subr.mxu0 0.0
  %2859 = vmatpush1.msra.mxu0 0.0
  %2860 = vmatprep.subr.mxu0 0.0
  %2861 = vmatpush1.msra.mxu0 0.0
  %2862 = vmatprep.subr.mxu0 0.0
  %2863 = vmatpush1.msra.mxu0 0.0
  %2864 = vmatprep.subr.mxu0 0.0
  %2865 = vmatpush1.msra.mxu0 0.0
  %2866 = vmatprep.subr.mxu0 0.0
  %2867 = vmatpush1.msra.mxu0 0.0
  %2868 = vmatprep.subr.mxu0 0.0
  %2869 = vmatpush1.msra.mxu0 0.0
  %2870 = vmatprep.subr.mxu0 0.0
  %2871 = vmatpush1.msra.mxu0 0.0
  %2872 = vmatprep.subr.mxu0 0.0
  %2873 = vmatpush1.msra.mxu0 0.0
  %2874 = vmatprep.subr.mxu0 0.0
  %2875 = vmatpush1.msra.mxu0 0.0
  %2876 = vmatprep.subr.mxu0 0.0
  %2877 = vmatpush1.msra.mxu0 0.0
  %2878 = vmatprep.subr.mxu0 0.0
  %2879 = vmatpush1.msra.mxu0 0.0
  %2880 = vmatprep.subr.mxu0 0.0
  %2881 = vmatpush1.msra.mxu0 0.0
  %2882 = vmatprep.subr.mxu0 0.0
  %2883 = vmatpush1.msra.mxu0 0.0
  %2884 = vmatprep.subr.mxu0 0.0
  %2885 = vmatpush1.msra.mxu0 0.0
  %2886 = vmatprep.subr.mxu0 0.0
  %2887 = vmatpush1.msra.mxu0 0.0
  %2888 = vmatprep.subr.mxu0 0.0
  %2889 = vmatpush1.msra.mxu0 0.0
  %2890 = vmatprep.mubr.f32.mxu0 0.0
  %2891 = vmatmul.mubr.f32.gmra.mrb[0].mxu0 %v2824
  %v2892 = vpop.f32.mrb[0].mxu0
  %v2893 = vadd.f32 0.0, %v2892
  %v2894 = vpop.f32.mrb[0].mxu0
  %2895 = vdwg.mxu0
  %v2896 = vadd.f32 %v2822, %v2893
  %v2898 = vsel %vm176, %v2235, 0
  %2900 = vmatprep.subr.mxu0 0.0
  %2901 = vmatpush1.msra.mxu0 %v2275
  %2902 = vmatprep.subr.mxu0 0.0
  %2903 = vmatpush1.msra.mxu0 %v2276
  %2904 = vmatprep.subr.mxu0 0.0
  %2905 = vmatpush1.msra.mxu0 %v2277
  %2906 = vmatprep.subr.mxu0 0.0
  %2907 = vmatpush1.msra.mxu0 %v2278
  %2908 = vmatprep.subr.mxu0 0.0
  %2909 = vmatpush1.msra.mxu0 0.0
  %2910 = vmatprep.subr.mxu0 0.0
  %2911 = vmatpush1.msra.mxu0 0.0
  %2912 = vmatprep.subr.mxu0 0.0
  %2913 = vmatpush1.msra.mxu0 0.0
  %2914 = vmatprep.subr.mxu0 0.0
  %2915 = vmatpush1.msra.mxu0 0.0
  %2916 = vmatprep.subr.mxu0 0.0
  %2917 = vmatpush1.msra.mxu0 0.0
  %2918 = vmatprep.subr.mxu0 0.0
  %2919 = vmatpush1.msra.mxu0 0.0
  %2920 = vmatprep.subr.mxu0 0.0
  %2921 = vmatpush1.msra.mxu0 0.0
  %2922 = vmatprep.subr.mxu0 0.0
  %2923 = vmatpush1.msra.mxu0 0.0
  %2924 = vmatprep.subr.mxu0 0.0
  %2925 = vmatpush1.msra.mxu0 0.0
  %2926 = vmatprep.subr.mxu0 0.0
  %2927 = vmatpush1.msra.mxu0 0.0
  %2928 = vmatprep.subr.mxu0 0.0
  %2929 = vmatpush1.msra.mxu0 0.0
  %2930 = vmatprep.subr.mxu0 0.0
  %2931 = vmatpush1.msra.mxu0 0.0
  %2932 = vmatprep.subr.mxu0 0.0
  %2933 = vmatpush1.msra.mxu0 0.0
  %2934 = vmatprep.subr.mxu0 0.0
  %2935 = vmatpush1.msra.mxu0 0.0
  %2936 = vmatprep.subr.mxu0 0.0
  %2937 = vmatpush1.msra.mxu0 0.0
  %2938 = vmatprep.subr.mxu0 0.0
  %2939 = vmatpush1.msra.mxu0 0.0
  %2940 = vmatprep.subr.mxu0 0.0
  %2941 = vmatpush1.msra.mxu0 0.0
  %2942 = vmatprep.subr.mxu0 0.0
  %2943 = vmatpush1.msra.mxu0 0.0
  %2944 = vmatprep.subr.mxu0 0.0
  %2945 = vmatpush1.msra.mxu0 0.0
  %2946 = vmatprep.subr.mxu0 0.0
  %2947 = vmatpush1.msra.mxu0 0.0
  %2948 = vmatprep.subr.mxu0 0.0
  %2949 = vmatpush1.msra.mxu0 0.0
  %2950 = vmatprep.subr.mxu0 0.0
  %2951 = vmatpush1.msra.mxu0 0.0
  %2952 = vmatprep.subr.mxu0 0.0
  %2953 = vmatpush1.msra.mxu0 0.0
  %2954 = vmatprep.subr.mxu0 0.0
  %2955 = vmatpush1.msra.mxu0 0.0
  %2956 = vmatprep.subr.mxu0 0.0
  %2957 = vmatpush1.msra.mxu0 0.0
  %2958 = vmatprep.subr.mxu0 0.0
  %2959 = vmatpush1.msra.mxu0 0.0
  %2960 = vmatprep.subr.mxu0 0.0
  %2961 = vmatpush1.msra.mxu0 0.0
  %2962 = vmatprep.subr.mxu0 0.0
  %2963 = vmatpush1.msra.mxu0 0.0
  %2964 = vmatprep.mubr.f32.mxu0 0.0
  %2965 = vmatmul.mubr.f32.gmra.mrb[0].mxu0 %v2898
  %v2966 = vpop.f32.mrb[0].mxu0
  %v2967 = vadd.f32 0.0, %v2966
  %v2968 = vpop.f32.mrb[0].mxu0
  %2969 = vdwg.mxu0
  %v2970 = vadd.f32 %v2896, %v2967
  %v2972 = vsel %vm176, %v2236, 0
  %2974 = vmatprep.subr.mxu0 0.0
  %2975 = vmatpush1.msra.mxu0 %v2279
  %2976 = vmatprep.subr.mxu0 0.0
  %2977 = vmatpush1.msra.mxu0 %v2280
  %2978 = vmatprep.subr.mxu0 0.0
  %2979 = vmatpush1.msra.mxu0 %v2281
  %2980 = vmatprep.subr.mxu0 0.0
  %2981 = vmatpush1.msra.mxu0 %v2282
  %2982 = vmatprep.subr.mxu0 0.0
  %2983 = vmatpush1.msra.mxu0 0.0
  %2984 = vmatprep.subr.mxu0 0.0
  %2985 = vmatpush1.msra.mxu0 0.0
  %2986 = vmatprep.subr.mxu0 0.0
  %2987 = vmatpush1.msra.mxu0 0.0
  %2988 = vmatprep.subr.mxu0 0.0
  %2989 = vmatpush1.msra.mxu0 0.0
  %2990 = vmatprep.subr.mxu0 0.0
  %2991 = vmatpush1.msra.mxu0 0.0
  %2992 = vmatprep.subr.mxu0 0.0
  %2993 = vmatpush1.msra.mxu0 0.0
  %2994 = vmatprep.subr.mxu0 0.0
  %2995 = vmatpush1.msra.mxu0 0.0
  %2996 = vmatprep.subr.mxu0 0.0
  %2997 = vmatpush1.msra.mxu0 0.0
  %2998 = vmatprep.subr.mxu0 0.0
  %2999 = vmatpush1.msra.mxu0 0.0
  %3000 = vmatprep.subr.mxu0 0.0
  %3001 = vmatpush1.msra.mxu0 0.0
  %3002 = vmatprep.subr.mxu0 0.0
  %3003 = vmatpush1.msra.mxu0 0.0
  %3004 = vmatprep.subr.mxu0 0.0
  %3005 = vmatpush1.msra.mxu0 0.0
  %3006 = vmatprep.subr.mxu0 0.0
  %3007 = vmatpush1.msra.mxu0 0.0
  %3008 = vmatprep.subr.mxu0 0.0
  %3009 = vmatpush1.msra.mxu0 0.0
  %3010 = vmatprep.subr.mxu0 0.0
  %3011 = vmatpush1.msra.mxu0 0.0
  %3012 = vmatprep.subr.mxu0 0.0
  %3013 = vmatpush1.msra.mxu0 0.0
  %3014 = vmatprep.subr.mxu0 0.0
  %3015 = vmatpush1.msra.mxu0 0.0
  %3016 = vmatprep.subr.mxu0 0.0
  %3017 = vmatpush1.msra.mxu0 0.0
  %3018 = vmatprep.subr.mxu0 0.0
  %3019 = vmatpush1.msra.mxu0 0.0
  %3020 = vmatprep.subr.mxu0 0.0
  %3021 = vmatpush1.msra.mxu0 0.0
  %3022 = vmatprep.subr.mxu0 0.0
  %3023 = vmatpush1.msra.mxu0 0.0
  %3024 = vmatprep.subr.mxu0 0.0
  %3025 = vmatpush1.msra.mxu0 0.0
  %3026 = vmatprep.subr.mxu0 0.0
  %3027 = vmatpush1.msra.mxu0 0.0
  %3028 = vmatprep.subr.mxu0 0.0
  %3029 = vmatpush1.msra.mxu0 0.0
  %3030 = vmatprep.subr.mxu0 0.0
  %3031 = vmatpush1.msra.mxu0 0.0
  %3032 = vmatprep.subr.mxu0 0.0
  %3033 = vmatpush1.msra.mxu0 0.0
  %3034 = vmatprep.subr.mxu0 0.0
  %3035 = vmatpush1.msra.mxu0 0.0
  %3036 = vmatprep.subr.mxu0 0.0
  %3037 = vmatpush1.msra.mxu0 0.0
  %3038 = vmatprep.mubr.f32.mxu0 0.0
  %3039 = vmatmul.mubr.f32.gmra.mrb[0].mxu0 %v2972
  %v3040 = vpop.f32.mrb[0].mxu0
  %v3041 = vadd.f32 0.0, %v3040
  %v3042 = vpop.f32.mrb[0].mxu0
  %3043 = vdwg.mxu0
  %v3044 = vadd.f32 %v2970, %v3041
  %v3046 = vsel %vm176, %v2237, 0
  %3048 = vmatprep.subr.mxu0 0.0
  %3049 = vmatpush1.msra.mxu0 %v2283
  %3050 = vmatprep.subr.mxu0 0.0
  %3051 = vmatpush1.msra.mxu0 %v2284
  %3052 = vmatprep.subr.mxu0 0.0
  %3053 = vmatpush1.msra.mxu0 %v2285
  %3054 = vmatprep.subr.mxu0 0.0
  %3055 = vmatpush1.msra.mxu0 %v2286
  %3056 = vmatprep.subr.mxu0 0.0
  %3057 = vmatpush1.msra.mxu0 0.0
  %3058 = vmatprep.subr.mxu0 0.0
  %3059 = vmatpush1.msra.mxu0 0.0
  %3060 = vmatprep.subr.mxu0 0.0
  %3061 = vmatpush1.msra.mxu0 0.0
  %3062 = vmatprep.subr.mxu0 0.0
  %3063 = vmatpush1.msra.mxu0 0.0
  %3064 = vmatprep.subr.mxu0 0.0
  %3065 = vmatpush1.msra.mxu0 0.0
  %3066 = vmatprep.subr.mxu0 0.0
  %3067 = vmatpush1.msra.mxu0 0.0
  %3068 = vmatprep.subr.mxu0 0.0
  %3069 = vmatpush1.msra.mxu0 0.0
  %3070 = vmatprep.subr.mxu0 0.0
  %3071 = vmatpush1.msra.mxu0 0.0
  %3072 = vmatprep.subr.mxu0 0.0
  %3073 = vmatpush1.msra.mxu0 0.0
  %3074 = vmatprep.subr.mxu0 0.0
  %3075 = vmatpush1.msra.mxu0 0.0
  %3076 = vmatprep.subr.mxu0 0.0
  %3077 = vmatpush1.msra.mxu0 0.0
  %3078 = vmatprep.subr.mxu0 0.0
  %3079 = vmatpush1.msra.mxu0 0.0
  %3080 = vmatprep.subr.mxu0 0.0
  %3081 = vmatpush1.msra.mxu0 0.0
  %3082 = vmatprep.subr.mxu0 0.0
  %3083 = vmatpush1.msra.mxu0 0.0
  %3084 = vmatprep.subr.mxu0 0.0
  %3085 = vmatpush1.msra.mxu0 0.0
  %3086 = vmatprep.subr.mxu0 0.0
  %3087 = vmatpush1.msra.mxu0 0.0
  %3088 = vmatprep.subr.mxu0 0.0
  %3089 = vmatpush1.msra.mxu0 0.0
  %3090 = vmatprep.subr.mxu0 0.0
  %3091 = vmatpush1.msra.mxu0 0.0
  %3092 = vmatprep.subr.mxu0 0.0
  %3093 = vmatpush1.msra.mxu0 0.0
  %3094 = vmatprep.subr.mxu0 0.0
  %3095 = vmatpush1.msra.mxu0 0.0
  %3096 = vmatprep.subr.mxu0 0.0
  %3097 = vmatpush1.msra.mxu0 0.0
  %3098 = vmatprep.subr.mxu0 0.0
  %3099 = vmatpush1.msra.mxu0 0.0
  %3100 = vmatprep.subr.mxu0 0.0
  %3101 = vmatpush1.msra.mxu0 0.0
  %3102 = vmatprep.subr.mxu0 0.0
  %3103 = vmatpush1.msra.mxu0 0.0
  %3104 = vmatprep.subr.mxu0 0.0
  %3105 = vmatpush1.msra.mxu0 0.0
  %3106 = vmatprep.subr.mxu0 0.0
  %3107 = vmatpush1.msra.mxu0 0.0
  %3108 = vmatprep.subr.mxu0 0.0
  %3109 = vmatpush1.msra.mxu0 0.0
  %3110 = vmatprep.subr.mxu0 0.0
  %3111 = vmatpush1.msra.mxu0 0.0
  %3112 = vmatprep.mubr.f32.mxu0 0.0
  %3113 = vmatmul.mubr.f32.gmra.mrb[0].mxu0 %v3046
  %v3114 = vpop.f32.mrb[0].mxu0
  %v3115 = vadd.f32 0.0, %v3114
  %v3116 = vpop.f32.mrb[0].mxu0
  %3117 = vdwg.mxu0
  %v3118 = vadd.f32 %v3044, %v3115
  %v3120 = vsel %vm176, %v2238, 0
  %3122 = vmatprep.subr.mxu0 0.0
  %3123 = vmatpush1.msra.mxu0 %v2287
  %3124 = vmatprep.subr.mxu0 0.0
  %3125 = vmatpush1.msra.mxu0 %v2288
  %3126 = vmatprep.subr.mxu0 0.0
  %3127 = vmatpush1.msra.mxu0 %v2289
  %3128 = vmatprep.subr.mxu0 0.0
  %3129 = vmatpush1.msra.mxu0 %v2290
  %3130 = vmatprep.subr.mxu0 0.0
  %3131 = vmatpush1.msra.mxu0 0.0
  %3132 = vmatprep.subr.mxu0 0.0
  %3133 = vmatpush1.msra.mxu0 0.0
  %3134 = vmatprep.subr.mxu0 0.0
  %3135 = vmatpush1.msra.mxu0 0.0
  %3136 = vmatprep.subr.mxu0 0.0
  %3137 = vmatpush1.msra.mxu0 0.0
  %3138 = vmatprep.subr.mxu0 0.0
  %3139 = vmatpush1.msra.mxu0 0.0
  %3140 = vmatprep.subr.mxu0 0.0
  %3141 = vmatpush1.msra.mxu0 0.0
  %3142 = vmatprep.subr.mxu0 0.0
  %3143 = vmatpush1.msra.mxu0 0.0
  %3144 = vmatprep.subr.mxu0 0.0
  %3145 = vmatpush1.msra.mxu0 0.0
  %3146 = vmatprep.subr.mxu0 0.0
  %3147 = vmatpush1.msra.mxu0 0.0
  %3148 = vmatprep.subr.mxu0 0.0
  %3149 = vmatpush1.msra.mxu0 0.0
  %3150 = vmatprep.subr.mxu0 0.0
  %3151 = vmatpush1.msra.mxu0 0.0
  %3152 = vmatprep.subr.mxu0 0.0
  %3153 = vmatpush1.msra.mxu0 0.0
  %3154 = vmatprep.subr.mxu0 0.0
  %3155 = vmatpush1.msra.mxu0 0.0
  %3156 = vmatprep.subr.mxu0 0.0
  %3157 = vmatpush1.msra.mxu0 0.0
  %3158 = vmatprep.subr.mxu0 0.0
  %3159 = vmatpush1.msra.mxu0 0.0
  %3160 = vmatprep.subr.mxu0 0.0
  %3161 = vmatpush1.msra.mxu0 0.0
  %3162 = vmatprep.subr.mxu0 0.0
  %3163 = vmatpush1.msra.mxu0 0.0
  %3164 = vmatprep.subr.mxu0 0.0
  %3165 = vmatpush1.msra.mxu0 0.0
  %3166 = vmatprep.subr.mxu0 0.0
  %3167 = vmatpush1.msra.mxu0 0.0
  %3168 = vmatprep.subr.mxu0 0.0
  %3169 = vmatpush1.msra.mxu0 0.0
  %3170 = vmatprep.subr.mxu0 0.0
  %3171 = vmatpush1.msra.mxu0 0.0
  %3172 = vmatprep.subr.mxu0 0.0
  %3173 = vmatpush1.msra.mxu0 0.0
  %3174 = vmatprep.subr.mxu0 0.0
  %3175 = vmatpush1.msra.mxu0 0.0
  %3176 = vmatprep.subr.mxu0 0.0
  %3177 = vmatpush1.msra.mxu0 0.0
  %3178 = vmatprep.subr.mxu0 0.0
  %3179 = vmatpush1.msra.mxu0 0.0
  %3180 = vmatprep.subr.mxu0 0.0
  %3181 = vmatpush1.msra.mxu0 0.0
  %3182 = vmatprep.subr.mxu0 0.0
  %3183 = vmatpush1.msra.mxu0 0.0
  %3184 = vmatprep.subr.mxu0 0.0
  %3185 = vmatpush1.msra.mxu0 0.0
  %3186 = vmatprep.mubr.f32.mxu0 0.0
  %3187 = vmatmul.mubr.f32.gmra.mrb[0].mxu0 %v3120
  %v3188 = vpop.f32.mrb[0].mxu0
  %v3189 = vadd.f32 0.0, %v3188
  %v3190 = vpop.f32.mrb[0].mxu0
  %3191 = vdwg.mxu0
  %v3192 = vadd.f32 %v3118, %v3189
  %v3194 = vsel %vm176, %v2239, 0
  %3196 = vmatprep.subr.mxu0 0.0
  %3197 = vmatpush1.msra.mxu0 %v2291
  %3198 = vmatprep.subr.mxu0 0.0
  %3199 = vmatpush1.msra.mxu0 %v2292
  %3200 = vmatprep.subr.mxu0 0.0
  %3201 = vmatpush1.msra.mxu0 %v2293
  %3202 = vmatprep.subr.mxu0 0.0
  %3203 = vmatpush1.msra.mxu0 %v2294
  %3204 = vmatprep.subr.mxu0 0.0
  %3205 = vmatpush1.msra.mxu0 0.0
  %3206 = vmatprep.subr.mxu0 0.0
  %3207 = vmatpush1.msra.mxu0 0.0
  %3208 = vmatprep.subr.mxu0 0.0
  %3209 = vmatpush1.msra.mxu0 0.0
  %3210 = vmatprep.subr.mxu0 0.0
  %3211 = vmatpush1.msra.mxu0 0.0
  %3212 = vmatprep.subr.mxu0 0.0
  %3213 = vmatpush1.msra.mxu0 0.0
  %3214 = vmatprep.subr.mxu0 0.0
  %3215 = vmatpush1.msra.mxu0 0.0
  %3216 = vmatprep.subr.mxu0 0.0
  %3217 = vmatpush1.msra.mxu0 0.0
  %3218 = vmatprep.subr.mxu0 0.0
  %3219 = vmatpush1.msra.mxu0 0.0
  %3220 = vmatprep.subr.mxu0 0.0
  %3221 = vmatpush1.msra.mxu0 0.0
  %3222 = vmatprep.subr.mxu0 0.0
  %3223 = vmatpush1.msra.mxu0 0.0
  %3224 = vmatprep.subr.mxu0 0.0
  %3225 = vmatpush1.msra.mxu0 0.0
  %3226 = vmatprep.subr.mxu0 0.0
  %3227 = vmatpush1.msra.mxu0 0.0
  %3228 = vmatprep.subr.mxu0 0.0
  %3229 = vmatpush1.msra.mxu0 0.0
  %3230 = vmatprep.subr.mxu0 0.0
  %3231 = vmatpush1.msra.mxu0 0.0
  %3232 = vmatprep.subr.mxu0 0.0
  %3233 = vmatpush1.msra.mxu0 0.0
  %3234 = vmatprep.subr.mxu0 0.0
  %3235 = vmatpush1.msra.mxu0 0.0
  %3236 = vmatprep.subr.mxu0 0.0
  %3237 = vmatpush1.msra.mxu0 0.0
  %3238 = vmatprep.subr.mxu0 0.0
  %3239 = vmatpush1.msra.mxu0 0.0
  %3240 = vmatprep.subr.mxu0 0.0
  %3241 = vmatpush1.msra.mxu0 0.0
  %3242 = vmatprep.subr.mxu0 0.0
  %3243 = vmatpush1.msra.mxu0 0.0
  %3244 = vmatprep.subr.mxu0 0.0
  %3245 = vmatpush1.msra.mxu0 0.0
  %3246 = vmatprep.subr.mxu0 0.0
  %3247 = vmatpush1.msra.mxu0 0.0
  %3248 = vmatprep.subr.mxu0 0.0
  %3249 = vmatpush1.msra.mxu0 0.0
  %3250 = vmatprep.subr.mxu0 0.0
  %3251 = vmatpush1.msra.mxu0 0.0
  %3252 = vmatprep.subr.mxu0 0.0
  %3253 = vmatpush1.msra.mxu0 0.0
  %3254 = vmatprep.subr.mxu0 0.0
  %3255 = vmatpush1.msra.mxu0 0.0
  %3256 = vmatprep.subr.mxu0 0.0
  %3257 = vmatpush1.msra.mxu0 0.0
  %3258 = vmatprep.subr.mxu0 0.0
  %3259 = vmatpush1.msra.mxu0 0.0
  %3260 = vmatprep.mubr.f32.mxu0 0.0
  %3261 = vmatmul.mubr.f32.gmra.mrb[0].mxu0 %v3194
  %v3262 = vpop.f32.mrb[0].mxu0
  %v3263 = vadd.f32 0.0, %v3262
  %v3264 = vpop.f32.mrb[0].mxu0
  %3265 = vdwg.mxu0
  %v3266 = vadd.f32 %v3192, %v3263
  %v3268 = vsel %vm176, %v2240, 0
  %3270 = vmatprep.subr.mxu0 0.0
  %3271 = vmatpush1.msra.mxu0 %v2295
  %3272 = vmatprep.subr.mxu0 0.0
  %3273 = vmatpush1.msra.mxu0 %v2296
  %3274 = vmatprep.subr.mxu0 0.0
  %3275 = vmatpush1.msra.mxu0 %v2297
  %3276 = vmatprep.subr.mxu0 0.0
  %3277 = vmatpush1.msra.mxu0 %v2298
  %3278 = vmatprep.subr.mxu0 0.0
  %3279 = vmatpush1.msra.mxu0 0.0
  %3280 = vmatprep.subr.mxu0 0.0
  %3281 = vmatpush1.msra.mxu0 0.0
  %3282 = vmatprep.subr.mxu0 0.0
  %3283 = vmatpush1.msra.mxu0 0.0
  %3284 = vmatprep.subr.mxu0 0.0
  %3285 = vmatpush1.msra.mxu0 0.0
  %3286 = vmatprep.subr.mxu0 0.0
  %3287 = vmatpush1.msra.mxu0 0.0
  %3288 = vmatprep.subr.mxu0 0.0
  %3289 = vmatpush1.msra.mxu0 0.0
  %3290 = vmatprep.subr.mxu0 0.0
  %3291 = vmatpush1.msra.mxu0 0.0
  %3292 = vmatprep.subr.mxu0 0.0
  %3293 = vmatpush1.msra.mxu0 0.0
  %3294 = vmatprep.subr.mxu0 0.0
  %3295 = vmatpush1.msra.mxu0 0.0
  %3296 = vmatprep.subr.mxu0 0.0
  %3297 = vmatpush1.msra.mxu0 0.0
  %3298 = vmatprep.subr.mxu0 0.0
  %3299 = vmatpush1.msra.mxu0 0.0
  %3300 = vmatprep.subr.mxu0 0.0
  %3301 = vmatpush1.msra.mxu0 0.0
  %3302 = vmatprep.subr.mxu0 0.0
  %3303 = vmatpush1.msra.mxu0 0.0
  %3304 = vmatprep.subr.mxu0 0.0
  %3305 = vmatpush1.msra.mxu0 0.0
  %3306 = vmatprep.subr.mxu0 0.0
  %3307 = vmatpush1.msra.mxu0 0.0
  %3308 = vmatprep.subr.mxu0 0.0
  %3309 = vmatpush1.msra.mxu0 0.0
  %3310 = vmatprep.subr.mxu0 0.0
  %3311 = vmatpush1.msra.mxu0 0.0
  %3312 = vmatprep.subr.mxu0 0.0
  %3313 = vmatpush1.msra.mxu0 0.0
  %3314 = vmatprep.subr.mxu0 0.0
  %3315 = vmatpush1.msra.mxu0 0.0
  %3316 = vmatprep.subr.mxu0 0.0
  %3317 = vmatpush1.msra.mxu0 0.0
  %3318 = vmatprep.subr.mxu0 0.0
  %3319 = vmatpush1.msra.mxu0 0.0
  %3320 = vmatprep.subr.mxu0 0.0
  %3321 = vmatpush1.msra.mxu0 0.0
  %3322 = vmatprep.subr.mxu0 0.0
  %3323 = vmatpush1.msra.mxu0 0.0
  %3324 = vmatprep.subr.mxu0 0.0
  %3325 = vmatpush1.msra.mxu0 0.0
  %3326 = vmatprep.subr.mxu0 0.0
  %3327 = vmatpush1.msra.mxu0 0.0
  %3328 = vmatprep.subr.mxu0 0.0
  %3329 = vmatpush1.msra.mxu0 0.0
  %3330 = vmatprep.subr.mxu0 0.0
  %3331 = vmatpush1.msra.mxu0 0.0
  %3332 = vmatprep.subr.mxu0 0.0
  %3333 = vmatpush1.msra.mxu0 0.0
  %3334 = vmatprep.mubr.f32.mxu0 0.0
  %3335 = vmatmul.mubr.f32.gmra.mrb[0].mxu0 %v3268
  %v3336 = vpop.f32.mrb[0].mxu0
  %v3337 = vadd.f32 0.0, %v3336
  %v3338 = vpop.f32.mrb[0].mxu0
  %3339 = vdwg.mxu0
  %v3340 = vadd.f32 %v3266, %v3337
  %v3342 = vsel %vm176, %v2241, 0
  %3344 = vmatprep.subr.mxu0 0.0
  %3345 = vmatpush1.msra.mxu0 %v2299
  %3346 = vmatprep.subr.mxu0 0.0
  %3347 = vmatpush1.msra.mxu0 %v2300
  %3348 = vmatprep.subr.mxu0 0.0
  %3349 = vmatpush1.msra.mxu0 %v2301
  %3350 = vmatprep.subr.mxu0 0.0
  %3351 = vmatpush1.msra.mxu0 %v2302
  %3352 = vmatprep.subr.mxu0 0.0
  %3353 = vmatpush1.msra.mxu0 0.0
  %3354 = vmatprep.subr.mxu0 0.0
  %3355 = vmatpush1.msra.mxu0 0.0
  %3356 = vmatprep.subr.mxu0 0.0
  %3357 = vmatpush1.msra.mxu0 0.0
  %3358 = vmatprep.subr.mxu0 0.0
  %3359 = vmatpush1.msra.mxu0 0.0
  %3360 = vmatprep.subr.mxu0 0.0
  %3361 = vmatpush1.msra.mxu0 0.0
  %3362 = vmatprep.subr.mxu0 0.0
  %3363 = vmatpush1.msra.mxu0 0.0
  %3364 = vmatprep.subr.mxu0 0.0
  %3365 = vmatpush1.msra.mxu0 0.0
  %3366 = vmatprep.subr.mxu0 0.0
  %3367 = vmatpush1.msra.mxu0 0.0
  %3368 = vmatprep.subr.mxu0 0.0
  %3369 = vmatpush1.msra.mxu0 0.0
  %3370 = vmatprep.subr.mxu0 0.0
  %3371 = vmatpush1.msra.mxu0 0.0
  %3372 = vmatprep.subr.mxu0 0.0
  %3373 = vmatpush1.msra.mxu0 0.0
  %3374 = vmatprep.subr.mxu0 0.0
  %3375 = vmatpush1.msra.mxu0 0.0
  %3376 = vmatprep.subr.mxu0 0.0
  %3377 = vmatpush1.msra.mxu0 0.0
  %3378 = vmatprep.subr.mxu0 0.0
  %3379 = vmatpush1.msra.mxu0 0.0
  %3380 = vmatprep.subr.mxu0 0.0
  %3381 = vmatpush1.msra.mxu0 0.0
  %3382 = vmatprep.subr.mxu0 0.0
  %3383 = vmatpush1.msra.mxu0 0.0
  %3384 = vmatprep.subr.mxu0 0.0
  %3385 = vmatpush1.msra.mxu0 0.0
  %3386 = vmatprep.subr.mxu0 0.0
  %3387 = vmatpush1.msra.mxu0 0.0
  %3388 = vmatprep.subr.mxu0 0.0
  %3389 = vmatpush1.msra.mxu0 0.0
  %3390 = vmatprep.subr.mxu0 0.0
  %3391 = vmatpush1.msra.mxu0 0.0
  %3392 = vmatprep.subr.mxu0 0.0
  %3393 = vmatpush1.msra.mxu0 0.0
  %3394 = vmatprep.subr.mxu0 0.0
  %3395 = vmatpush1.msra.mxu0 0.0
  %3396 = vmatprep.subr.mxu0 0.0
  %3397 = vmatpush1.msra.mxu0 0.0
  %3398 = vmatprep.subr.mxu0 0.0
  %3399 = vmatpush1.msra.mxu0 0.0
  %3400 = vmatprep.subr.mxu0 0.0
  %3401 = vmatpush1.msra.mxu0 0.0
  %3402 = vmatprep.subr.mxu0 0.0
  %3403 = vmatpush1.msra.mxu0 0.0
  %3404 = vmatprep.subr.mxu0 0.0
  %3405 = vmatpush1.msra.mxu0 0.0
  %3406 = vmatprep.subr.mxu0 0.0
  %3407 = vmatpush1.msra.mxu0 0.0
  %3408 = vmatprep.mubr.f32.mxu0 0.0
  %3409 = vmatmul.mubr.f32.gmra.mrb[0].mxu0 %v3342
  %v3410 = vpop.f32.mrb[0].mxu0
  %v3411 = vadd.f32 0.0, %v3410
  %v3412 = vpop.f32.mrb[0].mxu0
  %3413 = vdwg.mxu0
  %v3414 = vadd.f32 %v3340, %v3411
  %v3416 = vsel %vm176, %v2242, 0
  %3418 = vmatprep.subr.mxu0 0.0
  %3419 = vmatpush1.msra.mxu0 %v2303
  %3420 = vmatprep.subr.mxu0 0.0
  %3421 = vmatpush1.msra.mxu0 %v2304
  %3422 = vmatprep.subr.mxu0 0.0
  %3423 = vmatpush1.msra.mxu0 %v2305
  %3424 = vmatprep.subr.mxu0 0.0
  %3425 = vmatpush1.msra.mxu0 %v2306
  %3426 = vmatprep.subr.mxu0 0.0
  %3427 = vmatpush1.msra.mxu0 0.0
  %3428 = vmatprep.subr.mxu0 0.0
  %3429 = vmatpush1.msra.mxu0 0.0
  %3430 = vmatprep.subr.mxu0 0.0
  %3431 = vmatpush1.msra.mxu0 0.0
  %3432 = vmatprep.subr.mxu0 0.0
  %3433 = vmatpush1.msra.mxu0 0.0
  %3434 = vmatprep.subr.mxu0 0.0
  %3435 = vmatpush1.msra.mxu0 0.0
  %3436 = vmatprep.subr.mxu0 0.0
  %3437 = vmatpush1.msra.mxu0 0.0
  %3438 = vmatprep.subr.mxu0 0.0
  %3439 = vmatpush1.msra.mxu0 0.0
  %3440 = vmatprep.subr.mxu0 0.0
  %3441 = vmatpush1.msra.mxu0 0.0
  %3442 = vmatprep.subr.mxu0 0.0
  %3443 = vmatpush1.msra.mxu0 0.0
  %3444 = vmatprep.subr.mxu0 0.0
  %3445 = vmatpush1.msra.mxu0 0.0
  %3446 = vmatprep.subr.mxu0 0.0
  %3447 = vmatpush1.msra.mxu0 0.0
  %3448 = vmatprep.subr.mxu0 0.0
  %3449 = vmatpush1.msra.mxu0 0.0
  %3450 = vmatprep.subr.mxu0 0.0
  %3451 = vmatpush1.msra.mxu0 0.0
  %3452 = vmatprep.subr.mxu0 0.0
  %3453 = vmatpush1.msra.mxu0 0.0
  %3454 = vmatprep.subr.mxu0 0.0
  %3455 = vmatpush1.msra.mxu0 0.0
  %3456 = vmatprep.subr.mxu0 0.0
  %3457 = vmatpush1.msra.mxu0 0.0
  %3458 = vmatprep.subr.mxu0 0.0
  %3459 = vmatpush1.msra.mxu0 0.0
  %3460 = vmatprep.subr.mxu0 0.0
  %3461 = vmatpush1.msra.mxu0 0.0
  %3462 = vmatprep.subr.mxu0 0.0
  %3463 = vmatpush1.msra.mxu0 0.0
  %3464 = vmatprep.subr.mxu0 0.0
  %3465 = vmatpush1.msra.mxu0 0.0
  %3466 = vmatprep.subr.mxu0 0.0
  %3467 = vmatpush1.msra.mxu0 0.0
  %3468 = vmatprep.subr.mxu0 0.0
  %3469 = vmatpush1.msra.mxu0 0.0
  %3470 = vmatprep.subr.mxu0 0.0
  %3471 = vmatpush1.msra.mxu0 0.0
  %3472 = vmatprep.subr.mxu0 0.0
  %3473 = vmatpush1.msra.mxu0 0.0
  %3474 = vmatprep.subr.mxu0 0.0
  %3475 = vmatpush1.msra.mxu0 0.0
  %3476 = vmatprep.subr.mxu0 0.0
  %3477 = vmatpush1.msra.mxu0 0.0
  %3478 = vmatprep.subr.mxu0 0.0
  %3479 = vmatpush1.msra.mxu0 0.0
  %3480 = vmatprep.subr.mxu0 0.0
  %3481 = vmatpush1.msra.mxu0 0.0
  %3482 = vmatprep.mubr.f32.mxu0 0.0
  %3483 = vmatmul.mubr.f32.gmra.mrb[0].mxu0 %v3416
  %v3484 = vpop.f32.mrb[0].mxu0
  %v3485 = vadd.f32 0.0, %v3484
  %v3486 = vpop.f32.mrb[0].mxu0
  %3487 = vdwg.mxu0
  %v3488 = vadd.f32 %v3414, %v3485
  %v3489 = vld [vmem:[%s6] sm:$0x1]
  %v3491 = vlaneseq
  %v3492 = vshrl.u32 %v3491, 7
  %v3493 = vsub.s32 0, %v3492
  %v3494 = vrot.slane %v3489, %v3493
  %v3496 = vadd.f32 %v3488, %v3494
  %vm3497 = vcmask 31744
  %3498 = vst.msk [vmem:[%s7] sm:$0xff] %vm3497, %v3496
  // Predicated region
  $region30: #{agent_forward.1} parent=0 // pred_check
    _
  $region31: #{agent_forward.1} parent=0 // pred_check_branch
    %3500 = sbr.rel (0) target = $region33
  $region32: #{agent_forward.1} parent=0 // pred_region
    _
  $region33: #{agent_forward.1} parent=0 // pred_fallthru
    _
  // Predicated region
  $region34: #{agent_forward.1} parent=0 // pred_check
    _
  $region35: #{agent_forward.1} parent=0 // pred_check_branch
    %3502 = sbr.rel (0) target = $region37
  $region36: #{agent_forward.1} parent=0 // pred_region
    _
  $region37: #{agent_forward.1} parent=0 // pred_fallthru
    _

</llo_original>
